<compile_context>
chip_gen: v6e
topology: v6e:2x2x1
jax: 0.10.0
libtpu: 0.0.40
codegen_flags: <defaults>
</compile_context>

<pallas_src>
import jax
import jax.numpy as jnp
from jax.experimental import pallas as pl
from jax.experimental.pallas import tpu as pltpu

EPS = 1e-5          # PyTorch LayerNorm default eps
NUM_HEADS = 4       # nn.MultiheadAttention(channels, 4)
NUM_VECS = 10       # packed (1, C) parameter rows


def _layernorm(x, w, b):
    # PyTorch LayerNorm: biased variance over the last dim (f32 throughout).
    mean = jnp.mean(x, axis=-1, keepdims=True)
    var = jnp.mean(jnp.square(x - mean), axis=-1, keepdims=True)
    return (x - mean) * jax.lax.rsqrt(var + EPS) * w + b


def _erf(x):
    # Abramowitz & Stegun 7.1.26, max abs error ~1.5e-7 — numerically matches
    # PyTorch's exact-erf GELU while using only guaranteed-lowerable ops.
    p = 0.3275911
    a1, a2, a3, a4, a5 = (0.254829592, -0.284496736, 1.421413741,
                          -1.453152027, 1.061405429)
    ax = jnp.abs(x)
    t = 1.0 / (1.0 + p * ax)
    poly = ((((a5 * t + a4) * t + a3) * t + a2) * t + a1) * t
    y = 1.0 - poly * jnp.exp(-ax * ax)
    return jnp.where(x >= 0, y, -y)


def _gelu(x):
    # PyTorch nn.GELU() default = exact erf formulation.
    return 0.5 * x * (1.0 + _erf(x * 0.7071067811865476))


def self_attention_kernel(x_ref, w_ref, vec_ref, out_ref):
    bb, n, c = x_ref.shape
    hd = c // NUM_HEADS
    bf16 = jnp.bfloat16

    x = x_ref[...].reshape(bb * n, c)            # (M, C) f32 token slab
    vec = vec_ref[...]                           # (10, C) f32 packed vectors

    ln1_w, ln1_b = vec[0:1, :], vec[1:2, :]
    bq, bk, bv = vec[2:3, :], vec[3:4, :], vec[4:5, :]
    bo = vec[5:6, :]
    ln2_w, ln2_b = vec[6:7, :], vec[7:8, :]
    b1, b2 = vec[8:9, :], vec[9:10, :]

    w_qkv = w_ref[:, 0:3 * c]                    # bf16 (C, 3C); Q block pre-scaled by 1/sqrt(hd)
    w_o = w_ref[:, 3 * c:4 * c]                  # bf16 (C, C)
    w_1 = w_ref[:, 4 * c:5 * c]
    w_2 = w_ref[:, 5 * c:6 * c]

    # --- self.ln(x) (f32) + fused QKV in-projection (bf16 MXU, f32 acc) ---
    x_ln = _layernorm(x, ln1_w, ln1_b)
    qkv = jnp.dot(x_ln.astype(bf16), w_qkv,
                  preferred_element_type=jnp.float32)          # (M, 3C) f32
    q = (qkv[:, 0:c] + bq).astype(bf16)          # already scaled by 1/sqrt(hd)
    k = (qkv[:, c:2 * c] + bk).astype(bf16)
    v = (qkv[:, 2 * c:3 * c] + bv).astype(bf16)

    # --- scaled-dot-product attention: every (head, batch) pair in ONE
    #     leading-batch-dim contraction (no per-pair MXU unroll) ---
    def split_heads(t):                          # (M, C) -> (H*bb, n, hd); idx = h*bb + b
        t = jnp.stack([t[:, h * hd:(h + 1) * hd] for h in range(NUM_HEADS)],
                      axis=0)                    # (H, M, hd)
        return t.reshape(NUM_HEADS * bb, n, hd)

    qh, kh, vh = split_heads(q), split_heads(k), split_heads(v)

    s = jnp.einsum("bnd,bmd->bnm", qh, kh,
                   preferred_element_type=jnp.float32)         # (H*bb, n, n) f32
    s = s - jnp.max(s, axis=-1, keepdims=True)
    p = jnp.exp(s)                                             # f32 (EUP)
    inv = pl.reciprocal(jnp.sum(p, axis=-1, keepdims=True), approx=True)
    o = jnp.einsum("bnm,bmd->bnd", p.astype(bf16), vh,
                   preferred_element_type=jnp.float32)         # (H*bb, n, hd) f32
    o = o * inv                                  # normalize AFTER PV (small tensor)

    # Re-interleave heads into channels: (H*bb, n, hd) -> (M, C).
    rows = [jnp.concatenate([o[h * bb + b] for h in range(NUM_HEADS)], axis=-1)
            for b in range(bb)]                  # each (n, C)
    attn = rows[0] if bb == 1 else jnp.concatenate(rows, axis=0)

    # --- MHA out-projection + residual 1 ---
    attn = jnp.dot(attn.astype(bf16), w_o,
                   preferred_element_type=jnp.float32) + bo
    av = attn + x

    # --- ff_self: LayerNorm -> Linear -> GELU -> Linear, plus residual 2 ---
    h_ln = _layernorm(av, ln2_w, ln2_b)
    h1 = _gelu(jnp.dot(h_ln.astype(bf16), w_1,
                       preferred_element_type=jnp.float32) + b1)
    h2 = jnp.dot(h1.astype(bf16), w_2,
                 preferred_element_type=jnp.float32) + b2

    out_ref[...] = (h2 + av).reshape(bb, n, c)


def init_params(key, channels):
    """Deterministic synthetic parameters matching the PyTorch module shapes."""
    C = channels
    ks = jax.random.split(key, 6)

    def u(k, shape, fan_in):
        bound = 1.0 / (fan_in ** 0.5)
        return jax.random.uniform(k, shape, jnp.float32, -bound, bound)

    return {
        # nn.LayerNorm([channels])
        "ln1_w": jnp.ones((C,), jnp.float32),
        "ln1_b": jnp.zeros((C,), jnp.float32),
        # nn.MultiheadAttention(channels, 4): in_proj (3C, C)+(3C,), out_proj (C, C)+(C,)
        "in_proj_w": u(ks[0], (3 * C, C), C),
        "in_proj_b": u(ks[1], (3 * C,), C),
        "out_proj_w": u(ks[2], (C, C), C),
        "out_proj_b": jnp.zeros((C,), jnp.float32),
        # ff_self: LayerNorm, Linear(C,C), GELU, Linear(C,C)
        "ln2_w": jnp.ones((C,), jnp.float32),
        "ln2_b": jnp.zeros((C,), jnp.float32),
        "fc1_w": u(ks[3], (C, C), C),
        "fc1_b": u(ks[4], (C,), C),
        "fc2_w": u(ks[5], (C, C), C),
        "fc2_b": jnp.zeros((C,), jnp.float32),
    }


def _default_batches_per_step(batch):
    """v7x has 2 TensorCores/chip -> keep a 2-way parallel grid over batch;
    single-TC chips (v5e/v6e) prefer one fat grid step (no ~0.35us/step
    overhead, fatter (B*N, C) matmuls)."""
    kind = ""
    try:
        kind = jax.devices()[0].device_kind.lower()
    except Exception:
        pass
    if "v7" in kind and batch % 2 == 0:
        return batch // 2
    return batch


def self_attention_forward(x, params, channels, size, batches_per_step=None):
    """x: (B, C, size, size) NCHW, float32.  Returns same shape."""
    B = x.shape[0]
    C = channels
    N = size * size
    assert C % NUM_HEADS == 0
    hd = C // NUM_HEADS
    scale = 1.0 / (hd ** 0.5)

    # Glue: NCHW -> (B, N, C) tokens (f32; residual path stays f32).
    x_tok = x.reshape(B, C, N).swapaxes(1, 2).astype(jnp.float32)

    # Glue: transpose PyTorch (out, in) linears so the kernel computes x @ W + b,
    # fuse QKV into one weight slab, fold 1/sqrt(head_dim) into the Q block,
    # and cast the whole slab to bf16 (MXU operand dtype; halves weight DMA).
    ipw, ipb = params["in_proj_w"], params["in_proj_b"]
    w_qkv = jnp.concatenate(
        [ipw[:C, :].T * scale, ipw[C:2 * C, :].T, ipw[2 * C:, :].T], axis=1)   # (C, 3C)
    w_all = jnp.concatenate(
        [w_qkv, params["out_proj_w"].T, params["fc1_w"].T, params["fc2_w"].T],
        axis=1).astype(jnp.bfloat16)                                           # (C, 6C) bf16

    vecs = jnp.stack([
        params["ln1_w"], params["ln1_b"],
        ipb[:C] * scale, ipb[C:2 * C], ipb[2 * C:],
        params["out_proj_b"],
        params["ln2_w"], params["ln2_b"],
        params["fc1_b"], params["fc2_b"],
    ], axis=0).astype(jnp.float32)                                             # (10, C) f32

    if batches_per_step is None:
        batches_per_step = _default_batches_per_step(B)
    bb = batches_per_step
    assert B % bb == 0
    grid = (B // bb,)

    out_tok = pl.pallas_call(
        self_attention_kernel,
        out_shape=jax.ShapeDtypeStruct((B, N, C), jnp.float32),
        grid=grid,
        in_specs=[
            pl.BlockSpec((bb, N, C), lambda i: (i, 0, 0)),     # token slab (f32)
            pl.BlockSpec((C, 6 * C), lambda i: (0, 0)),        # packed weights (bf16)
            pl.BlockSpec((NUM_VECS, C), lambda i: (0, 0)),     # packed vectors (f32)
        ],
        out_specs=pl.BlockSpec((bb, N, C), lambda i: (i, 0, 0)),
        compiler_params=pltpu.CompilerParams(
            dimension_semantics=("parallel",)),
    )(x_tok, w_all, vecs)

    # Glue: (B, N, C) -> NCHW.
    return out_tok.swapaxes(1, 2).reshape(B, C, size, size)


def self_attention_reference(x, params, channels, size):
    """Pure-JAX f32 reference mirroring the PyTorch module (independent of the
    kernel's weight packing / bf16 casts)."""
    B = x.shape[0]
    C = channels
    N = size * size
    H, hd = NUM_HEADS, channels // NUM_HEADS

    xt = x.reshape(B, C, N).swapaxes(1, 2).astype(jnp.float32)

    def ln(z, w, b):
        m = z.mean(-1, keepdims=True)
        v = jnp.square(z - m).mean(-1, keepdims=True)
        return (z - m) / jnp.sqrt(v + EPS) * w + b

    x_ln = ln(xt, params["ln1_w"], params["ln1_b"])
    ipw, ipb = params["in_proj_w"], params["in_proj_b"]
    q = x_ln @ ipw[:C, :].T + ipb[:C]
    k = x_ln @ ipw[C:2 * C, :].T + ipb[C:2 * C]
    v = x_ln @ ipw[2 * C:, :].T + ipb[2 * C:]
    q = q.reshape(B, N, H, hd).transpose(0, 2, 1, 3)
    k = k.reshape(B, N, H, hd).transpose(0, 2, 1, 3)
    v = v.reshape(B, N, H, hd).transpose(0, 2, 1, 3)
    s = jnp.einsum("bhnd,bhmd->bhnm", q, k) / (hd ** 0.5)
    p = jax.nn.softmax(s, axis=-1)
    o = jnp.einsum("bhnm,bhmd->bhnd", p, v).transpose(0, 2, 1, 3).reshape(B, N, C)
    attn = o @ params["out_proj_w"].T + params["out_proj_b"]
    av = attn + xt
    h = ln(av, params["ln2_w"], params["ln2_b"])
    h = h @ params["fc1_w"].T + params["fc1_b"]
    h = 0.5 * h * (1.0 + jax.lax.erf(h * 0.7071067811865476))
    h = h @ params["fc2_w"].T + params["fc2_b"]
    out = h + av
    return out.swapaxes(1, 2).reshape(B, C, size, size)


if __name__ == "__main__":
    key = jax.random.PRNGKey(0)
    kx, kp = jax.random.split(key)

    B, C, size = 2, 32, 8            # channels must be divisible by 4 heads
    x = jax.random.normal(kx, (B, C, size, size), jnp.float32)
    params = init_params(kp, C)

    out = self_attention_forward(x, params, C, size)
    jax.block_until_ready(out)
    assert out.shape == (B, C, size, size), out.shape
    assert bool(jnp.all(jnp.isfinite(out)))

    ref = self_attention_reference(x, params, C, size)
    err = float(jnp.max(jnp.abs(out - ref)))
    assert err < 5e-2, f"max |kernel - reference| = {err}"
    print("KERNEL_OK")
</pallas_src>

<mosaic_0001>
module attributes {stable_mosaic.version = 11 : i64} {
  func.func @self_attention_kernel(%arg0: i32, %arg1: memref<2x64x32xf32, #tpu.memory_space<vmem>>, %arg2: memref<32x192xbf16, #tpu.memory_space<vmem>>, %arg3: memref<10x32xf32, #tpu.memory_space<vmem>>, %arg4: memref<2x64x32xf32, #tpu.memory_space<vmem>>) attributes {dimension_semantics = [#tpu.dimension_semantics<parallel>], iteration_bounds = array<i64: 1>, scalar_prefetch = 0 : i64, scratch_operands = 0 : i64, tpu.core_type = #tpu.core_type<tc>, window_params = [{transform_indices = @transform_0, window_bounds = array<i64: 2, 64, 32>}, {pipeline_mode = #tpu.pipeline_mode<synchronous>, transform_indices = @transform_1, window_bounds = array<i64: 32, 192>}, {pipeline_mode = #tpu.pipeline_mode<synchronous>, transform_indices = @transform_2, window_bounds = array<i64: 10, 32>}, {transform_indices = @transform_3, window_bounds = array<i64: 2, 64, 32>}]} {
    %c0 = arith.constant 0 : index
    %c0_0 = arith.constant 0 : index
    %c0_1 = arith.constant 0 : index
    %0 = vector.load %arg1[%c0, %c0_0, %c0_1] : memref<2x64x32xf32, #tpu.memory_space<vmem>>, vector<2x64x32xf32>
    %1 = vector.shape_cast %0 : vector<2x64x32xf32> to vector<128x32xf32>
    %c0_2 = arith.constant 0 : index
    %c0_3 = arith.constant 0 : index
    %2 = vector.load %arg3[%c0_2, %c0_3] : memref<10x32xf32, #tpu.memory_space<vmem>>, vector<10x32xf32>
    %3 = vector.extract_strided_slice %2 {offsets = [0, 0], sizes = [1, 32], strides = [1, 1]} : vector<10x32xf32> to vector<1x32xf32>
    %4 = vector.extract_strided_slice %2 {offsets = [1, 0], sizes = [1, 32], strides = [1, 1]} : vector<10x32xf32> to vector<1x32xf32>
    %5 = vector.extract_strided_slice %2 {offsets = [2, 0], sizes = [1, 32], strides = [1, 1]} : vector<10x32xf32> to vector<1x32xf32>
    %6 = vector.extract_strided_slice %2 {offsets = [3, 0], sizes = [1, 32], strides = [1, 1]} : vector<10x32xf32> to vector<1x32xf32>
    %7 = vector.extract_strided_slice %2 {offsets = [4, 0], sizes = [1, 32], strides = [1, 1]} : vector<10x32xf32> to vector<1x32xf32>
    %8 = vector.extract_strided_slice %2 {offsets = [5, 0], sizes = [1, 32], strides = [1, 1]} : vector<10x32xf32> to vector<1x32xf32>
    %9 = vector.extract_strided_slice %2 {offsets = [6, 0], sizes = [1, 32], strides = [1, 1]} : vector<10x32xf32> to vector<1x32xf32>
    %10 = vector.extract_strided_slice %2 {offsets = [7, 0], sizes = [1, 32], strides = [1, 1]} : vector<10x32xf32> to vector<1x32xf32>
    %11 = vector.extract_strided_slice %2 {offsets = [8, 0], sizes = [1, 32], strides = [1, 1]} : vector<10x32xf32> to vector<1x32xf32>
    %12 = vector.extract_strided_slice %2 {offsets = [9, 0], sizes = [1, 32], strides = [1, 1]} : vector<10x32xf32> to vector<1x32xf32>
    %c0_4 = arith.constant 0 : index
    %c0_5 = arith.constant 0 : index
    %13 = vector.load %arg2[%c0_4, %c0_5] : memref<32x192xbf16, #tpu.memory_space<vmem>>, vector<32x96xbf16>
    %c0_6 = arith.constant 0 : index
    %c96 = arith.constant 96 : index
    %14 = vector.load %arg2[%c0_6, %c96] : memref<32x192xbf16, #tpu.memory_space<vmem>>, vector<32x32xbf16>
    %c0_7 = arith.constant 0 : index
    %c128 = arith.constant 128 : index
    %15 = vector.load %arg2[%c0_7, %c128] : memref<32x192xbf16, #tpu.memory_space<vmem>>, vector<32x32xbf16>
    %c0_8 = arith.constant 0 : index
    %c160 = arith.constant 160 : index
    %16 = vector.load %arg2[%c0_8, %c160] : memref<32x192xbf16, #tpu.memory_space<vmem>>, vector<32x32xbf16>
    %cst = arith.constant dense<0.000000e+00> : vector<128xf32>
    %17 = vector.multi_reduction <add>, %1, %cst [1] : vector<128x32xf32> to vector<128xf32>
    %18 = vector.shape_cast %17 : vector<128xf32> to vector<128x1xf32>
    %cst_9 = arith.constant 3.200000e+01 : f32
    %19 = vector.broadcast %cst_9 : f32 to vector<128x1xf32>
    %20 = arith.divf %18, %19 : vector<128x1xf32>
    %21 = vector.broadcast %20 : vector<128x1xf32> to vector<128x32xf32>
    %22 = arith.subf %1, %21 : vector<128x32xf32>
    %23 = arith.mulf %22, %22 : vector<128x32xf32>
    %cst_10 = arith.constant dense<0.000000e+00> : vector<128xf32>
    %24 = vector.multi_reduction <add>, %23, %cst_10 [1] : vector<128x32xf32> to vector<128xf32>
    %25 = vector.shape_cast %24 : vector<128xf32> to vector<128x1xf32>
    %cst_11 = arith.constant 3.200000e+01 : f32
    %26 = vector.broadcast %cst_11 : f32 to vector<128x1xf32>
    %27 = arith.divf %25, %26 : vector<128x1xf32>
    %28 = vector.broadcast %20 : vector<128x1xf32> to vector<128x32xf32>
    %29 = arith.subf %1, %28 : vector<128x32xf32>
    %cst_12 = arith.constant 9.99999974E-6 : f32
    %30 = vector.broadcast %cst_12 : f32 to vector<128x1xf32>
    %31 = arith.addf %27, %30 : vector<128x1xf32>
    %32 = math.rsqrt %31 : vector<128x1xf32>
    %33 = vector.broadcast %32 : vector<128x1xf32> to vector<128x32xf32>
    %34 = arith.mulf %29, %33 : vector<128x32xf32>
    %35 = vector.broadcast %3 : vector<1x32xf32> to vector<128x32xf32>
    %36 = arith.mulf %34, %35 : vector<128x32xf32>
    %37 = vector.broadcast %4 : vector<1x32xf32> to vector<128x32xf32>
    %38 = arith.addf %36, %37 : vector<128x32xf32>
    %39 = arith.truncf %38 : vector<128x32xf32> to vector<128x32xbf16>
    %cst_13 = arith.constant dense<0.000000e+00> : vector<128x96xf32>
    %40 = tpu.matmul %39, %13, %cst_13 {dimension_numbers = #tpu.dot_dimension_numbers<[1], [0], [0], [1], [0, 0, 1, 1], [], []>} : vector<128x32xbf16>, vector<32x96xbf16>, vector<128x96xf32> -> vector<128x96xf32>
    %41 = vector.extract_strided_slice %40 {offsets = [0, 0], sizes = [128, 32], strides = [1, 1]} : vector<128x96xf32> to vector<128x32xf32>
    %42 = vector.broadcast %5 : vector<1x32xf32> to vector<128x32xf32>
    %43 = arith.addf %41, %42 : vector<128x32xf32>
    %44 = arith.truncf %43 : vector<128x32xf32> to vector<128x32xbf16>
    %45 = vector.extract_strided_slice %40 {offsets = [0, 32], sizes = [128, 32], strides = [1, 1]} : vector<128x96xf32> to vector<128x32xf32>
    %46 = vector.broadcast %6 : vector<1x32xf32> to vector<128x32xf32>
    %47 = arith.addf %45, %46 : vector<128x32xf32>
    %48 = arith.truncf %47 : vector<128x32xf32> to vector<128x32xbf16>
    %49 = vector.extract_strided_slice %40 {offsets = [0, 64], sizes = [128, 32], strides = [1, 1]} : vector<128x96xf32> to vector<128x32xf32>
    %50 = vector.broadcast %7 : vector<1x32xf32> to vector<128x32xf32>
    %51 = arith.addf %49, %50 : vector<128x32xf32>
    %52 = arith.truncf %51 : vector<128x32xf32> to vector<128x32xbf16>
    %53 = vector.extract_strided_slice %44 {offsets = [0, 0], sizes = [128, 8], strides = [1, 1]} : vector<128x32xbf16> to vector<128x8xbf16>
    %54 = vector.extract_strided_slice %44 {offsets = [0, 8], sizes = [128, 8], strides = [1, 1]} : vector<128x32xbf16> to vector<128x8xbf16>
    %55 = vector.extract_strided_slice %44 {offsets = [0, 16], sizes = [128, 8], strides = [1, 1]} : vector<128x32xbf16> to vector<128x8xbf16>
    %56 = vector.extract_strided_slice %44 {offsets = [0, 24], sizes = [128, 8], strides = [1, 1]} : vector<128x32xbf16> to vector<128x8xbf16>
    %57 = vector.shape_cast %53 : vector<128x8xbf16> to vector<1x128x8xbf16>
    %58 = vector.shape_cast %54 : vector<128x8xbf16> to vector<1x128x8xbf16>
    %59 = vector.shape_cast %55 : vector<128x8xbf16> to vector<1x128x8xbf16>
    %60 = vector.shape_cast %56 : vector<128x8xbf16> to vector<1x128x8xbf16>
    %61 = tpu.concatenate %57, %58, %59, %60 in 0 : vector<1x128x8xbf16>, vector<1x128x8xbf16>, vector<1x128x8xbf16>, vector<1x128x8xbf16> -> vector<4x128x8xbf16>
    %62 = vector.shape_cast %61 : vector<4x128x8xbf16> to vector<8x64x8xbf16>
    %63 = vector.extract_strided_slice %48 {offsets = [0, 0], sizes = [128, 8], strides = [1, 1]} : vector<128x32xbf16> to vector<128x8xbf16>
    %64 = vector.extract_strided_slice %48 {offsets = [0, 8], sizes = [128, 8], strides = [1, 1]} : vector<128x32xbf16> to vector<128x8xbf16>
    %65 = vector.extract_strided_slice %48 {offsets = [0, 16], sizes = [128, 8], strides = [1, 1]} : vector<128x32xbf16> to vector<128x8xbf16>
    %66 = vector.extract_strided_slice %48 {offsets = [0, 24], sizes = [128, 8], strides = [1, 1]} : vector<128x32xbf16> to vector<128x8xbf16>
    %67 = vector.shape_cast %63 : vector<128x8xbf16> to vector<1x128x8xbf16>
    %68 = vector.shape_cast %64 : vector<128x8xbf16> to vector<1x128x8xbf16>
    %69 = vector.shape_cast %65 : vector<128x8xbf16> to vector<1x128x8xbf16>
    %70 = vector.shape_cast %66 : vector<128x8xbf16> to vector<1x128x8xbf16>
    %71 = tpu.concatenate %67, %68, %69, %70 in 0 : vector<1x128x8xbf16>, vector<1x128x8xbf16>, vector<1x128x8xbf16>, vector<1x128x8xbf16> -> vector<4x128x8xbf16>
    %72 = vector.shape_cast %71 : vector<4x128x8xbf16> to vector<8x64x8xbf16>
    %73 = vector.extract_strided_slice %52 {offsets = [0, 0], sizes = [128, 8], strides = [1, 1]} : vector<128x32xbf16> to vector<128x8xbf16>
    %74 = vector.extract_strided_slice %52 {offsets = [0, 8], sizes = [128, 8], strides = [1, 1]} : vector<128x32xbf16> to vector<128x8xbf16>
    %75 = vector.extract_strided_slice %52 {offsets = [0, 16], sizes = [128, 8], strides = [1, 1]} : vector<128x32xbf16> to vector<128x8xbf16>
    %76 = vector.extract_strided_slice %52 {offsets = [0, 24], sizes = [128, 8], strides = [1, 1]} : vector<128x32xbf16> to vector<128x8xbf16>
    %77 = vector.shape_cast %73 : vector<128x8xbf16> to vector<1x128x8xbf16>
    %78 = vector.shape_cast %74 : vector<128x8xbf16> to vector<1x128x8xbf16>
    %79 = vector.shape_cast %75 : vector<128x8xbf16> to vector<1x128x8xbf16>
    %80 = vector.shape_cast %76 : vector<128x8xbf16> to vector<1x128x8xbf16>
    %81 = tpu.concatenate %77, %78, %79, %80 in 0 : vector<1x128x8xbf16>, vector<1x128x8xbf16>, vector<1x128x8xbf16>, vector<1x128x8xbf16> -> vector<4x128x8xbf16>
    %82 = vector.shape_cast %81 : vector<4x128x8xbf16> to vector<8x64x8xbf16>
    "tpu.trace_start"() <{level = 10 : i32, message = "bnd,bmd->bnm"}> : () -> ()
    %cst_14 = arith.constant dense<0.000000e+00> : vector<8x64x64xf32>
    %83 = tpu.matmul %62, %72, %cst_14 {dimension_numbers = #tpu.dot_dimension_numbers<[2], [2], [1], [1], [0, 0, 0, 1, 1, 1], [0], [0]>} : vector<8x64x8xbf16>, vector<8x64x8xbf16>, vector<8x64x64xf32> -> vector<8x64x64xf32>
    "tpu.trace_stop"() : () -> ()
    %cst_15 = arith.constant dense<0xFF800000> : vector<8x64xf32>
    %84 = vector.multi_reduction <maximumf>, %83, %cst_15 [2] : vector<8x64x64xf32> to vector<8x64xf32>
    %85 = vector.shape_cast %84 : vector<8x64xf32> to vector<8x64x1xf32>
    %86 = vector.broadcast %85 : vector<8x64x1xf32> to vector<8x64x64xf32>
    %87 = arith.subf %83, %86 : vector<8x64x64xf32>
    %88 = math.exp %87 : vector<8x64x64xf32>
    %cst_16 = arith.constant dense<0.000000e+00> : vector<8x64xf32>
    %89 = vector.multi_reduction <add>, %88, %cst_16 [2] : vector<8x64x64xf32> to vector<8x64xf32>
    %90 = vector.shape_cast %89 : vector<8x64xf32> to vector<8x64x1xf32>
    %91 = tpu.reciprocal %90 {approx = true} : vector<8x64x1xf32> -> vector<8x64x1xf32>
    %92 = arith.truncf %88 : vector<8x64x64xf32> to vector<8x64x64xbf16>
    "tpu.trace_start"() <{level = 10 : i32, message = "bnm,bmd->bnd"}> : () -> ()
    %cst_17 = arith.constant dense<0.000000e+00> : vector<8x64x8xf32>
    %93 = tpu.matmul %92, %82, %cst_17 {dimension_numbers = #tpu.dot_dimension_numbers<[2], [1], [1], [2], [0, 0, 0, 1, 1, 2], [0], [0]>} : vector<8x64x64xbf16>, vector<8x64x8xbf16>, vector<8x64x8xf32> -> vector<8x64x8xf32>
    "tpu.trace_stop"() : () -> ()
    %94 = vector.broadcast %91 : vector<8x64x1xf32> to vector<8x64x8xf32>
    %95 = arith.mulf %93, %94 : vector<8x64x8xf32>
    %96 = vector.extract_strided_slice %95 {offsets = [0, 0, 0], sizes = [1, 64, 8], strides = [1, 1, 1]} : vector<8x64x8xf32> to vector<1x64x8xf32>
    %97 = vector.shape_cast %96 : vector<1x64x8xf32> to vector<64x8xf32>
    %98 = vector.extract_strided_slice %95 {offsets = [2, 0, 0], sizes = [1, 64, 8], strides = [1, 1, 1]} : vector<8x64x8xf32> to vector<1x64x8xf32>
    %99 = vector.shape_cast %98 : vector<1x64x8xf32> to vector<64x8xf32>
    %100 = vector.extract_strided_slice %95 {offsets = [4, 0, 0], sizes = [1, 64, 8], strides = [1, 1, 1]} : vector<8x64x8xf32> to vector<1x64x8xf32>
    %101 = vector.shape_cast %100 : vector<1x64x8xf32> to vector<64x8xf32>
    %102 = vector.extract_strided_slice %95 {offsets = [6, 0, 0], sizes = [1, 64, 8], strides = [1, 1, 1]} : vector<8x64x8xf32> to vector<1x64x8xf32>
    %103 = vector.shape_cast %102 : vector<1x64x8xf32> to vector<64x8xf32>
    %104 = tpu.concatenate %97, %99, %101, %103 in 1 : vector<64x8xf32>, vector<64x8xf32>, vector<64x8xf32>, vector<64x8xf32> -> vector<64x32xf32>
    %105 = vector.extract_strided_slice %95 {offsets = [1, 0, 0], sizes = [1, 64, 8], strides = [1, 1, 1]} : vector<8x64x8xf32> to vector<1x64x8xf32>
    %106 = vector.shape_cast %105 : vector<1x64x8xf32> to vector<64x8xf32>
    %107 = vector.extract_strided_slice %95 {offsets = [3, 0, 0], sizes = [1, 64, 8], strides = [1, 1, 1]} : vector<8x64x8xf32> to vector<1x64x8xf32>
    %108 = vector.shape_cast %107 : vector<1x64x8xf32> to vector<64x8xf32>
    %109 = vector.extract_strided_slice %95 {offsets = [5, 0, 0], sizes = [1, 64, 8], strides = [1, 1, 1]} : vector<8x64x8xf32> to vector<1x64x8xf32>
    %110 = vector.shape_cast %109 : vector<1x64x8xf32> to vector<64x8xf32>
    %111 = vector.extract_strided_slice %95 {offsets = [7, 0, 0], sizes = [1, 64, 8], strides = [1, 1, 1]} : vector<8x64x8xf32> to vector<1x64x8xf32>
    %112 = vector.shape_cast %111 : vector<1x64x8xf32> to vector<64x8xf32>
    %113 = tpu.concatenate %106, %108, %110, %112 in 1 : vector<64x8xf32>, vector<64x8xf32>, vector<64x8xf32>, vector<64x8xf32> -> vector<64x32xf32>
    %114 = tpu.concatenate %104, %113 in 0 : vector<64x32xf32>, vector<64x32xf32> -> vector<128x32xf32>
    %115 = arith.truncf %114 : vector<128x32xf32> to vector<128x32xbf16>
    %cst_18 = arith.constant dense<0.000000e+00> : vector<128x32xf32>
    %116 = tpu.matmul %115, %14, %cst_18 {dimension_numbers = #tpu.dot_dimension_numbers<[1], [0], [0], [1], [0, 0, 1, 1], [], []>} : vector<128x32xbf16>, vector<32x32xbf16>, vector<128x32xf32> -> vector<128x32xf32>
    %117 = vector.broadcast %8 : vector<1x32xf32> to vector<128x32xf32>
    %118 = arith.addf %116, %117 : vector<128x32xf32>
    %119 = arith.addf %118, %1 : vector<128x32xf32>
    %cst_19 = arith.constant dense<0.000000e+00> : vector<128xf32>
    %120 = vector.multi_reduction <add>, %119, %cst_19 [1] : vector<128x32xf32> to vector<128xf32>
    %121 = vector.shape_cast %120 : vector<128xf32> to vector<128x1xf32>
    %cst_20 = arith.constant 3.200000e+01 : f32
    %122 = vector.broadcast %cst_20 : f32 to vector<128x1xf32>
    %123 = arith.divf %121, %122 : vector<128x1xf32>
    %124 = vector.broadcast %123 : vector<128x1xf32> to vector<128x32xf32>
    %125 = arith.subf %119, %124 : vector<128x32xf32>
    %126 = arith.mulf %125, %125 : vector<128x32xf32>
    %cst_21 = arith.constant dense<0.000000e+00> : vector<128xf32>
    %127 = vector.multi_reduction <add>, %126, %cst_21 [1] : vector<128x32xf32> to vector<128xf32>
    %128 = vector.shape_cast %127 : vector<128xf32> to vector<128x1xf32>
    %cst_22 = arith.constant 3.200000e+01 : f32
    %129 = vector.broadcast %cst_22 : f32 to vector<128x1xf32>
    %130 = arith.divf %128, %129 : vector<128x1xf32>
    %131 = vector.broadcast %123 : vector<128x1xf32> to vector<128x32xf32>
    %132 = arith.subf %119, %131 : vector<128x32xf32>
    %cst_23 = arith.constant 9.99999974E-6 : f32
    %133 = vector.broadcast %cst_23 : f32 to vector<128x1xf32>
    %134 = arith.addf %130, %133 : vector<128x1xf32>
    %135 = math.rsqrt %134 : vector<128x1xf32>
    %136 = vector.broadcast %135 : vector<128x1xf32> to vector<128x32xf32>
    %137 = arith.mulf %132, %136 : vector<128x32xf32>
    %138 = vector.broadcast %9 : vector<1x32xf32> to vector<128x32xf32>
    %139 = arith.mulf %137, %138 : vector<128x32xf32>
    %140 = vector.broadcast %10 : vector<1x32xf32> to vector<128x32xf32>
    %141 = arith.addf %139, %140 : vector<128x32xf32>
    %142 = arith.truncf %141 : vector<128x32xf32> to vector<128x32xbf16>
    %cst_24 = arith.constant dense<0.000000e+00> : vector<128x32xf32>
    %143 = tpu.matmul %142, %15, %cst_24 {dimension_numbers = #tpu.dot_dimension_numbers<[1], [0], [0], [1], [0, 0, 1, 1], [], []>} : vector<128x32xbf16>, vector<32x32xbf16>, vector<128x32xf32> -> vector<128x32xf32>
    %144 = vector.broadcast %11 : vector<1x32xf32> to vector<128x32xf32>
    %145 = arith.addf %143, %144 : vector<128x32xf32>
    %cst_25 = arith.constant 5.000000e-01 : f32
    %146 = vector.broadcast %cst_25 : f32 to vector<128x32xf32>
    %147 = arith.mulf %146, %145 : vector<128x32xf32>
    %cst_26 = arith.constant 0.707106769 : f32
    %148 = vector.broadcast %cst_26 : f32 to vector<128x32xf32>
    %149 = arith.mulf %145, %148 : vector<128x32xf32>
    %150 = math.absf %149 : vector<128x32xf32>
    %cst_27 = arith.constant 0.327591091 : f32
    %151 = vector.broadcast %cst_27 : f32 to vector<128x32xf32>
    %152 = arith.mulf %151, %150 : vector<128x32xf32>
    %cst_28 = arith.constant 1.000000e+00 : f32
    %153 = vector.broadcast %cst_28 : f32 to vector<128x32xf32>
    %154 = arith.addf %153, %152 : vector<128x32xf32>
    %cst_29 = arith.constant 1.000000e+00 : f32
    %155 = vector.broadcast %cst_29 : f32 to vector<128x32xf32>
    %156 = arith.divf %155, %154 : vector<128x32xf32>
    %cst_30 = arith.constant 1.06140542 : f32
    %157 = vector.broadcast %cst_30 : f32 to vector<128x32xf32>
    %158 = arith.mulf %157, %156 : vector<128x32xf32>
    %cst_31 = arith.constant -1.45315206 : f32
    %159 = vector.broadcast %cst_31 : f32 to vector<128x32xf32>
    %160 = arith.addf %158, %159 : vector<128x32xf32>
    %161 = arith.mulf %160, %156 : vector<128x32xf32>
    %cst_32 = arith.constant 1.42141378 : f32
    %162 = vector.broadcast %cst_32 : f32 to vector<128x32xf32>
    %163 = arith.addf %161, %162 : vector<128x32xf32>
    %164 = arith.mulf %163, %156 : vector<128x32xf32>
    %cst_33 = arith.constant -0.284496725 : f32
    %165 = vector.broadcast %cst_33 : f32 to vector<128x32xf32>
    %166 = arith.addf %164, %165 : vector<128x32xf32>
    %167 = arith.mulf %166, %156 : vector<128x32xf32>
    %cst_34 = arith.constant 0.254829586 : f32
    %168 = vector.broadcast %cst_34 : f32 to vector<128x32xf32>
    %169 = arith.addf %167, %168 : vector<128x32xf32>
    %170 = arith.mulf %169, %156 : vector<128x32xf32>
    %cst_35 = arith.constant 0.000000e+00 : f32
    %171 = vector.broadcast %cst_35 : f32 to vector<128x32xf32>
    %172 = arith.subf %171, %150 : vector<128x32xf32>
    %173 = arith.mulf %172, %150 : vector<128x32xf32>
    %174 = math.exp %173 : vector<128x32xf32>
    %175 = arith.mulf %170, %174 : vector<128x32xf32>
    %cst_36 = arith.constant 1.000000e+00 : f32
    %176 = vector.broadcast %cst_36 : f32 to vector<128x32xf32>
    %177 = arith.subf %176, %175 : vector<128x32xf32>
    %cst_37 = arith.constant 0.000000e+00 : f32
    %178 = vector.broadcast %cst_37 : f32 to vector<128x32xf32>
    %179 = arith.cmpf oge, %149, %178 : vector<128x32xf32>
    %cst_38 = arith.constant 0.000000e+00 : f32
    %180 = vector.broadcast %cst_38 : f32 to vector<128x32xf32>
    %181 = arith.subf %180, %177 : vector<128x32xf32>
    %182 = arith.select %179, %177, %181 : vector<128x32xi1>, vector<128x32xf32>
    %cst_39 = arith.constant 1.000000e+00 : f32
    %183 = vector.broadcast %cst_39 : f32 to vector<128x32xf32>
    %184 = arith.addf %183, %182 : vector<128x32xf32>
    %185 = arith.mulf %147, %184 : vector<128x32xf32>
    %186 = arith.truncf %185 : vector<128x32xf32> to vector<128x32xbf16>
    %cst_40 = arith.constant dense<0.000000e+00> : vector<128x32xf32>
    %187 = tpu.matmul %186, %16, %cst_40 {dimension_numbers = #tpu.dot_dimension_numbers<[1], [0], [0], [1], [0, 0, 1, 1], [], []>} : vector<128x32xbf16>, vector<32x32xbf16>, vector<128x32xf32> -> vector<128x32xf32>
    %188 = vector.broadcast %12 : vector<1x32xf32> to vector<128x32xf32>
    %189 = arith.addf %187, %188 : vector<128x32xf32>
    %190 = arith.addf %189, %119 : vector<128x32xf32>
    %191 = vector.shape_cast %190 : vector<128x32xf32> to vector<2x64x32xf32>
    %c0_41 = arith.constant 0 : index
    %c0_42 = arith.constant 0 : index
    %c0_43 = arith.constant 0 : index
    %192 = vector.load %arg4[%c0_41, %c0_42, %c0_43] : memref<2x64x32xf32, #tpu.memory_space<vmem>>, vector<2x64x32xf32>
    tpu.vector_store %arg4[%c0_41, %c0_42, %c0_43], %191 {strides = array<i32>} : memref<2x64x32xf32, #tpu.memory_space<vmem>>, vector<2x64x32xf32>,
    return
  }
  func.func @transform_0(%arg0: i32) -> (i32, i32, i32) {
    %c0_i32 = arith.constant 0 : i32
    %c0_i32_0 = arith.constant 0 : i32
    %c0_i32_1 = arith.constant 0 : i32
    return %arg0, %c0_i32, %c0_i32_0 : i32, i32, i32
  }
  func.func @transform_1(%arg0: i32) -> (i32, i32) {
    %c0_i32 = arith.constant 0 : i32
    %c0_i32_0 = arith.constant 0 : i32
    %c0_i32_1 = arith.constant 0 : i32
    return %c0_i32, %c0_i32_0 : i32, i32
  }
  func.func @transform_2(%arg0: i32) -> (i32, i32) {
    %c0_i32 = arith.constant 0 : i32
    %c0_i32_0 = arith.constant 0 : i32
    %c0_i32_1 = arith.constant 0 : i32
    return %c0_i32, %c0_i32_0 : i32, i32
  }
  func.func @transform_3(%arg0: i32) -> (i32, i32, i32) {
    %c0_i32 = arith.constant 0 : i32
    %c0_i32_0 = arith.constant 0 : i32
    %c0_i32_1 = arith.constant 0 : i32
    return %arg0, %c0_i32, %c0_i32_0 : i32, i32, i32
  }
}

</mosaic_0001>

<llo_original>
// kernel: tpu_custom_call.1
$region0: #{tpu_custom_call.1}
  #allocation0 [shape = 'u32[]', space=smem, size = 0x4, offset = 0x4, fixed_abs, tag = 'smem constant byte address 0x4 - core index']
  #allocation1 [shape = 'u32[144,128]{1,0:T(1,128)}', space=vmem, size = 0x12000, scoped, tag = 'internal scratch']
  %s0 = inlined_call_operand.vmem [shape: f32[2,64,32], index: 0, kind: input, shape index: {}]
  %s1 = inlined_call_operand.vmem [shape: bf16[32,192], index: 1, kind: input, shape index: {}]
  %s2 = inlined_call_operand.vmem [shape: f32[10,32], index: 2, kind: input, shape index: {}]
  %s3 = inlined_call_operand.vmem [shape: f32[2,64,32], index: 3, kind: output, shape index: {}]
  %s4 = sld [smem:[#allocation0]]
  $region22: #{tpu_custom_call.1} parent=0
    _
  %s6 = ssub.s32 1, %s4
  %s7 = scalar_select 0, %s6, %s4
  // Predicated region
  $region2: #{tpu_custom_call.1} parent=0 // pred_check
    _
  $region3: #{tpu_custom_call.1} parent=0 // pred_check_branch
    %9 = sbr.rel (0) target = $region5
  $region4: #{tpu_custom_call.1} parent=0 // pred_region
    _
  $region5: #{tpu_custom_call.1} parent=0 // pred_fallthru
    _
  // Predicated region
  $region6: #{tpu_custom_call.1} parent=0 // pred_check
    _
  $region7: #{tpu_custom_call.1} parent=0 // pred_check_branch
    %11 = sbr.rel (0) target = $region9
  $region8: #{tpu_custom_call.1} parent=0 // pred_region
    _
  $region9: #{tpu_custom_call.1} parent=0 // pred_fallthru
    _
  // Predicated region
  $region10: #{tpu_custom_call.1} parent=0 // pred_check
    _
  $region11: #{tpu_custom_call.1} parent=0 // pred_check_branch
    %13 = sbr.rel (0) target = $region13
  $region12: #{tpu_custom_call.1} parent=0 // pred_region
    _
  $region13: #{tpu_custom_call.1} parent=0 // pred_fallthru
    _
  %v15 = vld [vmem:[%s0] sm:$0xff]
  %v16 = vld [vmem:[%s0 + $0x8] sm:$0xff]
  %v17 = vld [vmem:[%s0 + $0x10] sm:$0xff]
  %v18 = vld [vmem:[%s0 + $0x18] sm:$0xff]
  %v19 = vld [vmem:[%s0 + $0x20] sm:$0xff]
  %v20 = vld [vmem:[%s0 + $0x28] sm:$0xff]
  %v21 = vld [vmem:[%s0 + $0x30] sm:$0xff]
  %v22 = vld [vmem:[%s0 + $0x38] sm:$0xff]
  %v23 = vld [vmem:[%s0 + $0x40] sm:$0xff]
  %v24 = vld [vmem:[%s0 + $0x48] sm:$0xff]
  %v25 = vld [vmem:[%s0 + $0x50] sm:$0xff]
  %v26 = vld [vmem:[%s0 + $0x58] sm:$0xff]
  %v27 = vld [vmem:[%s0 + $0x60] sm:$0xff]
  %v28 = vld [vmem:[%s0 + $0x68] sm:$0xff]
  %v29 = vld [vmem:[%s0 + $0x70] sm:$0xff]
  %v30 = vld [vmem:[%s0 + $0x78] sm:$0xff]
  %v31 = vld [vmem:[%s2] sm:$0xff]
  %v32 = vld [vmem:[%s2 + $0x8] sm:$0x3]
  %v33 = vld [vmem:[%s1] sm:$0xf]
  %v34 = vld [vmem:[%s1 + $0x8] sm:$0xf]
  %v35 = vld [vmem:[%s1 + $0x10] sm:$0xf]
  %v36 = vld [vmem:[%s1 + $0x18] sm:$0xf]
  %v37 = vld [vmem:[%s1 + $0x4] sm:$0xf]
  %v38 = vld [vmem:[%s1 + $0xc] sm:$0xf]
  %v39 = vld [vmem:[%s1 + $0x14] sm:$0xf]
  %v40 = vld [vmem:[%s1 + $0x1c] sm:$0xf]
  %vm41 = vcmask 261120
  %v42 = vsel %vm41, %v15, 0.0
  %43 = vadd.xlane.f32.xlu0 %v42
  %v44 = vpop.xlane.xlu0 %43
  %v45 = vsel %vm41, %v16, 0.0
  %46 = vadd.xlane.f32.xlu0 %v45
  %v47 = vpop.xlane.xlu0 %46
  %v48 = vsel %vm41, %v17, 0.0
  %49 = vadd.xlane.f32.xlu0 %v48
  %v50 = vpop.xlane.xlu0 %49
  %v51 = vsel %vm41, %v18, 0.0
  %52 = vadd.xlane.f32.xlu0 %v51
  %v53 = vpop.xlane.xlu0 %52
  %v54 = vsel %vm41, %v19, 0.0
  %55 = vadd.xlane.f32.xlu0 %v54
  %v56 = vpop.xlane.xlu0 %55
  %v57 = vsel %vm41, %v20, 0.0
  %58 = vadd.xlane.f32.xlu0 %v57
  %v59 = vpop.xlane.xlu0 %58
  %v60 = vsel %vm41, %v21, 0.0
  %61 = vadd.xlane.f32.xlu0 %v60
  %v62 = vpop.xlane.xlu0 %61
  %v63 = vsel %vm41, %v22, 0.0
  %64 = vadd.xlane.f32.xlu0 %v63
  %v65 = vpop.xlane.xlu0 %64
  %v66 = vsel %vm41, %v23, 0.0
  %67 = vadd.xlane.f32.xlu0 %v66
  %v68 = vpop.xlane.xlu0 %67
  %v69 = vsel %vm41, %v24, 0.0
  %70 = vadd.xlane.f32.xlu0 %v69
  %v71 = vpop.xlane.xlu0 %70
  %v72 = vsel %vm41, %v25, 0.0
  %73 = vadd.xlane.f32.xlu0 %v72
  %v74 = vpop.xlane.xlu0 %73
  %v75 = vsel %vm41, %v26, 0.0
  %76 = vadd.xlane.f32.xlu0 %v75
  %v77 = vpop.xlane.xlu0 %76
  %v78 = vsel %vm41, %v27, 0.0
  %79 = vadd.xlane.f32.xlu0 %v78
  %v80 = vpop.xlane.xlu0 %79
  %v81 = vsel %vm41, %v28, 0.0
  %82 = vadd.xlane.f32.xlu0 %v81
  %v83 = vpop.xlane.xlu0 %82
  %v84 = vsel %vm41, %v29, 0.0
  %85 = vadd.xlane.f32.xlu0 %v84
  %v86 = vpop.xlane.xlu0 %85
  %v87 = vsel %vm41, %v30, 0.0
  %88 = vadd.xlane.f32.xlu0 %v87
  %v89 = vpop.xlane.xlu0 %88
  %v90 = vrcp.pop 32.0
  %v91 = vmul.f32 %v44, %v90
  %v92 = vmul.f32 %v47, %v90
  %v93 = vmul.f32 %v50, %v90
  %v94 = vmul.f32 %v53, %v90
  %v95 = vmul.f32 %v56, %v90
  %v96 = vmul.f32 %v59, %v90
  %v97 = vmul.f32 %v62, %v90
  %v98 = vmul.f32 %v65, %v90
  %v99 = vmul.f32 %v68, %v90
  %v100 = vmul.f32 %v71, %v90
  %v101 = vmul.f32 %v74, %v90
  %v102 = vmul.f32 %v77, %v90
  %v103 = vmul.f32 %v80, %v90
  %v104 = vmul.f32 %v83, %v90
  %v105 = vmul.f32 %v86, %v90
  %v106 = vmul.f32 %v89, %v90
  %v107 = vsub.f32 %v15, %v91
  %v108 = vsub.f32 %v16, %v92
  %v109 = vsub.f32 %v17, %v93
  %v110 = vsub.f32 %v18, %v94
  %v111 = vsub.f32 %v19, %v95
  %v112 = vsub.f32 %v20, %v96
  %v113 = vsub.f32 %v21, %v97
  %v114 = vsub.f32 %v22, %v98
  %v115 = vsub.f32 %v23, %v99
  %v116 = vsub.f32 %v24, %v100
  %v117 = vsub.f32 %v25, %v101
  %v118 = vsub.f32 %v26, %v102
  %v119 = vsub.f32 %v27, %v103
  %v120 = vsub.f32 %v28, %v104
  %v121 = vsub.f32 %v29, %v105
  %v122 = vsub.f32 %v30, %v106
  %v123 = vmul.f32 %v107, %v107
  %v124 = vmul.f32 %v108, %v108
  %v125 = vmul.f32 %v109, %v109
  %v126 = vmul.f32 %v110, %v110
  %v127 = vmul.f32 %v111, %v111
  %v128 = vmul.f32 %v112, %v112
  %v129 = vmul.f32 %v113, %v113
  %v130 = vmul.f32 %v114, %v114
  %v131 = vmul.f32 %v115, %v115
  %v132 = vmul.f32 %v116, %v116
  %v133 = vmul.f32 %v117, %v117
  %v134 = vmul.f32 %v118, %v118
  %v135 = vmul.f32 %v119, %v119
  %v136 = vmul.f32 %v120, %v120
  %v137 = vmul.f32 %v121, %v121
  %v138 = vmul.f32 %v122, %v122
  %v139 = vsel %vm41, %v123, 0.0
  %140 = vadd.xlane.f32.xlu0 %v139
  %v141 = vpop.xlane.xlu0 %140
  %v142 = vsel %vm41, %v124, 0.0
  %143 = vadd.xlane.f32.xlu0 %v142
  %v144 = vpop.xlane.xlu0 %143
  %v145 = vsel %vm41, %v125, 0.0
  %146 = vadd.xlane.f32.xlu0 %v145
  %v147 = vpop.xlane.xlu0 %146
  %v148 = vsel %vm41, %v126, 0.0
  %149 = vadd.xlane.f32.xlu0 %v148
  %v150 = vpop.xlane.xlu0 %149
  %v151 = vsel %vm41, %v127, 0.0
  %152 = vadd.xlane.f32.xlu0 %v151
  %v153 = vpop.xlane.xlu0 %152
  %v154 = vsel %vm41, %v128, 0.0
  %155 = vadd.xlane.f32.xlu0 %v154
  %v156 = vpop.xlane.xlu0 %155
  %v157 = vsel %vm41, %v129, 0.0
  %158 = vadd.xlane.f32.xlu0 %v157
  %v159 = vpop.xlane.xlu0 %158
  %v160 = vsel %vm41, %v130, 0.0
  %161 = vadd.xlane.f32.xlu0 %v160
  %v162 = vpop.xlane.xlu0 %161
  %v163 = vsel %vm41, %v131, 0.0
  %164 = vadd.xlane.f32.xlu0 %v163
  %v165 = vpop.xlane.xlu0 %164
  %v166 = vsel %vm41, %v132, 0.0
  %167 = vadd.xlane.f32.xlu0 %v166
  %v168 = vpop.xlane.xlu0 %167
  %v169 = vsel %vm41, %v133, 0.0
  %170 = vadd.xlane.f32.xlu0 %v169
  %v171 = vpop.xlane.xlu0 %170
  %v172 = vsel %vm41, %v134, 0.0
  %173 = vadd.xlane.f32.xlu0 %v172
  %v174 = vpop.xlane.xlu0 %173
  %v175 = vsel %vm41, %v135, 0.0
  %176 = vadd.xlane.f32.xlu0 %v175
  %v177 = vpop.xlane.xlu0 %176
  %v178 = vsel %vm41, %v136, 0.0
  %179 = vadd.xlane.f32.xlu0 %v178
  %v180 = vpop.xlane.xlu0 %179
  %v181 = vsel %vm41, %v137, 0.0
  %182 = vadd.xlane.f32.xlu0 %v181
  %v183 = vpop.xlane.xlu0 %182
  %v184 = vsel %vm41, %v138, 0.0
  %185 = vadd.xlane.f32.xlu0 %v184
  %v186 = vpop.xlane.xlu0 %185
  %v187 = vmul.f32 %v141, %v90
  %v188 = vmul.f32 %v144, %v90
  %v189 = vmul.f32 %v147, %v90
  %v190 = vmul.f32 %v150, %v90
  %v191 = vmul.f32 %v153, %v90
  %v192 = vmul.f32 %v156, %v90
  %v193 = vmul.f32 %v159, %v90
  %v194 = vmul.f32 %v162, %v90
  %v195 = vmul.f32 %v165, %v90
  %v196 = vmul.f32 %v168, %v90
  %v197 = vmul.f32 %v171, %v90
  %v198 = vmul.f32 %v174, %v90
  %v199 = vmul.f32 %v177, %v90
  %v200 = vmul.f32 %v180, %v90
  %v201 = vmul.f32 %v183, %v90
  %v202 = vmul.f32 %v186, %v90
  %v203 = vadd.f32 %v187, 1e-05
  %v204 = vadd.f32 %v188, 1e-05
  %v205 = vadd.f32 %v189, 1e-05
  %v206 = vadd.f32 %v190, 1e-05
  %v207 = vadd.f32 %v191, 1e-05
  %v208 = vadd.f32 %v192, 1e-05
  %v209 = vadd.f32 %v193, 1e-05
  %v210 = vadd.f32 %v194, 1e-05
  %v211 = vadd.f32 %v195, 1e-05
  %v212 = vadd.f32 %v196, 1e-05
  %v213 = vadd.f32 %v197, 1e-05
  %v214 = vadd.f32 %v198, 1e-05
  %v215 = vadd.f32 %v199, 1e-05
  %v216 = vadd.f32 %v200, 1e-05
  %v217 = vadd.f32 %v201, 1e-05
  %v218 = vadd.f32 %v202, 1e-05
  %v219 = vrsqrt.pop %v203
  %v220 = vrsqrt.pop %v204
  %v221 = vrsqrt.pop %v205
  %v222 = vrsqrt.pop %v206
  %v223 = vrsqrt.pop %v207
  %v224 = vrsqrt.pop %v208
  %v225 = vrsqrt.pop %v209
  %v226 = vrsqrt.pop %v210
  %v227 = vrsqrt.pop %v211
  %v228 = vrsqrt.pop %v212
  %v229 = vrsqrt.pop %v213
  %v230 = vrsqrt.pop %v214
  %v231 = vrsqrt.pop %v215
  %v232 = vrsqrt.pop %v216
  %v233 = vrsqrt.pop %v217
  %v234 = vrsqrt.pop %v218
  %v235 = vmul.f32 %v107, %v219
  %v236 = vmul.f32 %v108, %v220
  %v237 = vmul.f32 %v109, %v221
  %v238 = vmul.f32 %v110, %v222
  %v239 = vmul.f32 %v111, %v223
  %v240 = vmul.f32 %v112, %v224
  %v241 = vmul.f32 %v113, %v225
  %v242 = vmul.f32 %v114, %v226
  %v243 = vmul.f32 %v115, %v227
  %v244 = vmul.f32 %v116, %v228
  %v245 = vmul.f32 %v117, %v229
  %v246 = vmul.f32 %v118, %v230
  %v247 = vmul.f32 %v119, %v231
  %v248 = vmul.f32 %v120, %v232
  %v249 = vmul.f32 %v121, %v233
  %v250 = vmul.f32 %v122, %v234
  %v251 = vlaneseq
  %v252 = vshrl.u32 %v251, 7
  %v253 = vsub.s32 0, %v252
  %v254 = vrot.slane %v31, %v253
  %v255 = vmul.f32 %v235, %v254
  %v256 = vmul.f32 %v236, %v254
  %v257 = vmul.f32 %v237, %v254
  %v258 = vmul.f32 %v238, %v254
  %v259 = vmul.f32 %v239, %v254
  %v260 = vmul.f32 %v240, %v254
  %v261 = vmul.f32 %v241, %v254
  %v262 = vmul.f32 %v242, %v254
  %v263 = vmul.f32 %v243, %v254
  %v264 = vmul.f32 %v244, %v254
  %v265 = vmul.f32 %v245, %v254
  %v266 = vmul.f32 %v246, %v254
  %v267 = vmul.f32 %v247, %v254
  %v268 = vmul.f32 %v248, %v254
  %v269 = vmul.f32 %v249, %v254
  %v270 = vmul.f32 %v250, %v254
  %v271 = vlaneseq
  %v272 = vshrl.u32 %v271, 7
  %v273 = vsub.s32 1, %v272
  %v274 = vrot.slane %v31, %v273
  %v275 = vadd.f32 %v255, %v274
  %v276 = vadd.f32 %v256, %v274
  %v277 = vadd.f32 %v257, %v274
  %v278 = vadd.f32 %v258, %v274
  %v279 = vadd.f32 %v259, %v274
  %v280 = vadd.f32 %v260, %v274
  %v281 = vadd.f32 %v261, %v274
  %v282 = vadd.f32 %v262, %v274
  %v283 = vadd.f32 %v263, %v274
  %v284 = vadd.f32 %v264, %v274
  %v285 = vadd.f32 %v265, %v274
  %v286 = vadd.f32 %v266, %v274
  %v287 = vadd.f32 %v267, %v274
  %v288 = vadd.f32 %v268, %v274
  %v289 = vadd.f32 %v269, %v274
  %v290 = vadd.f32 %v270, %v274
  %v291 = vpack.c.bf16 %v276, %v275
  %v292 = vpack.c.bf16 %v278, %v277
  %v293 = vpack.c.bf16 %v280, %v279
  %v294 = vpack.c.bf16 %v282, %v281
  %v295 = vpack.c.bf16 %v284, %v283
  %v296 = vpack.c.bf16 %v286, %v285
  %v297 = vpack.c.bf16 %v288, %v287
  %v298 = vpack.c.bf16 %v290, %v289
  %v303 = vunpack.c.l.b16 %v33
  %v304 = vunpack.c.l.b16 %v34
  %v305 = vunpack.c.l.b16 %v35
  %v306 = vunpack.c.l.b16 %v36
  %v307 = vpack.c.b16 %v304, %v303
  %v308 = vpack.c.b16 %v306, %v305
  %v312 = vsel %vm41, %v291, 0
  %v315 = vsel %vm41, %v292, 0
  %v318 = vsel %vm41, %v293, 0
  %v321 = vsel %vm41, %v294, 0
  %v324 = vsel %vm41, %v295, 0
  %v327 = vsel %vm41, %v296, 0
  %v330 = vsel %vm41, %v297, 0
  %v333 = vsel %vm41, %v298, 0
  %335 = vmatprep.subr.bf16.mxu0 0
  %336 = vmatpush1.bf16.msra.mxu0 0
  %337 = vmatprep.subr.bf16.mxu0 0
  %338 = vmatpush1.bf16.msra.mxu0 0
  %339 = vmatprep.subr.bf16.mxu0 0
  %340 = vmatpush1.bf16.msra.mxu0 0
  %341 = vmatprep.subr.bf16.mxu0 0
  %342 = vmatpush1.bf16.msra.mxu0 0
  %343 = vmatprep.subr.bf16.mxu0 0
  %344 = vmatpush1.bf16.msra.mxu0 0
  %345 = vmatprep.subr.bf16.mxu0 0
  %346 = vmatpush1.bf16.msra.mxu0 0
  %347 = vmatprep.subr.bf16.mxu0 0
  %348 = vmatpush1.bf16.msra.mxu0 %v308
  %349 = vmatprep.subr.bf16.mxu0 0
  %350 = vmatpush1.bf16.msra.mxu0 %v307
  %351 = vmatprep.subr.bf16.mxu0 0
  %352 = vmatpush2.bf16.msra.mxu0 0
  %353 = vmatprep.subr.bf16.mxu0 0
  %354 = vmatpush2.bf16.msra.mxu0 0
  %355 = vmatprep.subr.bf16.mxu0 0
  %356 = vmatpush2.bf16.msra.mxu0 0
  %357 = vmatprep.subr.bf16.mxu0 0
  %358 = vmatpush2.bf16.msra.mxu0 0
  %359 = vmatprep.subr.bf16.mxu0 0
  %360 = vmatpush2.bf16.msra.mxu0 0
  %361 = vmatprep.subr.bf16.mxu0 0
  %362 = vmatpush2.bf16.msra.mxu0 0
  %363 = vmatprep.subr.bf16.mxu0 0
  %364 = vmatpush2.bf16.msra.mxu0 0
  %365 = vmatprep.subr.bf16.mxu0 0
  %366 = vmatpush2.bf16.msra.mxu0 0
  %367 = vmatprep.mubr.bf16.mxu0 0
  %368 = vmatmul.mubr.bf16.gmra.mxu0 %v312
  %v369 = vpop.f32.mrf.mxu0
  %v370 = vadd.f32 0.0, %v369
  %v371 = vpop.f32.mrf.mxu0
  %v372 = vpop.f32.mrf.mxu0
  %v373 = vadd.f32 0.0, %v372
  %v374 = vpop.f32.mrf.mxu0
  %375 = vmatprep.mubr.bf16.mxu0 0
  %376 = vmatmul.mubr.bf16.gmra.mxu0 %v315
  %v377 = vpop.f32.mrf.mxu0
  %v378 = vadd.f32 0.0, %v377
  %v379 = vpop.f32.mrf.mxu0
  %v380 = vpop.f32.mrf.mxu0
  %v381 = vadd.f32 0.0, %v380
  %v382 = vpop.f32.mrf.mxu0
  %383 = vmatprep.mubr.bf16.mxu0 0
  %384 = vmatmul.mubr.bf16.gmra.mxu0 %v318
  %v385 = vpop.f32.mrf.mxu0
  %v386 = vadd.f32 0.0, %v385
  %v387 = vpop.f32.mrf.mxu0
  %v388 = vpop.f32.mrf.mxu0
  %v389 = vadd.f32 0.0, %v388
  %v390 = vpop.f32.mrf.mxu0
  %391 = vmatprep.mubr.bf16.mxu0 0
  %392 = vmatmul.mubr.bf16.gmra.mxu0 %v321
  %v393 = vpop.f32.mrf.mxu0
  %v394 = vadd.f32 0.0, %v393
  %v395 = vpop.f32.mrf.mxu0
  %v396 = vpop.f32.mrf.mxu0
  %v397 = vadd.f32 0.0, %v396
  %v398 = vpop.f32.mrf.mxu0
  %399 = vmatprep.mubr.bf16.mxu0 0
  %400 = vmatmul.mubr.bf16.gmra.mxu0 %v324
  %v401 = vpop.f32.mrf.mxu0
  %v402 = vadd.f32 0.0, %v401
  %v403 = vpop.f32.mrf.mxu0
  %v404 = vpop.f32.mrf.mxu0
  %v405 = vadd.f32 0.0, %v404
  %v406 = vpop.f32.mrf.mxu0
  %407 = vmatprep.mubr.bf16.mxu0 0
  %408 = vmatmul.mubr.bf16.gmra.mxu0 %v327
  %v409 = vpop.f32.mrf.mxu0
  %v410 = vadd.f32 0.0, %v409
  %v411 = vpop.f32.mrf.mxu0
  %v412 = vpop.f32.mrf.mxu0
  %v413 = vadd.f32 0.0, %v412
  %v414 = vpop.f32.mrf.mxu0
  %415 = vmatprep.mubr.bf16.mxu0 0
  %416 = vmatmul.mubr.bf16.gmra.mxu0 %v330
  %v417 = vpop.f32.mrf.mxu0
  %v418 = vadd.f32 0.0, %v417
  %v419 = vpop.f32.mrf.mxu0
  %v420 = vpop.f32.mrf.mxu0
  %v421 = vadd.f32 0.0, %v420
  %v422 = vpop.f32.mrf.mxu0
  %423 = vmatprep.mubr.bf16.mxu0 0
  %424 = vmatmul.mubr.bf16.gmra.mxu0 %v333
  %v425 = vpop.f32.mrf.mxu0
  %v426 = vadd.f32 0.0, %v425
  %v427 = vpop.f32.mrf.mxu0
  %v428 = vpop.f32.mrf.mxu0
  %v429 = vadd.f32 0.0, %v428
  %v430 = vpop.f32.mrf.mxu0
  %431 = vdwg.mxu0
  %v432 = vlaneseq
  %v433 = vshrl.u32 %v432, 7
  %v434 = vsub.s32 2, %v433
  %v435 = vrot.slane %v31, %v434
  %v436 = vadd.f32 %v370, %v435
  %v437 = vadd.f32 %v373, %v435
  %v438 = vadd.f32 %v378, %v435
  %v439 = vadd.f32 %v381, %v435
  %v440 = vadd.f32 %v386, %v435
  %v441 = vadd.f32 %v389, %v435
  %v442 = vadd.f32 %v394, %v435
  %v443 = vadd.f32 %v397, %v435
  %v444 = vadd.f32 %v402, %v435
  %v445 = vadd.f32 %v405, %v435
  %v446 = vadd.f32 %v410, %v435
  %v447 = vadd.f32 %v413, %v435
  %v448 = vadd.f32 %v418, %v435
  %v449 = vadd.f32 %v421, %v435
  %v450 = vadd.f32 %v426, %v435
  %v451 = vadd.f32 %v429, %v435
  %v452 = vpack.c.bf16 %v437, %v436
  %v453 = vpack.c.bf16 %v439, %v438
  %v454 = vpack.c.bf16 %v441, %v440
  %v455 = vpack.c.bf16 %v443, %v442
  %v456 = vpack.c.bf16 %v445, %v444
  %v457 = vpack.c.bf16 %v447, %v446
  %v458 = vpack.c.bf16 %v449, %v448
  %v459 = vpack.c.bf16 %v451, %v450
  %v460 = vlaneseq
  %v461 = vshrl.u32 %v460, 7
  %v462 = vsub.s32 3, %v461
  %v463 = vrot.slane %v31, %v462
  %465 = vrot.lane.b32.xlu0 %v463, 32
  %v466 = vpop.permute.xlu0 %465
  %v468 = vadd.f32 %v370, %v466
  %v469 = vadd.f32 %v373, %v466
  %v470 = vadd.f32 %v378, %v466
  %v471 = vadd.f32 %v381, %v466
  %v472 = vadd.f32 %v386, %v466
  %v473 = vadd.f32 %v389, %v466
  %v474 = vadd.f32 %v394, %v466
  %v475 = vadd.f32 %v397, %v466
  %v476 = vadd.f32 %v402, %v466
  %v477 = vadd.f32 %v405, %v466
  %v478 = vadd.f32 %v410, %v466
  %v479 = vadd.f32 %v413, %v466
  %v480 = vadd.f32 %v418, %v466
  %v481 = vadd.f32 %v421, %v466
  %v482 = vadd.f32 %v426, %v466
  %v483 = vadd.f32 %v429, %v466
  %v484 = vpack.c.bf16 %v469, %v468
  %v485 = vpack.c.bf16 %v471, %v470
  %v486 = vpack.c.bf16 %v473, %v472
  %v487 = vpack.c.bf16 %v475, %v474
  %v488 = vpack.c.bf16 %v477, %v476
  %v489 = vpack.c.bf16 %v479, %v478
  %v490 = vpack.c.bf16 %v481, %v480
  %v491 = vpack.c.bf16 %v483, %v482
  %v492 = vlaneseq
  %v493 = vshrl.u32 %v492, 7
  %v494 = vsub.s32 4, %v493
  %v495 = vrot.slane %v31, %v494
  %497 = vrot.lane.b32.xlu0 %v495, 64
  %v498 = vpop.permute.xlu0 %497
  %v500 = vadd.f32 %v370, %v498
  %v501 = vadd.f32 %v373, %v498
  %v502 = vadd.f32 %v378, %v498
  %v503 = vadd.f32 %v381, %v498
  %v504 = vadd.f32 %v386, %v498
  %v505 = vadd.f32 %v389, %v498
  %v506 = vadd.f32 %v394, %v498
  %v507 = vadd.f32 %v397, %v498
  %v508 = vadd.f32 %v402, %v498
  %v509 = vadd.f32 %v405, %v498
  %v510 = vadd.f32 %v410, %v498
  %v511 = vadd.f32 %v413, %v498
  %v512 = vadd.f32 %v418, %v498
  %v513 = vadd.f32 %v421, %v498
  %v514 = vadd.f32 %v426, %v498
  %v515 = vadd.f32 %v429, %v498
  %v516 = vpack.c.bf16 %v501, %v500
  %v517 = vpack.c.bf16 %v503, %v502
  %v518 = vpack.c.bf16 %v505, %v504
  %v519 = vpack.c.bf16 %v507, %v506
  %v520 = vpack.c.bf16 %v509, %v508
  %v521 = vpack.c.bf16 %v511, %v510
  %v522 = vpack.c.bf16 %v513, %v512
  %v523 = vpack.c.bf16 %v515, %v514
  %532 = vrot.lane.b32.xlu0 %v452, 120
  %v533 = vpop.permute.xlu0 %532
  %534 = vrot.lane.b32.xlu0 %v453, 120
  %v535 = vpop.permute.xlu0 %534
  %536 = vrot.lane.b32.xlu0 %v454, 120
  %v537 = vpop.permute.xlu0 %536
  %538 = vrot.lane.b32.xlu0 %v455, 120
  %v539 = vpop.permute.xlu0 %538
  %540 = vrot.lane.b32.xlu0 %v456, 120
  %v541 = vpop.permute.xlu0 %540
  %542 = vrot.lane.b32.xlu0 %v457, 120
  %v543 = vpop.permute.xlu0 %542
  %544 = vrot.lane.b32.xlu0 %v458, 120
  %v545 = vpop.permute.xlu0 %544
  %546 = vrot.lane.b32.xlu0 %v459, 120
  %v547 = vpop.permute.xlu0 %546
  %548 = vrot.lane.b32.xlu0 %v452, 112
  %v549 = vpop.permute.xlu0 %548
  %550 = vrot.lane.b32.xlu0 %v453, 112
  %v551 = vpop.permute.xlu0 %550
  %552 = vrot.lane.b32.xlu0 %v454, 112
  %v553 = vpop.permute.xlu0 %552
  %554 = vrot.lane.b32.xlu0 %v455, 112
  %v555 = vpop.permute.xlu0 %554
  %556 = vrot.lane.b32.xlu0 %v456, 112
  %v557 = vpop.permute.xlu0 %556
  %558 = vrot.lane.b32.xlu0 %v457, 112
  %v559 = vpop.permute.xlu0 %558
  %560 = vrot.lane.b32.xlu0 %v458, 112
  %v561 = vpop.permute.xlu0 %560
  %562 = vrot.lane.b32.xlu0 %v459, 112
  %v563 = vpop.permute.xlu0 %562
  %564 = vrot.lane.b32.xlu0 %v452, 104
  %v565 = vpop.permute.xlu0 %564
  %566 = vrot.lane.b32.xlu0 %v453, 104
  %v567 = vpop.permute.xlu0 %566
  %568 = vrot.lane.b32.xlu0 %v454, 104
  %v569 = vpop.permute.xlu0 %568
  %570 = vrot.lane.b32.xlu0 %v455, 104
  %v571 = vpop.permute.xlu0 %570
  %572 = vrot.lane.b32.xlu0 %v456, 104
  %v573 = vpop.permute.xlu0 %572
  %574 = vrot.lane.b32.xlu0 %v457, 104
  %v575 = vpop.permute.xlu0 %574
  %576 = vrot.lane.b32.xlu0 %v458, 104
  %v577 = vpop.permute.xlu0 %576
  %578 = vrot.lane.b32.xlu0 %v459, 104
  %v579 = vpop.permute.xlu0 %578
  %588 = vrot.lane.b32.xlu0 %v484, 120
  %v589 = vpop.permute.xlu0 %588
  %590 = vrot.lane.b32.xlu0 %v485, 120
  %v591 = vpop.permute.xlu0 %590
  %592 = vrot.lane.b32.xlu0 %v486, 120
  %v593 = vpop.permute.xlu0 %592
  %594 = vrot.lane.b32.xlu0 %v487, 120
  %v595 = vpop.permute.xlu0 %594
  %596 = vrot.lane.b32.xlu0 %v488, 120
  %v597 = vpop.permute.xlu0 %596
  %598 = vrot.lane.b32.xlu0 %v489, 120
  %v599 = vpop.permute.xlu0 %598
  %600 = vrot.lane.b32.xlu0 %v490, 120
  %v601 = vpop.permute.xlu0 %600
  %602 = vrot.lane.b32.xlu0 %v491, 120
  %v603 = vpop.permute.xlu0 %602
  %604 = vrot.lane.b32.xlu0 %v484, 112
  %v605 = vpop.permute.xlu0 %604
  %606 = vrot.lane.b32.xlu0 %v485, 112
  %v607 = vpop.permute.xlu0 %606
  %608 = vrot.lane.b32.xlu0 %v486, 112
  %v609 = vpop.permute.xlu0 %608
  %610 = vrot.lane.b32.xlu0 %v487, 112
  %v611 = vpop.permute.xlu0 %610
  %612 = vrot.lane.b32.xlu0 %v488, 112
  %v613 = vpop.permute.xlu0 %612
  %614 = vrot.lane.b32.xlu0 %v489, 112
  %v615 = vpop.permute.xlu0 %614
  %616 = vrot.lane.b32.xlu0 %v490, 112
  %v617 = vpop.permute.xlu0 %616
  %618 = vrot.lane.b32.xlu0 %v491, 112
  %v619 = vpop.permute.xlu0 %618
  %620 = vrot.lane.b32.xlu0 %v484, 104
  %v621 = vpop.permute.xlu0 %620
  %622 = vrot.lane.b32.xlu0 %v485, 104
  %v623 = vpop.permute.xlu0 %622
  %624 = vrot.lane.b32.xlu0 %v486, 104
  %v625 = vpop.permute.xlu0 %624
  %626 = vrot.lane.b32.xlu0 %v487, 104
  %v627 = vpop.permute.xlu0 %626
  %628 = vrot.lane.b32.xlu0 %v488, 104
  %v629 = vpop.permute.xlu0 %628
  %630 = vrot.lane.b32.xlu0 %v489, 104
  %v631 = vpop.permute.xlu0 %630
  %632 = vrot.lane.b32.xlu0 %v490, 104
  %v633 = vpop.permute.xlu0 %632
  %634 = vrot.lane.b32.xlu0 %v491, 104
  %v635 = vpop.permute.xlu0 %634
  %644 = vrot.lane.b32.xlu0 %v516, 120
  %v645 = vpop.permute.xlu0 %644
  %646 = vrot.lane.b32.xlu0 %v517, 120
  %v647 = vpop.permute.xlu0 %646
  %648 = vrot.lane.b32.xlu0 %v518, 120
  %v649 = vpop.permute.xlu0 %648
  %650 = vrot.lane.b32.xlu0 %v519, 120
  %v651 = vpop.permute.xlu0 %650
  %652 = vrot.lane.b32.xlu0 %v520, 120
  %v653 = vpop.permute.xlu0 %652
  %654 = vrot.lane.b32.xlu0 %v521, 120
  %v655 = vpop.permute.xlu0 %654
  %656 = vrot.lane.b32.xlu0 %v522, 120
  %v657 = vpop.permute.xlu0 %656
  %658 = vrot.lane.b32.xlu0 %v523, 120
  %v659 = vpop.permute.xlu0 %658
  %660 = vrot.lane.b32.xlu0 %v516, 112
  %v661 = vpop.permute.xlu0 %660
  %662 = vrot.lane.b32.xlu0 %v517, 112
  %v663 = vpop.permute.xlu0 %662
  %664 = vrot.lane.b32.xlu0 %v518, 112
  %v665 = vpop.permute.xlu0 %664
  %666 = vrot.lane.b32.xlu0 %v519, 112
  %v667 = vpop.permute.xlu0 %666
  %668 = vrot.lane.b32.xlu0 %v520, 112
  %v669 = vpop.permute.xlu0 %668
  %670 = vrot.lane.b32.xlu0 %v521, 112
  %v671 = vpop.permute.xlu0 %670
  %672 = vrot.lane.b32.xlu0 %v522, 112
  %v673 = vpop.permute.xlu0 %672
  %674 = vrot.lane.b32.xlu0 %v523, 112
  %v675 = vpop.permute.xlu0 %674
  %676 = vrot.lane.b32.xlu0 %v516, 104
  %v677 = vpop.permute.xlu0 %676
  %678 = vrot.lane.b32.xlu0 %v517, 104
  %v679 = vpop.permute.xlu0 %678
  %680 = vrot.lane.b32.xlu0 %v518, 104
  %v681 = vpop.permute.xlu0 %680
  %682 = vrot.lane.b32.xlu0 %v519, 104
  %v683 = vpop.permute.xlu0 %682
  %684 = vrot.lane.b32.xlu0 %v520, 104
  %v685 = vpop.permute.xlu0 %684
  %686 = vrot.lane.b32.xlu0 %v521, 104
  %v687 = vpop.permute.xlu0 %686
  %688 = vrot.lane.b32.xlu0 %v522, 104
  %v689 = vpop.permute.xlu0 %688
  %690 = vrot.lane.b32.xlu0 %v523, 104
  %v691 = vpop.permute.xlu0 %690
  %692 = vrot.lane.b32.xlu0 %v484, 96
  %v693 = vpop.permute.xlu0 %692
  %694 = vrot.lane.b32.xlu0 %v485, 96
  %v695 = vpop.permute.xlu0 %694
  %696 = vrot.lane.b32.xlu0 %v486, 96
  %v697 = vpop.permute.xlu0 %696
  %698 = vrot.lane.b32.xlu0 %v487, 96
  %v699 = vpop.permute.xlu0 %698
  %vm700 = vcmask 64512
  %v702 = vsel %vm700, %v452, 0
  %v705 = vsel %vm700, %v453, 0
  %v708 = vsel %vm700, %v454, 0
  %v711 = vsel %vm700, %v455, 0
  %v714 = vsel %vm700, %v693, 0
  %v717 = vsel %vm700, %v695, 0
  %v720 = vsel %vm700, %v697, 0
  %v723 = vsel %vm700, %v699, 0
  %725 = vmatprep.subr.bf16.mxu0 0
  %726 = vmatpush1.bf16.xpose.msra.mxu0 0
  %727 = vmatprep.subr.bf16.mxu0 0
  %728 = vmatpush1.bf16.xpose.msra.mxu0 0
  %729 = vmatprep.subr.bf16.mxu0 0
  %730 = vmatpush1.bf16.xpose.msra.mxu0 0
  %731 = vmatprep.subr.bf16.mxu0 0
  %732 = vmatpush1.bf16.xpose.msra.mxu0 0
  %733 = vmatprep.subr.bf16.mxu0 0
  %734 = vmatpush1.bf16.xpose.msra.mxu0 %v723
  %735 = vmatprep.subr.bf16.mxu0 0
  %736 = vmatpush1.bf16.xpose.msra.mxu0 %v720
  %737 = vmatprep.subr.bf16.mxu0 0
  %738 = vmatpush1.bf16.xpose.msra.mxu0 %v717
  %739 = vmatprep.subr.bf16.mxu0 0
  %740 = vmatpush1.bf16.xpose.msra.mxu0 %v714
  %741 = vmatprep.subr.bf16.mxu0 0
  %742 = vmatpush2.bf16.xpose.msra.mxu0 0
  %743 = vmatprep.subr.bf16.mxu0 0
  %744 = vmatpush2.bf16.xpose.msra.mxu0 0
  %745 = vmatprep.subr.bf16.mxu0 0
  %746 = vmatpush2.bf16.xpose.msra.mxu0 0
  %747 = vmatprep.subr.bf16.mxu0 0
  %748 = vmatpush2.bf16.xpose.msra.mxu0 0
  %749 = vmatprep.subr.bf16.mxu0 0
  %750 = vmatpush2.bf16.xpose.msra.mxu0 0
  %751 = vmatprep.subr.bf16.mxu0 0
  %752 = vmatpush2.bf16.xpose.msra.mxu0 0
  %753 = vmatprep.subr.bf16.mxu0 0
  %754 = vmatpush2.bf16.xpose.msra.mxu0 0
  %755 = vmatprep.subr.bf16.mxu0 0
  %756 = vmatpush2.bf16.xpose.msra.mxu0 0
  %757 = vmatprep.mubr.bf16.mxu0 0
  %758 = vmatmul.mubr.bf16.gmra.mxu0 %v702
  %v759 = vpop.f32.mrf.mxu0
  %v760 = vadd.f32 0.0, %v759
  %v761 = vpop.f32.mrf.mxu0
  %v762 = vpop.f32.mrf.mxu0
  %v763 = vadd.f32 0.0, %v762
  %v764 = vpop.f32.mrf.mxu0
  %765 = vmatprep.mubr.bf16.mxu0 0
  %766 = vmatmul.mubr.bf16.gmra.mxu0 %v705
  %v767 = vpop.f32.mrf.mxu0
  %v768 = vadd.f32 0.0, %v767
  %v769 = vpop.f32.mrf.mxu0
  %v770 = vpop.f32.mrf.mxu0
  %v771 = vadd.f32 0.0, %v770
  %v772 = vpop.f32.mrf.mxu0
  %773 = vmatprep.mubr.bf16.mxu0 0
  %774 = vmatmul.mubr.bf16.gmra.mxu0 %v708
  %v775 = vpop.f32.mrf.mxu0
  %v776 = vadd.f32 0.0, %v775
  %v777 = vpop.f32.mrf.mxu0
  %v778 = vpop.f32.mrf.mxu0
  %v779 = vadd.f32 0.0, %v778
  %v780 = vpop.f32.mrf.mxu0
  %781 = vmatprep.mubr.bf16.mxu0 0
  %782 = vmatmul.mubr.bf16.gmra.mxu0 %v711
  %v783 = vpop.f32.mrf.mxu0
  %v784 = vadd.f32 0.0, %v783
  %v785 = vpop.f32.mrf.mxu0
  %v786 = vpop.f32.mrf.mxu0
  %v787 = vadd.f32 0.0, %v786
  %v788 = vpop.f32.mrf.mxu0
  %789 = vdwg.mxu0
  %790 = vrot.lane.b32.xlu0 %v488, 96
  %v791 = vpop.permute.xlu0 %790
  %792 = vrot.lane.b32.xlu0 %v489, 96
  %v793 = vpop.permute.xlu0 %792
  %794 = vrot.lane.b32.xlu0 %v490, 96
  %v795 = vpop.permute.xlu0 %794
  %796 = vrot.lane.b32.xlu0 %v491, 96
  %v797 = vpop.permute.xlu0 %796
  %v799 = vsel %vm700, %v456, 0
  %v802 = vsel %vm700, %v457, 0
  %v805 = vsel %vm700, %v458, 0
  %v808 = vsel %vm700, %v459, 0
  %v811 = vsel %vm700, %v791, 0
  %v814 = vsel %vm700, %v793, 0
  %v817 = vsel %vm700, %v795, 0
  %v820 = vsel %vm700, %v797, 0
  %822 = vmatprep.subr.bf16.mxu0 0
  %823 = vmatpush1.bf16.xpose.msra.mxu0 0
  %824 = vmatprep.subr.bf16.mxu0 0
  %825 = vmatpush1.bf16.xpose.msra.mxu0 0
  %826 = vmatprep.subr.bf16.mxu0 0
  %827 = vmatpush1.bf16.xpose.msra.mxu0 0
  %828 = vmatprep.subr.bf16.mxu0 0
  %829 = vmatpush1.bf16.xpose.msra.mxu0 0
  %830 = vmatprep.subr.bf16.mxu0 0
  %831 = vmatpush1.bf16.xpose.msra.mxu0 %v820
  %832 = vmatprep.subr.bf16.mxu0 0
  %833 = vmatpush1.bf16.xpose.msra.mxu0 %v817
  %834 = vmatprep.subr.bf16.mxu0 0
  %835 = vmatpush1.bf16.xpose.msra.mxu0 %v814
  %836 = vmatprep.subr.bf16.mxu0 0
  %837 = vmatpush1.bf16.xpose.msra.mxu0 %v811
  %838 = vmatprep.subr.bf16.mxu0 0
  %839 = vmatpush2.bf16.xpose.msra.mxu0 0
  %840 = vmatprep.subr.bf16.mxu0 0
  %841 = vmatpush2.bf16.xpose.msra.mxu0 0
  %842 = vmatprep.subr.bf16.mxu0 0
  %843 = vmatpush2.bf16.xpose.msra.mxu0 0
  %844 = vmatprep.subr.bf16.mxu0 0
  %845 = vmatpush2.bf16.xpose.msra.mxu0 0
  %846 = vmatprep.subr.bf16.mxu0 0
  %847 = vmatpush2.bf16.xpose.msra.mxu0 0
  %848 = vmatprep.subr.bf16.mxu0 0
  %849 = vmatpush2.bf16.xpose.msra.mxu0 0
  %850 = vmatprep.subr.bf16.mxu0 0
  %851 = vmatpush2.bf16.xpose.msra.mxu0 0
  %852 = vmatprep.subr.bf16.mxu0 0
  %853 = vmatpush2.bf16.xpose.msra.mxu0 0
  %854 = vmatprep.mubr.bf16.mxu0 0
  %855 = vmatmul.mubr.bf16.gmra.mxu0 %v799
  %v856 = vpop.f32.mrf.mxu0
  %v857 = vadd.f32 0.0, %v856
  %v858 = vpop.f32.mrf.mxu0
  %v859 = vpop.f32.mrf.mxu0
  %v860 = vadd.f32 0.0, %v859
  %v861 = vpop.f32.mrf.mxu0
  %862 = vmatprep.mubr.bf16.mxu0 0
  %863 = vmatmul.mubr.bf16.gmra.mxu0 %v802
  %v864 = vpop.f32.mrf.mxu0
  %v865 = vadd.f32 0.0, %v864
  %v866 = vpop.f32.mrf.mxu0
  %v867 = vpop.f32.mrf.mxu0
  %v868 = vadd.f32 0.0, %v867
  %v869 = vpop.f32.mrf.mxu0
  %870 = vmatprep.mubr.bf16.mxu0 0
  %871 = vmatmul.mubr.bf16.gmra.mxu0 %v805
  %v872 = vpop.f32.mrf.mxu0
  %v873 = vadd.f32 0.0, %v872
  %v874 = vpop.f32.mrf.mxu0
  %v875 = vpop.f32.mrf.mxu0
  %v876 = vadd.f32 0.0, %v875
  %v877 = vpop.f32.mrf.mxu0
  %878 = vmatprep.mubr.bf16.mxu0 0
  %879 = vmatmul.mubr.bf16.gmra.mxu0 %v808
  %v880 = vpop.f32.mrf.mxu0
  %v881 = vadd.f32 0.0, %v880
  %v882 = vpop.f32.mrf.mxu0
  %v883 = vpop.f32.mrf.mxu0
  %v884 = vadd.f32 0.0, %v883
  %v885 = vpop.f32.mrf.mxu0
  %886 = vdwg.mxu0
  %887 = vrot.lane.b32.xlu0 %v589, 96
  %v888 = vpop.permute.xlu0 %887
  %889 = vrot.lane.b32.xlu0 %v591, 96
  %v890 = vpop.permute.xlu0 %889
  %891 = vrot.lane.b32.xlu0 %v593, 96
  %v892 = vpop.permute.xlu0 %891
  %893 = vrot.lane.b32.xlu0 %v595, 96
  %v894 = vpop.permute.xlu0 %893
  %v896 = vsel %vm700, %v533, 0
  %v899 = vsel %vm700, %v535, 0
  %v902 = vsel %vm700, %v537, 0
  %v905 = vsel %vm700, %v539, 0
  %v908 = vsel %vm700, %v888, 0
  %v911 = vsel %vm700, %v890, 0
  %v914 = vsel %vm700, %v892, 0
  %v917 = vsel %vm700, %v894, 0
  %919 = vmatprep.subr.bf16.mxu0 0
  %920 = vmatpush1.bf16.xpose.msra.mxu0 0
  %921 = vmatprep.subr.bf16.mxu0 0
  %922 = vmatpush1.bf16.xpose.msra.mxu0 0
  %923 = vmatprep.subr.bf16.mxu0 0
  %924 = vmatpush1.bf16.xpose.msra.mxu0 0
  %925 = vmatprep.subr.bf16.mxu0 0
  %926 = vmatpush1.bf16.xpose.msra.mxu0 0
  %927 = vmatprep.subr.bf16.mxu0 0
  %928 = vmatpush1.bf16.xpose.msra.mxu0 %v917
  %929 = vmatprep.subr.bf16.mxu0 0
  %930 = vmatpush1.bf16.xpose.msra.mxu0 %v914
  %931 = vmatprep.subr.bf16.mxu0 0
  %932 = vmatpush1.bf16.xpose.msra.mxu0 %v911
  %933 = vmatprep.subr.bf16.mxu0 0
  %934 = vmatpush1.bf16.xpose.msra.mxu0 %v908
  %935 = vmatprep.subr.bf16.mxu0 0
  %936 = vmatpush2.bf16.xpose.msra.mxu0 0
  %937 = vmatprep.subr.bf16.mxu0 0
  %938 = vmatpush2.bf16.xpose.msra.mxu0 0
  %939 = vmatprep.subr.bf16.mxu0 0
  %940 = vmatpush2.bf16.xpose.msra.mxu0 0
  %941 = vmatprep.subr.bf16.mxu0 0
  %942 = vmatpush2.bf16.xpose.msra.mxu0 0
  %943 = vmatprep.subr.bf16.mxu0 0
  %944 = vmatpush2.bf16.xpose.msra.mxu0 0
  %945 = vmatprep.subr.bf16.mxu0 0
  %946 = vmatpush2.bf16.xpose.msra.mxu0 0
  %947 = vmatprep.subr.bf16.mxu0 0
  %948 = vmatpush2.bf16.xpose.msra.mxu0 0
  %949 = vmatprep.subr.bf16.mxu0 0
  %950 = vmatpush2.bf16.xpose.msra.mxu0 0
  %951 = vmatprep.mubr.bf16.mxu0 0
  %952 = vmatmul.mubr.bf16.gmra.mxu0 %v896
  %v953 = vpop.f32.mrf.mxu0
  %v954 = vadd.f32 0.0, %v953
  %v955 = vpop.f32.mrf.mxu0
  %v956 = vpop.f32.mrf.mxu0
  %v957 = vadd.f32 0.0, %v956
  %v958 = vpop.f32.mrf.mxu0
  %959 = vmatprep.mubr.bf16.mxu0 0
  %960 = vmatmul.mubr.bf16.gmra.mxu0 %v899
  %v961 = vpop.f32.mrf.mxu0
  %v962 = vadd.f32 0.0, %v961
  %v963 = vpop.f32.mrf.mxu0
  %v964 = vpop.f32.mrf.mxu0
  %v965 = vadd.f32 0.0, %v964
  %v966 = vpop.f32.mrf.mxu0
  %967 = vmatprep.mubr.bf16.mxu0 0
  %968 = vmatmul.mubr.bf16.gmra.mxu0 %v902
  %v969 = vpop.f32.mrf.mxu0
  %v970 = vadd.f32 0.0, %v969
  %v971 = vpop.f32.mrf.mxu0
  %v972 = vpop.f32.mrf.mxu0
  %v973 = vadd.f32 0.0, %v972
  %v974 = vpop.f32.mrf.mxu0
  %975 = vmatprep.mubr.bf16.mxu0 0
  %976 = vmatmul.mubr.bf16.gmra.mxu0 %v905
  %v977 = vpop.f32.mrf.mxu0
  %v978 = vadd.f32 0.0, %v977
  %v979 = vpop.f32.mrf.mxu0
  %v980 = vpop.f32.mrf.mxu0
  %v981 = vadd.f32 0.0, %v980
  %v982 = vpop.f32.mrf.mxu0
  %983 = vdwg.mxu0
  %984 = vrot.lane.b32.xlu0 %v597, 96
  %v985 = vpop.permute.xlu0 %984
  %986 = vrot.lane.b32.xlu0 %v599, 96
  %v987 = vpop.permute.xlu0 %986
  %988 = vrot.lane.b32.xlu0 %v601, 96
  %v989 = vpop.permute.xlu0 %988
  %990 = vrot.lane.b32.xlu0 %v603, 96
  %v991 = vpop.permute.xlu0 %990
  %v993 = vsel %vm700, %v541, 0
  %v996 = vsel %vm700, %v543, 0
  %v999 = vsel %vm700, %v545, 0
  %v1002 = vsel %vm700, %v547, 0
  %v1005 = vsel %vm700, %v985, 0
  %v1008 = vsel %vm700, %v987, 0
  %v1011 = vsel %vm700, %v989, 0
  %v1014 = vsel %vm700, %v991, 0
  %1016 = vmatprep.subr.bf16.mxu0 0
  %1017 = vmatpush1.bf16.xpose.msra.mxu0 0
  %1018 = vmatprep.subr.bf16.mxu0 0
  %1019 = vmatpush1.bf16.xpose.msra.mxu0 0
  %1020 = vmatprep.subr.bf16.mxu0 0
  %1021 = vmatpush1.bf16.xpose.msra.mxu0 0
  %1022 = vmatprep.subr.bf16.mxu0 0
  %1023 = vmatpush1.bf16.xpose.msra.mxu0 0
  %1024 = vmatprep.subr.bf16.mxu0 0
  %1025 = vmatpush1.bf16.xpose.msra.mxu0 %v1014
  %1026 = vmatprep.subr.bf16.mxu0 0
  %1027 = vmatpush1.bf16.xpose.msra.mxu0 %v1011
  %1028 = vmatprep.subr.bf16.mxu0 0
  %1029 = vmatpush1.bf16.xpose.msra.mxu0 %v1008
  %1030 = vmatprep.subr.bf16.mxu0 0
  %1031 = vmatpush1.bf16.xpose.msra.mxu0 %v1005
  %1032 = vmatprep.subr.bf16.mxu0 0
  %1033 = vmatpush2.bf16.xpose.msra.mxu0 0
  %1034 = vmatprep.subr.bf16.mxu0 0
  %1035 = vmatpush2.bf16.xpose.msra.mxu0 0
  %1036 = vmatprep.subr.bf16.mxu0 0
  %1037 = vmatpush2.bf16.xpose.msra.mxu0 0
  %1038 = vmatprep.subr.bf16.mxu0 0
  %1039 = vmatpush2.bf16.xpose.msra.mxu0 0
  %1040 = vmatprep.subr.bf16.mxu0 0
  %1041 = vmatpush2.bf16.xpose.msra.mxu0 0
  %1042 = vmatprep.subr.bf16.mxu0 0
  %1043 = vmatpush2.bf16.xpose.msra.mxu0 0
  %1044 = vmatprep.subr.bf16.mxu0 0
  %1045 = vmatpush2.bf16.xpose.msra.mxu0 0
  %1046 = vmatprep.subr.bf16.mxu0 0
  %1047 = vmatpush2.bf16.xpose.msra.mxu0 0
  %1048 = vmatprep.mubr.bf16.mxu0 0
  %1049 = vmatmul.mubr.bf16.gmra.mxu0 %v993
  %v1050 = vpop.f32.mrf.mxu0
  %v1051 = vadd.f32 0.0, %v1050
  %v1052 = vpop.f32.mrf.mxu0
  %v1053 = vpop.f32.mrf.mxu0
  %v1054 = vadd.f32 0.0, %v1053
  %v1055 = vpop.f32.mrf.mxu0
  %1056 = vmatprep.mubr.bf16.mxu0 0
  %1057 = vmatmul.mubr.bf16.gmra.mxu0 %v996
  %v1058 = vpop.f32.mrf.mxu0
  %v1059 = vadd.f32 0.0, %v1058
  %v1060 = vpop.f32.mrf.mxu0
  %v1061 = vpop.f32.mrf.mxu0
  %v1062 = vadd.f32 0.0, %v1061
  %v1063 = vpop.f32.mrf.mxu0
  %1064 = vmatprep.mubr.bf16.mxu0 0
  %1065 = vmatmul.mubr.bf16.gmra.mxu0 %v999
  %v1066 = vpop.f32.mrf.mxu0
  %v1067 = vadd.f32 0.0, %v1066
  %v1068 = vpop.f32.mrf.mxu0
  %v1069 = vpop.f32.mrf.mxu0
  %v1070 = vadd.f32 0.0, %v1069
  %v1071 = vpop.f32.mrf.mxu0
  %1072 = vmatprep.mubr.bf16.mxu0 0
  %1073 = vmatmul.mubr.bf16.gmra.mxu0 %v1002
  %v1074 = vpop.f32.mrf.mxu0
  %v1075 = vadd.f32 0.0, %v1074
  %v1076 = vpop.f32.mrf.mxu0
  %v1077 = vpop.f32.mrf.mxu0
  %v1078 = vadd.f32 0.0, %v1077
  %v1079 = vpop.f32.mrf.mxu0
  %1080 = vdwg.mxu0
  %1081 = vrot.lane.b32.xlu0 %v605, 96
  %v1082 = vpop.permute.xlu0 %1081
  %1083 = vrot.lane.b32.xlu0 %v607, 96
  %v1084 = vpop.permute.xlu0 %1083
  %1085 = vrot.lane.b32.xlu0 %v609, 96
  %v1086 = vpop.permute.xlu0 %1085
  %1087 = vrot.lane.b32.xlu0 %v611, 96
  %v1088 = vpop.permute.xlu0 %1087
  %v1090 = vsel %vm700, %v549, 0
  %v1093 = vsel %vm700, %v551, 0
  %v1096 = vsel %vm700, %v553, 0
  %v1099 = vsel %vm700, %v555, 0
  %v1102 = vsel %vm700, %v1082, 0
  %v1105 = vsel %vm700, %v1084, 0
  %v1108 = vsel %vm700, %v1086, 0
  %v1111 = vsel %vm700, %v1088, 0
  %1113 = vmatprep.subr.bf16.mxu0 0
  %1114 = vmatpush1.bf16.xpose.msra.mxu0 0
  %1115 = vmatprep.subr.bf16.mxu0 0
  %1116 = vmatpush1.bf16.xpose.msra.mxu0 0
  %1117 = vmatprep.subr.bf16.mxu0 0
  %1118 = vmatpush1.bf16.xpose.msra.mxu0 0
  %1119 = vmatprep.subr.bf16.mxu0 0
  %1120 = vmatpush1.bf16.xpose.msra.mxu0 0
  %1121 = vmatprep.subr.bf16.mxu0 0
  %1122 = vmatpush1.bf16.xpose.msra.mxu0 %v1111
  %1123 = vmatprep.subr.bf16.mxu0 0
  %1124 = vmatpush1.bf16.xpose.msra.mxu0 %v1108
  %1125 = vmatprep.subr.bf16.mxu0 0
  %1126 = vmatpush1.bf16.xpose.msra.mxu0 %v1105
  %1127 = vmatprep.subr.bf16.mxu0 0
  %1128 = vmatpush1.bf16.xpose.msra.mxu0 %v1102
  %1129 = vmatprep.subr.bf16.mxu0 0
  %1130 = vmatpush2.bf16.xpose.msra.mxu0 0
  %1131 = vmatprep.subr.bf16.mxu0 0
  %1132 = vmatpush2.bf16.xpose.msra.mxu0 0
  %1133 = vmatprep.subr.bf16.mxu0 0
  %1134 = vmatpush2.bf16.xpose.msra.mxu0 0
  %1135 = vmatprep.subr.bf16.mxu0 0
  %1136 = vmatpush2.bf16.xpose.msra.mxu0 0
  %1137 = vmatprep.subr.bf16.mxu0 0
  %1138 = vmatpush2.bf16.xpose.msra.mxu0 0
  %1139 = vmatprep.subr.bf16.mxu0 0
  %1140 = vmatpush2.bf16.xpose.msra.mxu0 0
  %1141 = vmatprep.subr.bf16.mxu0 0
  %1142 = vmatpush2.bf16.xpose.msra.mxu0 0
  %1143 = vmatprep.subr.bf16.mxu0 0
  %1144 = vmatpush2.bf16.xpose.msra.mxu0 0
  %1145 = vmatprep.mubr.bf16.mxu0 0
  %1146 = vmatmul.mubr.bf16.gmra.mxu0 %v1090
  %v1147 = vpop.f32.mrf.mxu0
  %v1148 = vadd.f32 0.0, %v1147
  %v1149 = vpop.f32.mrf.mxu0
  %v1150 = vpop.f32.mrf.mxu0
  %v1151 = vadd.f32 0.0, %v1150
  %v1152 = vpop.f32.mrf.mxu0
  %1153 = vmatprep.mubr.bf16.mxu0 0
  %1154 = vmatmul.mubr.bf16.gmra.mxu0 %v1093
  %v1155 = vpop.f32.mrf.mxu0
  %v1156 = vadd.f32 0.0, %v1155
  %v1157 = vpop.f32.mrf.mxu0
  %v1158 = vpop.f32.mrf.mxu0
  %v1159 = vadd.f32 0.0, %v1158
  %v1160 = vpop.f32.mrf.mxu0
  %1161 = vmatprep.mubr.bf16.mxu0 0
  %1162 = vmatmul.mubr.bf16.gmra.mxu0 %v1096
  %v1163 = vpop.f32.mrf.mxu0
  %v1164 = vadd.f32 0.0, %v1163
  %v1165 = vpop.f32.mrf.mxu0
  %v1166 = vpop.f32.mrf.mxu0
  %v1167 = vadd.f32 0.0, %v1166
  %v1168 = vpop.f32.mrf.mxu0
  %1169 = vmatprep.mubr.bf16.mxu0 0
  %1170 = vmatmul.mubr.bf16.gmra.mxu0 %v1099
  %v1171 = vpop.f32.mrf.mxu0
  %v1172 = vadd.f32 0.0, %v1171
  %v1173 = vpop.f32.mrf.mxu0
  %v1174 = vpop.f32.mrf.mxu0
  %v1175 = vadd.f32 0.0, %v1174
  %v1176 = vpop.f32.mrf.mxu0
  %1177 = vdwg.mxu0
  %1178 = vrot.lane.b32.xlu0 %v613, 96
  %v1179 = vpop.permute.xlu0 %1178
  %1180 = vrot.lane.b32.xlu0 %v615, 96
  %v1181 = vpop.permute.xlu0 %1180
  %1182 = vrot.lane.b32.xlu0 %v617, 96
  %v1183 = vpop.permute.xlu0 %1182
  %1184 = vrot.lane.b32.xlu0 %v619, 96
  %v1185 = vpop.permute.xlu0 %1184
  %v1187 = vsel %vm700, %v557, 0
  %v1190 = vsel %vm700, %v559, 0
  %v1193 = vsel %vm700, %v561, 0
  %v1196 = vsel %vm700, %v563, 0
  %v1199 = vsel %vm700, %v1179, 0
  %v1202 = vsel %vm700, %v1181, 0
  %v1205 = vsel %vm700, %v1183, 0
  %v1208 = vsel %vm700, %v1185, 0
  %1210 = vmatprep.subr.bf16.mxu0 0
  %1211 = vmatpush1.bf16.xpose.msra.mxu0 0
  %1212 = vmatprep.subr.bf16.mxu0 0
  %1213 = vmatpush1.bf16.xpose.msra.mxu0 0
  %1214 = vmatprep.subr.bf16.mxu0 0
  %1215 = vmatpush1.bf16.xpose.msra.mxu0 0
  %1216 = vmatprep.subr.bf16.mxu0 0
  %1217 = vmatpush1.bf16.xpose.msra.mxu0 0
  %1218 = vmatprep.subr.bf16.mxu0 0
  %1219 = vmatpush1.bf16.xpose.msra.mxu0 %v1208
  %1220 = vmatprep.subr.bf16.mxu0 0
  %1221 = vmatpush1.bf16.xpose.msra.mxu0 %v1205
  %1222 = vmatprep.subr.bf16.mxu0 0
  %1223 = vmatpush1.bf16.xpose.msra.mxu0 %v1202
  %1224 = vmatprep.subr.bf16.mxu0 0
  %1225 = vmatpush1.bf16.xpose.msra.mxu0 %v1199
  %1226 = vmatprep.subr.bf16.mxu0 0
  %1227 = vmatpush2.bf16.xpose.msra.mxu0 0
  %1228 = vmatprep.subr.bf16.mxu0 0
  %1229 = vmatpush2.bf16.xpose.msra.mxu0 0
  %1230 = vmatprep.subr.bf16.mxu0 0
  %1231 = vmatpush2.bf16.xpose.msra.mxu0 0
  %1232 = vmatprep.subr.bf16.mxu0 0
  %1233 = vmatpush2.bf16.xpose.msra.mxu0 0
  %1234 = vmatprep.subr.bf16.mxu0 0
  %1235 = vmatpush2.bf16.xpose.msra.mxu0 0
  %1236 = vmatprep.subr.bf16.mxu0 0
  %1237 = vmatpush2.bf16.xpose.msra.mxu0 0
  %1238 = vmatprep.subr.bf16.mxu0 0
  %1239 = vmatpush2.bf16.xpose.msra.mxu0 0
  %1240 = vmatprep.subr.bf16.mxu0 0
  %1241 = vmatpush2.bf16.xpose.msra.mxu0 0
  %1242 = vmatprep.mubr.bf16.mxu0 0
  %1243 = vmatmul.mubr.bf16.gmra.mxu0 %v1187
  %v1244 = vpop.f32.mrf.mxu0
  %v1245 = vadd.f32 0.0, %v1244
  %v1246 = vpop.f32.mrf.mxu0
  %v1247 = vpop.f32.mrf.mxu0
  %v1248 = vadd.f32 0.0, %v1247
  %v1249 = vpop.f32.mrf.mxu0
  %1250 = vmatprep.mubr.bf16.mxu0 0
  %1251 = vmatmul.mubr.bf16.gmra.mxu0 %v1190
  %v1252 = vpop.f32.mrf.mxu0
  %v1253 = vadd.f32 0.0, %v1252
  %v1254 = vpop.f32.mrf.mxu0
  %v1255 = vpop.f32.mrf.mxu0
  %v1256 = vadd.f32 0.0, %v1255
  %v1257 = vpop.f32.mrf.mxu0
  %1258 = vmatprep.mubr.bf16.mxu0 0
  %1259 = vmatmul.mubr.bf16.gmra.mxu0 %v1193
  %v1260 = vpop.f32.mrf.mxu0
  %v1261 = vadd.f32 0.0, %v1260
  %v1262 = vpop.f32.mrf.mxu0
  %v1263 = vpop.f32.mrf.mxu0
  %v1264 = vadd.f32 0.0, %v1263
  %v1265 = vpop.f32.mrf.mxu0
  %1266 = vmatprep.mubr.bf16.mxu0 0
  %1267 = vmatmul.mubr.bf16.gmra.mxu0 %v1196
  %v1268 = vpop.f32.mrf.mxu0
  %v1269 = vadd.f32 0.0, %v1268
  %v1270 = vpop.f32.mrf.mxu0
  %v1271 = vpop.f32.mrf.mxu0
  %v1272 = vadd.f32 0.0, %v1271
  %v1273 = vpop.f32.mrf.mxu0
  %1274 = vdwg.mxu0
  %1275 = vrot.lane.b32.xlu0 %v621, 96
  %v1276 = vpop.permute.xlu0 %1275
  %1277 = vrot.lane.b32.xlu0 %v623, 96
  %v1278 = vpop.permute.xlu0 %1277
  %1279 = vrot.lane.b32.xlu0 %v625, 96
  %v1280 = vpop.permute.xlu0 %1279
  %1281 = vrot.lane.b32.xlu0 %v627, 96
  %v1282 = vpop.permute.xlu0 %1281
  %v1284 = vsel %vm700, %v565, 0
  %v1287 = vsel %vm700, %v567, 0
  %v1290 = vsel %vm700, %v569, 0
  %v1293 = vsel %vm700, %v571, 0
  %v1296 = vsel %vm700, %v1276, 0
  %v1299 = vsel %vm700, %v1278, 0
  %v1302 = vsel %vm700, %v1280, 0
  %v1305 = vsel %vm700, %v1282, 0
  %1307 = vmatprep.subr.bf16.mxu0 0
  %1308 = vmatpush1.bf16.xpose.msra.mxu0 0
  %1309 = vmatprep.subr.bf16.mxu0 0
  %1310 = vmatpush1.bf16.xpose.msra.mxu0 0
  %1311 = vmatprep.subr.bf16.mxu0 0
  %1312 = vmatpush1.bf16.xpose.msra.mxu0 0
  %1313 = vmatprep.subr.bf16.mxu0 0
  %1314 = vmatpush1.bf16.xpose.msra.mxu0 0
  %1315 = vmatprep.subr.bf16.mxu0 0
  %1316 = vmatpush1.bf16.xpose.msra.mxu0 %v1305
  %1317 = vmatprep.subr.bf16.mxu0 0
  %1318 = vmatpush1.bf16.xpose.msra.mxu0 %v1302
  %1319 = vmatprep.subr.bf16.mxu0 0
  %1320 = vmatpush1.bf16.xpose.msra.mxu0 %v1299
  %1321 = vmatprep.subr.bf16.mxu0 0
  %1322 = vmatpush1.bf16.xpose.msra.mxu0 %v1296
  %1323 = vmatprep.subr.bf16.mxu0 0
  %1324 = vmatpush2.bf16.xpose.msra.mxu0 0
  %1325 = vmatprep.subr.bf16.mxu0 0
  %1326 = vmatpush2.bf16.xpose.msra.mxu0 0
  %1327 = vmatprep.subr.bf16.mxu0 0
  %1328 = vmatpush2.bf16.xpose.msra.mxu0 0
  %1329 = vmatprep.subr.bf16.mxu0 0
  %1330 = vmatpush2.bf16.xpose.msra.mxu0 0
  %1331 = vmatprep.subr.bf16.mxu0 0
  %1332 = vmatpush2.bf16.xpose.msra.mxu0 0
  %1333 = vmatprep.subr.bf16.mxu0 0
  %1334 = vmatpush2.bf16.xpose.msra.mxu0 0
  %1335 = vmatprep.subr.bf16.mxu0 0
  %1336 = vmatpush2.bf16.xpose.msra.mxu0 0
  %1337 = vmatprep.subr.bf16.mxu0 0
  %1338 = vmatpush2.bf16.xpose.msra.mxu0 0
  %1339 = vmatprep.mubr.bf16.mxu0 0
  %1340 = vmatmul.mubr.bf16.gmra.mxu0 %v1284
  %v1341 = vpop.f32.mrf.mxu0
  %v1342 = vadd.f32 0.0, %v1341
  %v1343 = vpop.f32.mrf.mxu0
  %v1344 = vpop.f32.mrf.mxu0
  %v1345 = vadd.f32 0.0, %v1344
  %v1346 = vpop.f32.mrf.mxu0
  %1347 = vmatprep.mubr.bf16.mxu0 0
  %1348 = vmatmul.mubr.bf16.gmra.mxu0 %v1287
  %v1349 = vpop.f32.mrf.mxu0
  %v1350 = vadd.f32 0.0, %v1349
  %v1351 = vpop.f32.mrf.mxu0
  %v1352 = vpop.f32.mrf.mxu0
  %v1353 = vadd.f32 0.0, %v1352
  %v1354 = vpop.f32.mrf.mxu0
  %1355 = vmatprep.mubr.bf16.mxu0 0
  %1356 = vmatmul.mubr.bf16.gmra.mxu0 %v1290
  %v1357 = vpop.f32.mrf.mxu0
  %v1358 = vadd.f32 0.0, %v1357
  %v1359 = vpop.f32.mrf.mxu0
  %v1360 = vpop.f32.mrf.mxu0
  %v1361 = vadd.f32 0.0, %v1360
  %v1362 = vpop.f32.mrf.mxu0
  %1363 = vmatprep.mubr.bf16.mxu0 0
  %1364 = vmatmul.mubr.bf16.gmra.mxu0 %v1293
  %v1365 = vpop.f32.mrf.mxu0
  %v1366 = vadd.f32 0.0, %v1365
  %v1367 = vpop.f32.mrf.mxu0
  %v1368 = vpop.f32.mrf.mxu0
  %v1369 = vadd.f32 0.0, %v1368
  %v1370 = vpop.f32.mrf.mxu0
  %1371 = vdwg.mxu0
  %1372 = vrot.lane.b32.xlu0 %v629, 96
  %v1373 = vpop.permute.xlu0 %1372
  %1374 = vrot.lane.b32.xlu0 %v631, 96
  %v1375 = vpop.permute.xlu0 %1374
  %1376 = vrot.lane.b32.xlu0 %v633, 96
  %v1377 = vpop.permute.xlu0 %1376
  %1378 = vrot.lane.b32.xlu0 %v635, 96
  %v1379 = vpop.permute.xlu0 %1378
  %v1381 = vsel %vm700, %v573, 0
  %v1384 = vsel %vm700, %v575, 0
  %v1387 = vsel %vm700, %v577, 0
  %v1390 = vsel %vm700, %v579, 0
  %v1393 = vsel %vm700, %v1373, 0
  %v1396 = vsel %vm700, %v1375, 0
  %v1399 = vsel %vm700, %v1377, 0
  %v1402 = vsel %vm700, %v1379, 0
  %1404 = vmatprep.subr.bf16.mxu0 0
  %1405 = vmatpush1.bf16.xpose.msra.mxu0 0
  %1406 = vmatprep.subr.bf16.mxu0 0
  %1407 = vmatpush1.bf16.xpose.msra.mxu0 0
  %1408 = vmatprep.subr.bf16.mxu0 0
  %1409 = vmatpush1.bf16.xpose.msra.mxu0 0
  %1410 = vmatprep.subr.bf16.mxu0 0
  %1411 = vmatpush1.bf16.xpose.msra.mxu0 0
  %1412 = vmatprep.subr.bf16.mxu0 0
  %1413 = vmatpush1.bf16.xpose.msra.mxu0 %v1402
  %1414 = vmatprep.subr.bf16.mxu0 0
  %1415 = vmatpush1.bf16.xpose.msra.mxu0 %v1399
  %1416 = vmatprep.subr.bf16.mxu0 0
  %1417 = vmatpush1.bf16.xpose.msra.mxu0 %v1396
  %1418 = vmatprep.subr.bf16.mxu0 0
  %1419 = vmatpush1.bf16.xpose.msra.mxu0 %v1393
  %1420 = vmatprep.subr.bf16.mxu0 0
  %1421 = vmatpush2.bf16.xpose.msra.mxu0 0
  %1422 = vmatprep.subr.bf16.mxu0 0
  %1423 = vmatpush2.bf16.xpose.msra.mxu0 0
  %1424 = vmatprep.subr.bf16.mxu0 0
  %1425 = vmatpush2.bf16.xpose.msra.mxu0 0
  %1426 = vmatprep.subr.bf16.mxu0 0
  %1427 = vmatpush2.bf16.xpose.msra.mxu0 0
  %1428 = vmatprep.subr.bf16.mxu0 0
  %1429 = vmatpush2.bf16.xpose.msra.mxu0 0
  %1430 = vmatprep.subr.bf16.mxu0 0
  %1431 = vmatpush2.bf16.xpose.msra.mxu0 0
  %1432 = vmatprep.subr.bf16.mxu0 0
  %1433 = vmatpush2.bf16.xpose.msra.mxu0 0
  %1434 = vmatprep.subr.bf16.mxu0 0
  %1435 = vmatpush2.bf16.xpose.msra.mxu0 0
  %1436 = vmatprep.mubr.bf16.mxu0 0
  %1437 = vmatmul.mubr.bf16.gmra.mxu0 %v1381
  %v1438 = vpop.f32.mrf.mxu0
  %v1439 = vadd.f32 0.0, %v1438
  %v1440 = vpop.f32.mrf.mxu0
  %v1441 = vpop.f32.mrf.mxu0
  %v1442 = vadd.f32 0.0, %v1441
  %v1443 = vpop.f32.mrf.mxu0
  %1444 = vmatprep.mubr.bf16.mxu0 0
  %1445 = vmatmul.mubr.bf16.gmra.mxu0 %v1384
  %v1446 = vpop.f32.mrf.mxu0
  %v1447 = vadd.f32 0.0, %v1446
  %v1448 = vpop.f32.mrf.mxu0
  %v1449 = vpop.f32.mrf.mxu0
  %v1450 = vadd.f32 0.0, %v1449
  %v1451 = vpop.f32.mrf.mxu0
  %1452 = vmatprep.mubr.bf16.mxu0 0
  %1453 = vmatmul.mubr.bf16.gmra.mxu0 %v1387
  %v1454 = vpop.f32.mrf.mxu0
  %v1455 = vadd.f32 0.0, %v1454
  %v1456 = vpop.f32.mrf.mxu0
  %v1457 = vpop.f32.mrf.mxu0
  %v1458 = vadd.f32 0.0, %v1457
  %v1459 = vpop.f32.mrf.mxu0
  %1460 = vmatprep.mubr.bf16.mxu0 0
  %1461 = vmatmul.mubr.bf16.gmra.mxu0 %v1390
  %v1462 = vpop.f32.mrf.mxu0
  %v1463 = vadd.f32 0.0, %v1462
  %v1464 = vpop.f32.mrf.mxu0
  %v1465 = vpop.f32.mrf.mxu0
  %v1466 = vadd.f32 0.0, %v1465
  %v1467 = vpop.f32.mrf.mxu0
  %1468 = vdwg.mxu0
  %vm1469 = vcmask 523264
  %v1470 = vsel %vm1469, %v760, -inf
  %1471 = vmax.xlane.f32.xlu0 %v1470
  %v1472 = vpop.xlane.xlu0 %1471
  %v1473 = vsel %vm1469, %v763, -inf
  %1474 = vmax.xlane.f32.xlu0 %v1473
  %v1475 = vpop.xlane.xlu0 %1474
  %v1476 = vsel %vm1469, %v768, -inf
  %1477 = vmax.xlane.f32.xlu0 %v1476
  %v1478 = vpop.xlane.xlu0 %1477
  %v1479 = vsel %vm1469, %v771, -inf
  %1480 = vmax.xlane.f32.xlu0 %v1479
  %v1481 = vpop.xlane.xlu0 %1480
  %v1482 = vsel %vm1469, %v776, -inf
  %1483 = vmax.xlane.f32.xlu0 %v1482
  %v1484 = vpop.xlane.xlu0 %1483
  %v1485 = vsel %vm1469, %v779, -inf
  %1486 = vmax.xlane.f32.xlu0 %v1485
  %v1487 = vpop.xlane.xlu0 %1486
  %v1488 = vsel %vm1469, %v784, -inf
  %1489 = vmax.xlane.f32.xlu0 %v1488
  %v1490 = vpop.xlane.xlu0 %1489
  %v1491 = vsel %vm1469, %v787, -inf
  %1492 = vmax.xlane.f32.xlu0 %v1491
  %v1493 = vpop.xlane.xlu0 %1492
  %v1494 = vsel %vm1469, %v857, -inf
  %1495 = vmax.xlane.f32.xlu0 %v1494
  %v1496 = vpop.xlane.xlu0 %1495
  %v1497 = vsel %vm1469, %v860, -inf
  %1498 = vmax.xlane.f32.xlu0 %v1497
  %v1499 = vpop.xlane.xlu0 %1498
  %v1500 = vsel %vm1469, %v865, -inf
  %1501 = vmax.xlane.f32.xlu0 %v1500
  %v1502 = vpop.xlane.xlu0 %1501
  %v1503 = vsel %vm1469, %v868, -inf
  %1504 = vmax.xlane.f32.xlu0 %v1503
  %v1505 = vpop.xlane.xlu0 %1504
  %v1506 = vsel %vm1469, %v873, -inf
  %1507 = vmax.xlane.f32.xlu0 %v1506
  %v1508 = vpop.xlane.xlu0 %1507
  %v1509 = vsel %vm1469, %v876, -inf
  %1510 = vmax.xlane.f32.xlu0 %v1509
  %v1511 = vpop.xlane.xlu0 %1510
  %v1512 = vsel %vm1469, %v881, -inf
  %1513 = vmax.xlane.f32.xlu0 %v1512
  %v1514 = vpop.xlane.xlu0 %1513
  %v1515 = vsel %vm1469, %v884, -inf
  %1516 = vmax.xlane.f32.xlu0 %v1515
  %v1517 = vpop.xlane.xlu0 %1516
  %v1518 = vsel %vm1469, %v954, -inf
  %1519 = vmax.xlane.f32.xlu0 %v1518
  %v1520 = vpop.xlane.xlu0 %1519
  %v1521 = vsel %vm1469, %v957, -inf
  %1522 = vmax.xlane.f32.xlu0 %v1521
  %v1523 = vpop.xlane.xlu0 %1522
  %v1524 = vsel %vm1469, %v962, -inf
  %1525 = vmax.xlane.f32.xlu0 %v1524
  %v1526 = vpop.xlane.xlu0 %1525
  %v1527 = vsel %vm1469, %v965, -inf
  %1528 = vmax.xlane.f32.xlu0 %v1527
  %v1529 = vpop.xlane.xlu0 %1528
  %v1530 = vsel %vm1469, %v970, -inf
  %1531 = vmax.xlane.f32.xlu0 %v1530
  %v1532 = vpop.xlane.xlu0 %1531
  %v1533 = vsel %vm1469, %v973, -inf
  %1534 = vmax.xlane.f32.xlu0 %v1533
  %v1535 = vpop.xlane.xlu0 %1534
  %v1536 = vsel %vm1469, %v978, -inf
  %1537 = vmax.xlane.f32.xlu0 %v1536
  %v1538 = vpop.xlane.xlu0 %1537
  %v1539 = vsel %vm1469, %v981, -inf
  %1540 = vmax.xlane.f32.xlu0 %v1539
  %v1541 = vpop.xlane.xlu0 %1540
  %v1542 = vsel %vm1469, %v1051, -inf
  %1543 = vmax.xlane.f32.xlu0 %v1542
  %v1544 = vpop.xlane.xlu0 %1543
  %v1545 = vsel %vm1469, %v1054, -inf
  %1546 = vmax.xlane.f32.xlu0 %v1545
  %v1547 = vpop.xlane.xlu0 %1546
  %v1548 = vsel %vm1469, %v1059, -inf
  %1549 = vmax.xlane.f32.xlu0 %v1548
  %v1550 = vpop.xlane.xlu0 %1549
  %v1551 = vsel %vm1469, %v1062, -inf
  %1552 = vmax.xlane.f32.xlu0 %v1551
  %v1553 = vpop.xlane.xlu0 %1552
  %v1554 = vsel %vm1469, %v1067, -inf
  %1555 = vmax.xlane.f32.xlu0 %v1554
  %v1556 = vpop.xlane.xlu0 %1555
  %v1557 = vsel %vm1469, %v1070, -inf
  %1558 = vmax.xlane.f32.xlu0 %v1557
  %v1559 = vpop.xlane.xlu0 %1558
  %v1560 = vsel %vm1469, %v1075, -inf
  %1561 = vmax.xlane.f32.xlu0 %v1560
  %v1562 = vpop.xlane.xlu0 %1561
  %v1563 = vsel %vm1469, %v1078, -inf
  %1564 = vmax.xlane.f32.xlu0 %v1563
  %v1565 = vpop.xlane.xlu0 %1564
  %v1566 = vsel %vm1469, %v1148, -inf
  %1567 = vmax.xlane.f32.xlu0 %v1566
  %v1568 = vpop.xlane.xlu0 %1567
  %v1569 = vsel %vm1469, %v1151, -inf
  %1570 = vmax.xlane.f32.xlu0 %v1569
  %v1571 = vpop.xlane.xlu0 %1570
  %v1572 = vsel %vm1469, %v1156, -inf
  %1573 = vmax.xlane.f32.xlu0 %v1572
  %v1574 = vpop.xlane.xlu0 %1573
  %v1575 = vsel %vm1469, %v1159, -inf
  %1576 = vmax.xlane.f32.xlu0 %v1575
  %v1577 = vpop.xlane.xlu0 %1576
  %v1578 = vsel %vm1469, %v1164, -inf
  %1579 = vmax.xlane.f32.xlu0 %v1578
  %v1580 = vpop.xlane.xlu0 %1579
  %v1581 = vsel %vm1469, %v1167, -inf
  %1582 = vmax.xlane.f32.xlu0 %v1581
  %v1583 = vpop.xlane.xlu0 %1582
  %v1584 = vsel %vm1469, %v1172, -inf
  %1585 = vmax.xlane.f32.xlu0 %v1584
  %v1586 = vpop.xlane.xlu0 %1585
  %v1587 = vsel %vm1469, %v1175, -inf
  %1588 = vmax.xlane.f32.xlu0 %v1587
  %v1589 = vpop.xlane.xlu0 %1588
  %v1590 = vsel %vm1469, %v1245, -inf
  %1591 = vmax.xlane.f32.xlu0 %v1590
  %v1592 = vpop.xlane.xlu0 %1591
  %v1593 = vsel %vm1469, %v1248, -inf
  %1594 = vmax.xlane.f32.xlu0 %v1593
  %v1595 = vpop.xlane.xlu0 %1594
  %v1596 = vsel %vm1469, %v1253, -inf
  %1597 = vmax.xlane.f32.xlu0 %v1596
  %v1598 = vpop.xlane.xlu0 %1597
  %v1599 = vsel %vm1469, %v1256, -inf
  %1600 = vmax.xlane.f32.xlu0 %v1599
  %v1601 = vpop.xlane.xlu0 %1600
  %v1602 = vsel %vm1469, %v1261, -inf
  %1603 = vmax.xlane.f32.xlu0 %v1602
  %v1604 = vpop.xlane.xlu0 %1603
  %v1605 = vsel %vm1469, %v1264, -inf
  %1606 = vmax.xlane.f32.xlu0 %v1605
  %v1607 = vpop.xlane.xlu0 %1606
  %v1608 = vsel %vm1469, %v1269, -inf
  %1609 = vmax.xlane.f32.xlu0 %v1608
  %v1610 = vpop.xlane.xlu0 %1609
  %v1611 = vsel %vm1469, %v1272, -inf
  %1612 = vmax.xlane.f32.xlu0 %v1611
  %v1613 = vpop.xlane.xlu0 %1612
  %v1614 = vsel %vm1469, %v1342, -inf
  %1615 = vmax.xlane.f32.xlu0 %v1614
  %v1616 = vpop.xlane.xlu0 %1615
  %v1617 = vsel %vm1469, %v1345, -inf
  %1618 = vmax.xlane.f32.xlu0 %v1617
  %v1619 = vpop.xlane.xlu0 %1618
  %v1620 = vsel %vm1469, %v1350, -inf
  %1621 = vmax.xlane.f32.xlu0 %v1620
  %v1622 = vpop.xlane.xlu0 %1621
  %v1623 = vsel %vm1469, %v1353, -inf
  %1624 = vmax.xlane.f32.xlu0 %v1623
  %v1625 = vpop.xlane.xlu0 %1624
  %v1626 = vsel %vm1469, %v1358, -inf
  %1627 = vmax.xlane.f32.xlu0 %v1626
  %v1628 = vpop.xlane.xlu0 %1627
  %v1629 = vsel %vm1469, %v1361, -inf
  %1630 = vmax.xlane.f32.xlu0 %v1629
  %v1631 = vpop.xlane.xlu0 %1630
  %v1632 = vsel %vm1469, %v1366, -inf
  %1633 = vmax.xlane.f32.xlu0 %v1632
  %v1634 = vpop.xlane.xlu0 %1633
  %v1635 = vsel %vm1469, %v1369, -inf
  %1636 = vmax.xlane.f32.xlu0 %v1635
  %v1637 = vpop.xlane.xlu0 %1636
  %v1638 = vsel %vm1469, %v1439, -inf
  %1639 = vmax.xlane.f32.xlu0 %v1638
  %v1640 = vpop.xlane.xlu0 %1639
  %v1641 = vsel %vm1469, %v1442, -inf
  %1642 = vmax.xlane.f32.xlu0 %v1641
  %v1643 = vpop.xlane.xlu0 %1642
  %v1644 = vsel %vm1469, %v1447, -inf
  %1645 = vmax.xlane.f32.xlu0 %v1644
  %v1646 = vpop.xlane.xlu0 %1645
  %v1647 = vsel %vm1469, %v1450, -inf
  %1648 = vmax.xlane.f32.xlu0 %v1647
  %v1649 = vpop.xlane.xlu0 %1648
  %v1650 = vsel %vm1469, %v1455, -inf
  %1651 = vmax.xlane.f32.xlu0 %v1650
  %v1652 = vpop.xlane.xlu0 %1651
  %v1653 = vsel %vm1469, %v1458, -inf
  %1654 = vmax.xlane.f32.xlu0 %v1653
  %v1655 = vpop.xlane.xlu0 %1654
  %v1656 = vsel %vm1469, %v1463, -inf
  %1657 = vmax.xlane.f32.xlu0 %v1656
  %v1658 = vpop.xlane.xlu0 %1657
  %v1659 = vsel %vm1469, %v1466, -inf
  %1660 = vmax.xlane.f32.xlu0 %v1659
  %v1661 = vpop.xlane.xlu0 %1660
  %v1662 = vsub.f32 %v760, %v1472
  %v1663 = vsub.f32 %v763, %v1475
  %v1664 = vsub.f32 %v768, %v1478
  %v1665 = vsub.f32 %v771, %v1481
  %v1666 = vsub.f32 %v776, %v1484
  %v1667 = vsub.f32 %v779, %v1487
  %v1668 = vsub.f32 %v784, %v1490
  %v1669 = vsub.f32 %v787, %v1493
  %v1670 = vsub.f32 %v857, %v1496
  %v1671 = vsub.f32 %v860, %v1499
  %v1672 = vsub.f32 %v865, %v1502
  %v1673 = vsub.f32 %v868, %v1505
  %v1674 = vsub.f32 %v873, %v1508
  %v1675 = vsub.f32 %v876, %v1511
  %v1676 = vsub.f32 %v881, %v1514
  %v1677 = vsub.f32 %v884, %v1517
  %v1678 = vsub.f32 %v954, %v1520
  %v1679 = vsub.f32 %v957, %v1523
  %v1680 = vsub.f32 %v962, %v1526
  %v1681 = vsub.f32 %v965, %v1529
  %v1682 = vsub.f32 %v970, %v1532
  %v1683 = vsub.f32 %v973, %v1535
  %v1684 = vsub.f32 %v978, %v1538
  %v1685 = vsub.f32 %v981, %v1541
  %v1686 = vsub.f32 %v1051, %v1544
  %v1687 = vsub.f32 %v1054, %v1547
  %v1688 = vsub.f32 %v1059, %v1550
  %v1689 = vsub.f32 %v1062, %v1553
  %v1690 = vsub.f32 %v1067, %v1556
  %v1691 = vsub.f32 %v1070, %v1559
  %v1692 = vsub.f32 %v1075, %v1562
  %v1693 = vsub.f32 %v1078, %v1565
  %v1694 = vsub.f32 %v1148, %v1568
  %v1695 = vsub.f32 %v1151, %v1571
  %v1696 = vsub.f32 %v1156, %v1574
  %v1697 = vsub.f32 %v1159, %v1577
  %v1698 = vsub.f32 %v1164, %v1580
  %v1699 = vsub.f32 %v1167, %v1583
  %v1700 = vsub.f32 %v1172, %v1586
  %v1701 = vsub.f32 %v1175, %v1589
  %v1702 = vsub.f32 %v1245, %v1592
  %v1703 = vsub.f32 %v1248, %v1595
  %v1704 = vsub.f32 %v1253, %v1598
  %v1705 = vsub.f32 %v1256, %v1601
  %v1706 = vsub.f32 %v1261, %v1604
  %v1707 = vsub.f32 %v1264, %v1607
  %v1708 = vsub.f32 %v1269, %v1610
  %v1709 = vsub.f32 %v1272, %v1613
  %v1710 = vsub.f32 %v1342, %v1616
  %v1711 = vsub.f32 %v1345, %v1619
  %v1712 = vsub.f32 %v1350, %v1622
  %v1713 = vsub.f32 %v1353, %v1625
  %v1714 = vsub.f32 %v1358, %v1628
  %v1715 = vsub.f32 %v1361, %v1631
  %v1716 = vsub.f32 %v1366, %v1634
  %v1717 = vsub.f32 %v1369, %v1637
  %v1718 = vsub.f32 %v1439, %v1640
  %v1719 = vsub.f32 %v1442, %v1643
  %v1720 = vsub.f32 %v1447, %v1646
  %v1721 = vsub.f32 %v1450, %v1649
  %v1722 = vsub.f32 %v1455, %v1652
  %v1723 = vsub.f32 %v1458, %v1655
  %v1724 = vsub.f32 %v1463, %v1658
  %v1725 = vsub.f32 %v1466, %v1661
  %v1726 = vmul.f32 %v1662, 1.442695
  %v1727 = vpow.pop %v1726
  %v1728 = vmul.f32 %v1663, 1.442695
  %v1729 = vpow.pop %v1728
  %v1730 = vmul.f32 %v1664, 1.442695
  %v1731 = vpow.pop %v1730
  %v1732 = vmul.f32 %v1665, 1.442695
  %v1733 = vpow.pop %v1732
  %v1734 = vmul.f32 %v1666, 1.442695
  %v1735 = vpow.pop %v1734
  %v1736 = vmul.f32 %v1667, 1.442695
  %v1737 = vpow.pop %v1736
  %v1738 = vmul.f32 %v1668, 1.442695
  %v1739 = vpow.pop %v1738
  %v1740 = vmul.f32 %v1669, 1.442695
  %v1741 = vpow.pop %v1740
  %v1742 = vmul.f32 %v1670, 1.442695
  %v1743 = vpow.pop %v1742
  %v1744 = vmul.f32 %v1671, 1.442695
  %v1745 = vpow.pop %v1744
  %v1746 = vmul.f32 %v1672, 1.442695
  %v1747 = vpow.pop %v1746
  %v1748 = vmul.f32 %v1673, 1.442695
  %v1749 = vpow.pop %v1748
  %v1750 = vmul.f32 %v1674, 1.442695
  %v1751 = vpow.pop %v1750
  %v1752 = vmul.f32 %v1675, 1.442695
  %v1753 = vpow.pop %v1752
  %v1754 = vmul.f32 %v1676, 1.442695
  %v1755 = vpow.pop %v1754
  %v1756 = vmul.f32 %v1677, 1.442695
  %v1757 = vpow.pop %v1756
  %v1758 = vmul.f32 %v1678, 1.442695
  %v1759 = vpow.pop %v1758
  %v1760 = vmul.f32 %v1679, 1.442695
  %v1761 = vpow.pop %v1760
  %v1762 = vmul.f32 %v1680, 1.442695
  %v1763 = vpow.pop %v1762
  %v1764 = vmul.f32 %v1681, 1.442695
  %v1765 = vpow.pop %v1764
  %v1766 = vmul.f32 %v1682, 1.442695
  %v1767 = vpow.pop %v1766
  %v1768 = vmul.f32 %v1683, 1.442695
  %v1769 = vpow.pop %v1768
  %v1770 = vmul.f32 %v1684, 1.442695
  %v1771 = vpow.pop %v1770
  %v1772 = vmul.f32 %v1685, 1.442695
  %v1773 = vpow.pop %v1772
  %v1774 = vmul.f32 %v1686, 1.442695
  %v1775 = vpow.pop %v1774
  %v1776 = vmul.f32 %v1687, 1.442695
  %v1777 = vpow.pop %v1776
  %v1778 = vmul.f32 %v1688, 1.442695
  %v1779 = vpow.pop %v1778
  %v1780 = vmul.f32 %v1689, 1.442695
  %v1781 = vpow.pop %v1780
  %v1782 = vmul.f32 %v1690, 1.442695
  %v1783 = vpow.pop %v1782
  %v1784 = vmul.f32 %v1691, 1.442695
  %v1785 = vpow.pop %v1784
  %v1786 = vmul.f32 %v1692, 1.442695
  %v1787 = vpow.pop %v1786
  %v1788 = vmul.f32 %v1693, 1.442695
  %v1789 = vpow.pop %v1788
  %v1790 = vmul.f32 %v1694, 1.442695
  %v1791 = vpow.pop %v1790
  %v1792 = vmul.f32 %v1695, 1.442695
  %v1793 = vpow.pop %v1792
  %v1794 = vmul.f32 %v1696, 1.442695
  %v1795 = vpow.pop %v1794
  %v1796 = vmul.f32 %v1697, 1.442695
  %v1797 = vpow.pop %v1796
  %v1798 = vmul.f32 %v1698, 1.442695
  %v1799 = vpow.pop %v1798
  %v1800 = vmul.f32 %v1699, 1.442695
  %v1801 = vpow.pop %v1800
  %v1802 = vmul.f32 %v1700, 1.442695
  %v1803 = vpow.pop %v1802
  %v1804 = vmul.f32 %v1701, 1.442695
  %v1805 = vpow.pop %v1804
  %v1806 = vmul.f32 %v1702, 1.442695
  %v1807 = vpow.pop %v1806
  %v1808 = vmul.f32 %v1703, 1.442695
  %v1809 = vpow.pop %v1808
  %v1810 = vmul.f32 %v1704, 1.442695
  %v1811 = vpow.pop %v1810
  %v1812 = vmul.f32 %v1705, 1.442695
  %v1813 = vpow.pop %v1812
  %v1814 = vmul.f32 %v1706, 1.442695
  %v1815 = vpow.pop %v1814
  %v1816 = vmul.f32 %v1707, 1.442695
  %v1817 = vpow.pop %v1816
  %v1818 = vmul.f32 %v1708, 1.442695
  %v1819 = vpow.pop %v1818
  %v1820 = vmul.f32 %v1709, 1.442695
  %v1821 = vpow.pop %v1820
  %v1822 = vmul.f32 %v1710, 1.442695
  %v1823 = vpow.pop %v1822
  %v1824 = vmul.f32 %v1711, 1.442695
  %v1825 = vpow.pop %v1824
  %v1826 = vmul.f32 %v1712, 1.442695
  %v1827 = vpow.pop %v1826
  %v1828 = vmul.f32 %v1713, 1.442695
  %v1829 = vpow.pop %v1828
  %v1830 = vmul.f32 %v1714, 1.442695
  %v1831 = vpow.pop %v1830
  %v1832 = vmul.f32 %v1715, 1.442695
  %v1833 = vpow.pop %v1832
  %v1834 = vmul.f32 %v1716, 1.442695
  %v1835 = vpow.pop %v1834
  %v1836 = vmul.f32 %v1717, 1.442695
  %v1837 = vpow.pop %v1836
  %v1838 = vmul.f32 %v1718, 1.442695
  %v1839 = vpow.pop %v1838
  %v1840 = vmul.f32 %v1719, 1.442695
  %v1841 = vpow.pop %v1840
  %v1842 = vmul.f32 %v1720, 1.442695
  %v1843 = vpow.pop %v1842
  %v1844 = vmul.f32 %v1721, 1.442695
  %v1845 = vpow.pop %v1844
  %v1846 = vmul.f32 %v1722, 1.442695
  %v1847 = vpow.pop %v1846
  %v1848 = vmul.f32 %v1723, 1.442695
  %v1849 = vpow.pop %v1848
  %v1850 = vmul.f32 %v1724, 1.442695
  %v1851 = vpow.pop %v1850
  %v1852 = vmul.f32 %v1725, 1.442695
  %v1853 = vpow.pop %v1852
  %v1854 = vsel %vm1469, %v1727, 0.0
  %1855 = vadd.xlane.f32.xlu0 %v1854
  %v1856 = vpop.xlane.xlu0 %1855
  %v1857 = vsel %vm1469, %v1729, 0.0
  %1858 = vadd.xlane.f32.xlu0 %v1857
  %v1859 = vpop.xlane.xlu0 %1858
  %v1860 = vsel %vm1469, %v1731, 0.0
  %1861 = vadd.xlane.f32.xlu0 %v1860
  %v1862 = vpop.xlane.xlu0 %1861
  %v1863 = vsel %vm1469, %v1733, 0.0
  %1864 = vadd.xlane.f32.xlu0 %v1863
  %v1865 = vpop.xlane.xlu0 %1864
  %v1866 = vsel %vm1469, %v1735, 0.0
  %1867 = vadd.xlane.f32.xlu0 %v1866
  %v1868 = vpop.xlane.xlu0 %1867
  %v1869 = vsel %vm1469, %v1737, 0.0
  %1870 = vadd.xlane.f32.xlu0 %v1869
  %v1871 = vpop.xlane.xlu0 %1870
  %v1872 = vsel %vm1469, %v1739, 0.0
  %1873 = vadd.xlane.f32.xlu0 %v1872
  %v1874 = vpop.xlane.xlu0 %1873
  %v1875 = vsel %vm1469, %v1741, 0.0
  %1876 = vadd.xlane.f32.xlu0 %v1875
  %v1877 = vpop.xlane.xlu0 %1876
  %v1878 = vsel %vm1469, %v1743, 0.0
  %1879 = vadd.xlane.f32.xlu0 %v1878
  %v1880 = vpop.xlane.xlu0 %1879
  %v1881 = vsel %vm1469, %v1745, 0.0
  %1882 = vadd.xlane.f32.xlu0 %v1881
  %v1883 = vpop.xlane.xlu0 %1882
  %v1884 = vsel %vm1469, %v1747, 0.0
  %1885 = vadd.xlane.f32.xlu0 %v1884
  %v1886 = vpop.xlane.xlu0 %1885
  %v1887 = vsel %vm1469, %v1749, 0.0
  %1888 = vadd.xlane.f32.xlu0 %v1887
  %v1889 = vpop.xlane.xlu0 %1888
  %v1890 = vsel %vm1469, %v1751, 0.0
  %1891 = vadd.xlane.f32.xlu0 %v1890
  %v1892 = vpop.xlane.xlu0 %1891
  %v1893 = vsel %vm1469, %v1753, 0.0
  %1894 = vadd.xlane.f32.xlu0 %v1893
  %v1895 = vpop.xlane.xlu0 %1894
  %v1896 = vsel %vm1469, %v1755, 0.0
  %1897 = vadd.xlane.f32.xlu0 %v1896
  %v1898 = vpop.xlane.xlu0 %1897
  %v1899 = vsel %vm1469, %v1757, 0.0
  %1900 = vadd.xlane.f32.xlu0 %v1899
  %v1901 = vpop.xlane.xlu0 %1900
  %v1902 = vsel %vm1469, %v1759, 0.0
  %1903 = vadd.xlane.f32.xlu0 %v1902
  %v1904 = vpop.xlane.xlu0 %1903
  %v1905 = vsel %vm1469, %v1761, 0.0
  %1906 = vadd.xlane.f32.xlu0 %v1905
  %v1907 = vpop.xlane.xlu0 %1906
  %v1908 = vsel %vm1469, %v1763, 0.0
  %1909 = vadd.xlane.f32.xlu0 %v1908
  %v1910 = vpop.xlane.xlu0 %1909
  %v1911 = vsel %vm1469, %v1765, 0.0
  %1912 = vadd.xlane.f32.xlu0 %v1911
  %v1913 = vpop.xlane.xlu0 %1912
  %v1914 = vsel %vm1469, %v1767, 0.0
  %1915 = vadd.xlane.f32.xlu0 %v1914
  %v1916 = vpop.xlane.xlu0 %1915
  %v1917 = vsel %vm1469, %v1769, 0.0
  %1918 = vadd.xlane.f32.xlu0 %v1917
  %v1919 = vpop.xlane.xlu0 %1918
  %v1920 = vsel %vm1469, %v1771, 0.0
  %1921 = vadd.xlane.f32.xlu0 %v1920
  %v1922 = vpop.xlane.xlu0 %1921
  %v1923 = vsel %vm1469, %v1773, 0.0
  %1924 = vadd.xlane.f32.xlu0 %v1923
  %v1925 = vpop.xlane.xlu0 %1924
  %v1926 = vsel %vm1469, %v1775, 0.0
  %1927 = vadd.xlane.f32.xlu0 %v1926
  %v1928 = vpop.xlane.xlu0 %1927
  %v1929 = vsel %vm1469, %v1777, 0.0
  %1930 = vadd.xlane.f32.xlu0 %v1929
  %v1931 = vpop.xlane.xlu0 %1930
  %v1932 = vsel %vm1469, %v1779, 0.0
  %1933 = vadd.xlane.f32.xlu0 %v1932
  %v1934 = vpop.xlane.xlu0 %1933
  %v1935 = vsel %vm1469, %v1781, 0.0
  %1936 = vadd.xlane.f32.xlu0 %v1935
  %v1937 = vpop.xlane.xlu0 %1936
  %v1938 = vsel %vm1469, %v1783, 0.0
  %1939 = vadd.xlane.f32.xlu0 %v1938
  %v1940 = vpop.xlane.xlu0 %1939
  %v1941 = vsel %vm1469, %v1785, 0.0
  %1942 = vadd.xlane.f32.xlu0 %v1941
  %v1943 = vpop.xlane.xlu0 %1942
  %v1944 = vsel %vm1469, %v1787, 0.0
  %1945 = vadd.xlane.f32.xlu0 %v1944
  %v1946 = vpop.xlane.xlu0 %1945
  %v1947 = vsel %vm1469, %v1789, 0.0
  %1948 = vadd.xlane.f32.xlu0 %v1947
  %v1949 = vpop.xlane.xlu0 %1948
  %v1950 = vsel %vm1469, %v1791, 0.0
  %1951 = vadd.xlane.f32.xlu0 %v1950
  %v1952 = vpop.xlane.xlu0 %1951
  %v1953 = vsel %vm1469, %v1793, 0.0
  %1954 = vadd.xlane.f32.xlu0 %v1953
  %v1955 = vpop.xlane.xlu0 %1954
  %v1956 = vsel %vm1469, %v1795, 0.0
  %1957 = vadd.xlane.f32.xlu0 %v1956
  %v1958 = vpop.xlane.xlu0 %1957
  %v1959 = vsel %vm1469, %v1797, 0.0
  %1960 = vadd.xlane.f32.xlu0 %v1959
  %v1961 = vpop.xlane.xlu0 %1960
  %v1962 = vsel %vm1469, %v1799, 0.0
  %1963 = vadd.xlane.f32.xlu0 %v1962
  %v1964 = vpop.xlane.xlu0 %1963
  %v1965 = vsel %vm1469, %v1801, 0.0
  %1966 = vadd.xlane.f32.xlu0 %v1965
  %v1967 = vpop.xlane.xlu0 %1966
  %v1968 = vsel %vm1469, %v1803, 0.0
  %1969 = vadd.xlane.f32.xlu0 %v1968
  %v1970 = vpop.xlane.xlu0 %1969
  %v1971 = vsel %vm1469, %v1805, 0.0
  %1972 = vadd.xlane.f32.xlu0 %v1971
  %v1973 = vpop.xlane.xlu0 %1972
  %v1974 = vsel %vm1469, %v1807, 0.0
  %1975 = vadd.xlane.f32.xlu0 %v1974
  %v1976 = vpop.xlane.xlu0 %1975
  %v1977 = vsel %vm1469, %v1809, 0.0
  %1978 = vadd.xlane.f32.xlu0 %v1977
  %v1979 = vpop.xlane.xlu0 %1978
  %v1980 = vsel %vm1469, %v1811, 0.0
  %1981 = vadd.xlane.f32.xlu0 %v1980
  %v1982 = vpop.xlane.xlu0 %1981
  %v1983 = vsel %vm1469, %v1813, 0.0
  %1984 = vadd.xlane.f32.xlu0 %v1983
  %v1985 = vpop.xlane.xlu0 %1984
  %v1986 = vsel %vm1469, %v1815, 0.0
  %1987 = vadd.xlane.f32.xlu0 %v1986
  %v1988 = vpop.xlane.xlu0 %1987
  %v1989 = vsel %vm1469, %v1817, 0.0
  %1990 = vadd.xlane.f32.xlu0 %v1989
  %v1991 = vpop.xlane.xlu0 %1990
  %v1992 = vsel %vm1469, %v1819, 0.0
  %1993 = vadd.xlane.f32.xlu0 %v1992
  %v1994 = vpop.xlane.xlu0 %1993
  %v1995 = vsel %vm1469, %v1821, 0.0
  %1996 = vadd.xlane.f32.xlu0 %v1995
  %v1997 = vpop.xlane.xlu0 %1996
  %v1998 = vsel %vm1469, %v1823, 0.0
  %1999 = vadd.xlane.f32.xlu0 %v1998
  %v2000 = vpop.xlane.xlu0 %1999
  %v2001 = vsel %vm1469, %v1825, 0.0
  %2002 = vadd.xlane.f32.xlu0 %v2001
  %v2003 = vpop.xlane.xlu0 %2002
  %v2004 = vsel %vm1469, %v1827, 0.0
  %2005 = vadd.xlane.f32.xlu0 %v2004
  %v2006 = vpop.xlane.xlu0 %2005
  %v2007 = vsel %vm1469, %v1829, 0.0
  %2008 = vadd.xlane.f32.xlu0 %v2007
  %v2009 = vpop.xlane.xlu0 %2008
  %v2010 = vsel %vm1469, %v1831, 0.0
  %2011 = vadd.xlane.f32.xlu0 %v2010
  %v2012 = vpop.xlane.xlu0 %2011
  %v2013 = vsel %vm1469, %v1833, 0.0
  %2014 = vadd.xlane.f32.xlu0 %v2013
  %v2015 = vpop.xlane.xlu0 %2014
  %v2016 = vsel %vm1469, %v1835, 0.0
  %2017 = vadd.xlane.f32.xlu0 %v2016
  %v2018 = vpop.xlane.xlu0 %2017
  %v2019 = vsel %vm1469, %v1837, 0.0
  %2020 = vadd.xlane.f32.xlu0 %v2019
  %v2021 = vpop.xlane.xlu0 %2020
  %v2022 = vsel %vm1469, %v1839, 0.0
  %2023 = vadd.xlane.f32.xlu0 %v2022
  %v2024 = vpop.xlane.xlu0 %2023
  %v2025 = vsel %vm1469, %v1841, 0.0
  %2026 = vadd.xlane.f32.xlu0 %v2025
  %v2027 = vpop.xlane.xlu0 %2026
  %v2028 = vsel %vm1469, %v1843, 0.0
  %2029 = vadd.xlane.f32.xlu0 %v2028
  %v2030 = vpop.xlane.xlu0 %2029
  %v2031 = vsel %vm1469, %v1845, 0.0
  %2032 = vadd.xlane.f32.xlu0 %v2031
  %v2033 = vpop.xlane.xlu0 %2032
  %v2034 = vsel %vm1469, %v1847, 0.0
  %2035 = vadd.xlane.f32.xlu0 %v2034
  %v2036 = vpop.xlane.xlu0 %2035
  %v2037 = vsel %vm1469, %v1849, 0.0
  %2038 = vadd.xlane.f32.xlu0 %v2037
  %v2039 = vpop.xlane.xlu0 %2038
  %v2040 = vsel %vm1469, %v1851, 0.0
  %2041 = vadd.xlane.f32.xlu0 %v2040
  %v2042 = vpop.xlane.xlu0 %2041
  %v2043 = vsel %vm1469, %v1853, 0.0
  %2044 = vadd.xlane.f32.xlu0 %v2043
  %v2045 = vpop.xlane.xlu0 %2044
  %v2046 = vrcp.pop %v1856
  %v2047 = vrcp.pop %v1859
  %v2048 = vrcp.pop %v1862
  %v2049 = vrcp.pop %v1865
  %v2050 = vrcp.pop %v1868
  %v2051 = vrcp.pop %v1871
  %v2052 = vrcp.pop %v1874
  %v2053 = vrcp.pop %v1877
  %v2054 = vrcp.pop %v1880
  %v2055 = vrcp.pop %v1883
  %v2056 = vrcp.pop %v1886
  %v2057 = vrcp.pop %v1889
  %v2058 = vrcp.pop %v1892
  %v2059 = vrcp.pop %v1895
  %v2060 = vrcp.pop %v1898
  %v2061 = vrcp.pop %v1901
  %v2062 = vrcp.pop %v1904
  %v2063 = vrcp.pop %v1907
  %v2064 = vrcp.pop %v1910
  %v2065 = vrcp.pop %v1913
  %v2066 = vrcp.pop %v1916
  %v2067 = vrcp.pop %v1919
  %v2068 = vrcp.pop %v1922
  %v2069 = vrcp.pop %v1925
  %v2070 = vrcp.pop %v1928
  %v2071 = vrcp.pop %v1931
  %v2072 = vrcp.pop %v1934
  %v2073 = vrcp.pop %v1937
  %v2074 = vrcp.pop %v1940
  %v2075 = vrcp.pop %v1943
  %v2076 = vrcp.pop %v1946
  %v2077 = vrcp.pop %v1949
  %v2078 = vrcp.pop %v1952
  %v2079 = vrcp.pop %v1955
  %v2080 = vrcp.pop %v1958
  %v2081 = vrcp.pop %v1961
  %v2082 = vrcp.pop %v1964
  %v2083 = vrcp.pop %v1967
  %v2084 = vrcp.pop %v1970
  %v2085 = vrcp.pop %v1973
  %v2086 = vrcp.pop %v1976
  %v2087 = vrcp.pop %v1979
  %v2088 = vrcp.pop %v1982
  %v2089 = vrcp.pop %v1985
  %v2090 = vrcp.pop %v1988
  %v2091 = vrcp.pop %v1991
  %v2092 = vrcp.pop %v1994
  %v2093 = vrcp.pop %v1997
  %v2094 = vrcp.pop %v2000
  %v2095 = vrcp.pop %v2003
  %v2096 = vrcp.pop %v2006
  %v2097 = vrcp.pop %v2009
  %v2098 = vrcp.pop %v2012
  %v2099 = vrcp.pop %v2015
  %v2100 = vrcp.pop %v2018
  %v2101 = vrcp.pop %v2021
  %v2102 = vrcp.pop %v2024
  %v2103 = vrcp.pop %v2027
  %v2104 = vrcp.pop %v2030
  %v2105 = vrcp.pop %v2033
  %v2106 = vrcp.pop %v2036
  %v2107 = vrcp.pop %v2039
  %v2108 = vrcp.pop %v2042
  %v2109 = vrcp.pop %v2045
  %v2110 = vpack.c.bf16 %v1729, %v1727
  %v2111 = vpack.c.bf16 %v1733, %v1731
  %v2112 = vpack.c.bf16 %v1737, %v1735
  %v2113 = vpack.c.bf16 %v1741, %v1739
  %v2114 = vpack.c.bf16 %v1745, %v1743
  %v2115 = vpack.c.bf16 %v1749, %v1747
  %v2116 = vpack.c.bf16 %v1753, %v1751
  %v2117 = vpack.c.bf16 %v1757, %v1755
  %v2118 = vpack.c.bf16 %v1761, %v1759
  %v2119 = vpack.c.bf16 %v1765, %v1763
  %v2120 = vpack.c.bf16 %v1769, %v1767
  %v2121 = vpack.c.bf16 %v1773, %v1771
  %v2122 = vpack.c.bf16 %v1777, %v1775
  %v2123 = vpack.c.bf16 %v1781, %v1779
  %v2124 = vpack.c.bf16 %v1785, %v1783
  %v2125 = vpack.c.bf16 %v1789, %v1787
  %v2126 = vpack.c.bf16 %v1793, %v1791
  %v2127 = vpack.c.bf16 %v1797, %v1795
  %v2128 = vpack.c.bf16 %v1801, %v1799
  %v2129 = vpack.c.bf16 %v1805, %v1803
  %v2130 = vpack.c.bf16 %v1809, %v1807
  %v2131 = vpack.c.bf16 %v1813, %v1811
  %v2132 = vpack.c.bf16 %v1817, %v1815
  %v2133 = vpack.c.bf16 %v1821, %v1819
  %v2134 = vpack.c.bf16 %v1825, %v1823
  %v2135 = vpack.c.bf16 %v1829, %v1827
  %v2136 = vpack.c.bf16 %v1833, %v1831
  %v2137 = vpack.c.bf16 %v1837, %v1835
  %v2138 = vpack.c.bf16 %v1841, %v1839
  %v2139 = vpack.c.bf16 %v1845, %v1843
  %v2140 = vpack.c.bf16 %v1849, %v1847
  %v2141 = vpack.c.bf16 %v1853, %v1851
  %2142 = vrot.lane.b32.xlu0 %v516, 64
  %v2143 = vpop.permute.xlu0 %2142
  %2144 = vrot.lane.b32.xlu0 %v517, 64
  %v2145 = vpop.permute.xlu0 %2144
  %2146 = vrot.lane.b32.xlu0 %v518, 64
  %v2147 = vpop.permute.xlu0 %2146
  %2148 = vrot.lane.b32.xlu0 %v519, 64
  %v2149 = vpop.permute.xlu0 %2148
  %v2155 = vsel %vm1469, %v2110, 0
  %v2158 = vsel %vm1469, %v2111, 0
  %v2161 = vsel %vm1469, %v2112, 0
  %v2164 = vsel %vm1469, %v2113, 0
  %2166 = vmatprep.subr.bf16.mxu0 0
  %2167 = vmatpush1.bf16.msra.mxu0 0
  %2168 = vmatprep.subr.bf16.mxu0 0
  %2169 = vmatpush1.bf16.msra.mxu0 0
  %2170 = vmatprep.subr.bf16.mxu0 0
  %2171 = vmatpush1.bf16.msra.mxu0 0
  %2172 = vmatprep.subr.bf16.mxu0 0
  %2173 = vmatpush1.bf16.msra.mxu0 0
  %2174 = vmatprep.subr.bf16.mxu0 0
  %2175 = vmatpush1.bf16.msra.mxu0 %v2149
  %2176 = vmatprep.subr.bf16.mxu0 0
  %2177 = vmatpush1.bf16.msra.mxu0 %v2147
  %2178 = vmatprep.subr.bf16.mxu0 0
  %2179 = vmatpush1.bf16.msra.mxu0 %v2145
  %2180 = vmatprep.subr.bf16.mxu0 0
  %2181 = vmatpush1.bf16.msra.mxu0 %v2143
  %2182 = vmatprep.subr.bf16.mxu0 0
  %2183 = vmatpush2.bf16.msra.mxu0 0
  %2184 = vmatprep.subr.bf16.mxu0 0
  %2185 = vmatpush2.bf16.msra.mxu0 0
  %2186 = vmatprep.subr.bf16.mxu0 0
  %2187 = vmatpush2.bf16.msra.mxu0 0
  %2188 = vmatprep.subr.bf16.mxu0 0
  %2189 = vmatpush2.bf16.msra.mxu0 0
  %2190 = vmatprep.subr.bf16.mxu0 0
  %2191 = vmatpush2.bf16.msra.mxu0 0
  %2192 = vmatprep.subr.bf16.mxu0 0
  %2193 = vmatpush2.bf16.msra.mxu0 0
  %2194 = vmatprep.subr.bf16.mxu0 0
  %2195 = vmatpush2.bf16.msra.mxu0 0
  %2196 = vmatprep.subr.bf16.mxu0 0
  %2197 = vmatpush2.bf16.msra.mxu0 0
  %2198 = vmatprep.mubr.bf16.mxu0 0
  %2199 = vmatmul.mubr.bf16.gmra.mxu0 %v2155
  %v2200 = vpop.f32.mrf.mxu0
  %v2201 = vadd.f32 0.0, %v2200
  %v2202 = vpop.f32.mrf.mxu0
  %v2203 = vpop.f32.mrf.mxu0
  %v2204 = vadd.f32 0.0, %v2203
  %v2205 = vpop.f32.mrf.mxu0
  %2206 = vmatprep.mubr.bf16.mxu0 0
  %2207 = vmatmul.mubr.bf16.gmra.mxu0 %v2158
  %v2208 = vpop.f32.mrf.mxu0
  %v2209 = vadd.f32 0.0, %v2208
  %v2210 = vpop.f32.mrf.mxu0
  %v2211 = vpop.f32.mrf.mxu0
  %v2212 = vadd.f32 0.0, %v2211
  %v2213 = vpop.f32.mrf.mxu0
  %2214 = vmatprep.mubr.bf16.mxu0 0
  %2215 = vmatmul.mubr.bf16.gmra.mxu0 %v2161
  %v2216 = vpop.f32.mrf.mxu0
  %v2217 = vadd.f32 0.0, %v2216
  %v2218 = vpop.f32.mrf.mxu0
  %v2219 = vpop.f32.mrf.mxu0
  %v2220 = vadd.f32 0.0, %v2219
  %v2221 = vpop.f32.mrf.mxu0
  %2222 = vmatprep.mubr.bf16.mxu0 0
  %2223 = vmatmul.mubr.bf16.gmra.mxu0 %v2164
  %v2224 = vpop.f32.mrf.mxu0
  %v2225 = vadd.f32 0.0, %v2224
  %v2226 = vpop.f32.mrf.mxu0
  %v2227 = vpop.f32.mrf.mxu0
  %v2228 = vadd.f32 0.0, %v2227
  %v2229 = vpop.f32.mrf.mxu0
  %2230 = vdwg.mxu0
  %2231 = vrot.lane.b32.xlu0 %v520, 64
  %v2232 = vpop.permute.xlu0 %2231
  %2233 = vrot.lane.b32.xlu0 %v521, 64
  %v2234 = vpop.permute.xlu0 %2233
  %2235 = vrot.lane.b32.xlu0 %v522, 64
  %v2236 = vpop.permute.xlu0 %2235
  %2237 = vrot.lane.b32.xlu0 %v523, 64
  %v2238 = vpop.permute.xlu0 %2237
  %v2244 = vsel %vm1469, %v2114, 0
  %v2247 = vsel %vm1469, %v2115, 0
  %v2250 = vsel %vm1469, %v2116, 0
  %v2253 = vsel %vm1469, %v2117, 0
  %2255 = vmatprep.subr.bf16.mxu0 0
  %2256 = vmatpush1.bf16.msra.mxu0 0
  %2257 = vmatprep.subr.bf16.mxu0 0
  %2258 = vmatpush1.bf16.msra.mxu0 0
  %2259 = vmatprep.subr.bf16.mxu0 0
  %2260 = vmatpush1.bf16.msra.mxu0 0
  %2261 = vmatprep.subr.bf16.mxu0 0
  %2262 = vmatpush1.bf16.msra.mxu0 0
  %2263 = vmatprep.subr.bf16.mxu0 0
  %2264 = vmatpush1.bf16.msra.mxu0 %v2238
  %2265 = vmatprep.subr.bf16.mxu0 0
  %2266 = vmatpush1.bf16.msra.mxu0 %v2236
  %2267 = vmatprep.subr.bf16.mxu0 0
  %2268 = vmatpush1.bf16.msra.mxu0 %v2234
  %2269 = vmatprep.subr.bf16.mxu0 0
  %2270 = vmatpush1.bf16.msra.mxu0 %v2232
  %2271 = vmatprep.subr.bf16.mxu0 0
  %2272 = vmatpush2.bf16.msra.mxu0 0
  %2273 = vmatprep.subr.bf16.mxu0 0
  %2274 = vmatpush2.bf16.msra.mxu0 0
  %2275 = vmatprep.subr.bf16.mxu0 0
  %2276 = vmatpush2.bf16.msra.mxu0 0
  %2277 = vmatprep.subr.bf16.mxu0 0
  %2278 = vmatpush2.bf16.msra.mxu0 0
  %2279 = vmatprep.subr.bf16.mxu0 0
  %2280 = vmatpush2.bf16.msra.mxu0 0
  %2281 = vmatprep.subr.bf16.mxu0 0
  %2282 = vmatpush2.bf16.msra.mxu0 0
  %2283 = vmatprep.subr.bf16.mxu0 0
  %2284 = vmatpush2.bf16.msra.mxu0 0
  %2285 = vmatprep.subr.bf16.mxu0 0
  %2286 = vmatpush2.bf16.msra.mxu0 0
  %2287 = vmatprep.mubr.bf16.mxu0 0
  %2288 = vmatmul.mubr.bf16.gmra.mxu0 %v2244
  %v2289 = vpop.f32.mrf.mxu0
  %v2290 = vadd.f32 0.0, %v2289
  %v2291 = vpop.f32.mrf.mxu0
  %v2292 = vpop.f32.mrf.mxu0
  %v2293 = vadd.f32 0.0, %v2292
  %v2294 = vpop.f32.mrf.mxu0
  %2295 = vmatprep.mubr.bf16.mxu0 0
  %2296 = vmatmul.mubr.bf16.gmra.mxu0 %v2247
  %v2297 = vpop.f32.mrf.mxu0
  %v2298 = vadd.f32 0.0, %v2297
  %v2299 = vpop.f32.mrf.mxu0
  %v2300 = vpop.f32.mrf.mxu0
  %v2301 = vadd.f32 0.0, %v2300
  %v2302 = vpop.f32.mrf.mxu0
  %2303 = vmatprep.mubr.bf16.mxu0 0
  %2304 = vmatmul.mubr.bf16.gmra.mxu0 %v2250
  %v2305 = vpop.f32.mrf.mxu0
  %v2306 = vadd.f32 0.0, %v2305
  %v2307 = vpop.f32.mrf.mxu0
  %v2308 = vpop.f32.mrf.mxu0
  %v2309 = vadd.f32 0.0, %v2308
  %v2310 = vpop.f32.mrf.mxu0
  %2311 = vmatprep.mubr.bf16.mxu0 0
  %2312 = vmatmul.mubr.bf16.gmra.mxu0 %v2253
  %v2313 = vpop.f32.mrf.mxu0
  %v2314 = vadd.f32 0.0, %v2313
  %v2315 = vpop.f32.mrf.mxu0
  %v2316 = vpop.f32.mrf.mxu0
  %v2317 = vadd.f32 0.0, %v2316
  %v2318 = vpop.f32.mrf.mxu0
  %2319 = vdwg.mxu0
  %2320 = vrot.lane.b32.xlu0 %v645, 64
  %v2321 = vpop.permute.xlu0 %2320
  %2322 = vrot.lane.b32.xlu0 %v647, 64
  %v2323 = vpop.permute.xlu0 %2322
  %2324 = vrot.lane.b32.xlu0 %v649, 64
  %v2325 = vpop.permute.xlu0 %2324
  %2326 = vrot.lane.b32.xlu0 %v651, 64
  %v2327 = vpop.permute.xlu0 %2326
  %v2333 = vsel %vm1469, %v2118, 0
  %v2336 = vsel %vm1469, %v2119, 0
  %v2339 = vsel %vm1469, %v2120, 0
  %v2342 = vsel %vm1469, %v2121, 0
  %2344 = vmatprep.subr.bf16.mxu0 0
  %2345 = vmatpush1.bf16.msra.mxu0 0
  %2346 = vmatprep.subr.bf16.mxu0 0
  %2347 = vmatpush1.bf16.msra.mxu0 0
  %2348 = vmatprep.subr.bf16.mxu0 0
  %2349 = vmatpush1.bf16.msra.mxu0 0
  %2350 = vmatprep.subr.bf16.mxu0 0
  %2351 = vmatpush1.bf16.msra.mxu0 0
  %2352 = vmatprep.subr.bf16.mxu0 0
  %2353 = vmatpush1.bf16.msra.mxu0 %v2327
  %2354 = vmatprep.subr.bf16.mxu0 0
  %2355 = vmatpush1.bf16.msra.mxu0 %v2325
  %2356 = vmatprep.subr.bf16.mxu0 0
  %2357 = vmatpush1.bf16.msra.mxu0 %v2323
  %2358 = vmatprep.subr.bf16.mxu0 0
  %2359 = vmatpush1.bf16.msra.mxu0 %v2321
  %2360 = vmatprep.subr.bf16.mxu0 0
  %2361 = vmatpush2.bf16.msra.mxu0 0
  %2362 = vmatprep.subr.bf16.mxu0 0
  %2363 = vmatpush2.bf16.msra.mxu0 0
  %2364 = vmatprep.subr.bf16.mxu0 0
  %2365 = vmatpush2.bf16.msra.mxu0 0
  %2366 = vmatprep.subr.bf16.mxu0 0
  %2367 = vmatpush2.bf16.msra.mxu0 0
  %2368 = vmatprep.subr.bf16.mxu0 0
  %2369 = vmatpush2.bf16.msra.mxu0 0
  %2370 = vmatprep.subr.bf16.mxu0 0
  %2371 = vmatpush2.bf16.msra.mxu0 0
  %2372 = vmatprep.subr.bf16.mxu0 0
  %2373 = vmatpush2.bf16.msra.mxu0 0
  %2374 = vmatprep.subr.bf16.mxu0 0
  %2375 = vmatpush2.bf16.msra.mxu0 0
  %2376 = vmatprep.mubr.bf16.mxu0 0
  %2377 = vmatmul.mubr.bf16.gmra.mxu0 %v2333
  %v2378 = vpop.f32.mrf.mxu0
  %v2379 = vadd.f32 0.0, %v2378
  %v2380 = vpop.f32.mrf.mxu0
  %v2381 = vpop.f32.mrf.mxu0
  %v2382 = vadd.f32 0.0, %v2381
  %v2383 = vpop.f32.mrf.mxu0
  %2384 = vmatprep.mubr.bf16.mxu0 0
  %2385 = vmatmul.mubr.bf16.gmra.mxu0 %v2336
  %v2386 = vpop.f32.mrf.mxu0
  %v2387 = vadd.f32 0.0, %v2386
  %v2388 = vpop.f32.mrf.mxu0
  %v2389 = vpop.f32.mrf.mxu0
  %v2390 = vadd.f32 0.0, %v2389
  %v2391 = vpop.f32.mrf.mxu0
  %2392 = vmatprep.mubr.bf16.mxu0 0
  %2393 = vmatmul.mubr.bf16.gmra.mxu0 %v2339
  %v2394 = vpop.f32.mrf.mxu0
  %v2395 = vadd.f32 0.0, %v2394
  %v2396 = vpop.f32.mrf.mxu0
  %v2397 = vpop.f32.mrf.mxu0
  %v2398 = vadd.f32 0.0, %v2397
  %v2399 = vpop.f32.mrf.mxu0
  %2400 = vmatprep.mubr.bf16.mxu0 0
  %2401 = vmatmul.mubr.bf16.gmra.mxu0 %v2342
  %v2402 = vpop.f32.mrf.mxu0
  %v2403 = vadd.f32 0.0, %v2402
  %v2404 = vpop.f32.mrf.mxu0
  %v2405 = vpop.f32.mrf.mxu0
  %v2406 = vadd.f32 0.0, %v2405
  %v2407 = vpop.f32.mrf.mxu0
  %2408 = vdwg.mxu0
  %2409 = vrot.lane.b32.xlu0 %v653, 64
  %v2410 = vpop.permute.xlu0 %2409
  %2411 = vrot.lane.b32.xlu0 %v655, 64
  %v2412 = vpop.permute.xlu0 %2411
  %2413 = vrot.lane.b32.xlu0 %v657, 64
  %v2414 = vpop.permute.xlu0 %2413
  %2415 = vrot.lane.b32.xlu0 %v659, 64
  %v2416 = vpop.permute.xlu0 %2415
  %v2422 = vsel %vm1469, %v2122, 0
  %v2425 = vsel %vm1469, %v2123, 0
  %v2428 = vsel %vm1469, %v2124, 0
  %v2431 = vsel %vm1469, %v2125, 0
  %2433 = vmatprep.subr.bf16.mxu0 0
  %2434 = vmatpush1.bf16.msra.mxu0 0
  %2435 = vmatprep.subr.bf16.mxu0 0
  %2436 = vmatpush1.bf16.msra.mxu0 0
  %2437 = vmatprep.subr.bf16.mxu0 0
  %2438 = vmatpush1.bf16.msra.mxu0 0
  %2439 = vmatprep.subr.bf16.mxu0 0
  %2440 = vmatpush1.bf16.msra.mxu0 0
  %2441 = vmatprep.subr.bf16.mxu0 0
  %2442 = vmatpush1.bf16.msra.mxu0 %v2416
  %2443 = vmatprep.subr.bf16.mxu0 0
  %2444 = vmatpush1.bf16.msra.mxu0 %v2414
  %2445 = vmatprep.subr.bf16.mxu0 0
  %2446 = vmatpush1.bf16.msra.mxu0 %v2412
  %2447 = vmatprep.subr.bf16.mxu0 0
  %2448 = vmatpush1.bf16.msra.mxu0 %v2410
  %2449 = vmatprep.subr.bf16.mxu0 0
  %2450 = vmatpush2.bf16.msra.mxu0 0
  %2451 = vmatprep.subr.bf16.mxu0 0
  %2452 = vmatpush2.bf16.msra.mxu0 0
  %2453 = vmatprep.subr.bf16.mxu0 0
  %2454 = vmatpush2.bf16.msra.mxu0 0
  %2455 = vmatprep.subr.bf16.mxu0 0
  %2456 = vmatpush2.bf16.msra.mxu0 0
  %2457 = vmatprep.subr.bf16.mxu0 0
  %2458 = vmatpush2.bf16.msra.mxu0 0
  %2459 = vmatprep.subr.bf16.mxu0 0
  %2460 = vmatpush2.bf16.msra.mxu0 0
  %2461 = vmatprep.subr.bf16.mxu0 0
  %2462 = vmatpush2.bf16.msra.mxu0 0
  %2463 = vmatprep.subr.bf16.mxu0 0
  %2464 = vmatpush2.bf16.msra.mxu0 0
  %2465 = vmatprep.mubr.bf16.mxu0 0
  %2466 = vmatmul.mubr.bf16.gmra.mxu0 %v2422
  %v2467 = vpop.f32.mrf.mxu0
  %v2468 = vadd.f32 0.0, %v2467
  %v2469 = vpop.f32.mrf.mxu0
  %v2470 = vpop.f32.mrf.mxu0
  %v2471 = vadd.f32 0.0, %v2470
  %v2472 = vpop.f32.mrf.mxu0
  %2473 = vmatprep.mubr.bf16.mxu0 0
  %2474 = vmatmul.mubr.bf16.gmra.mxu0 %v2425
  %v2475 = vpop.f32.mrf.mxu0
  %v2476 = vadd.f32 0.0, %v2475
  %v2477 = vpop.f32.mrf.mxu0
  %v2478 = vpop.f32.mrf.mxu0
  %v2479 = vadd.f32 0.0, %v2478
  %v2480 = vpop.f32.mrf.mxu0
  %2481 = vmatprep.mubr.bf16.mxu0 0
  %2482 = vmatmul.mubr.bf16.gmra.mxu0 %v2428
  %v2483 = vpop.f32.mrf.mxu0
  %v2484 = vadd.f32 0.0, %v2483
  %v2485 = vpop.f32.mrf.mxu0
  %v2486 = vpop.f32.mrf.mxu0
  %v2487 = vadd.f32 0.0, %v2486
  %v2488 = vpop.f32.mrf.mxu0
  %2489 = vmatprep.mubr.bf16.mxu0 0
  %2490 = vmatmul.mubr.bf16.gmra.mxu0 %v2431
  %v2491 = vpop.f32.mrf.mxu0
  %v2492 = vadd.f32 0.0, %v2491
  %v2493 = vpop.f32.mrf.mxu0
  %v2494 = vpop.f32.mrf.mxu0
  %v2495 = vadd.f32 0.0, %v2494
  %v2496 = vpop.f32.mrf.mxu0
  %2497 = vdwg.mxu0
  %2498 = vrot.lane.b32.xlu0 %v661, 64
  %v2499 = vpop.permute.xlu0 %2498
  %2500 = vrot.lane.b32.xlu0 %v663, 64
  %v2501 = vpop.permute.xlu0 %2500
  %2502 = vrot.lane.b32.xlu0 %v665, 64
  %v2503 = vpop.permute.xlu0 %2502
  %2504 = vrot.lane.b32.xlu0 %v667, 64
  %v2505 = vpop.permute.xlu0 %2504
  %v2511 = vsel %vm1469, %v2126, 0
  %v2514 = vsel %vm1469, %v2127, 0
  %v2517 = vsel %vm1469, %v2128, 0
  %v2520 = vsel %vm1469, %v2129, 0
  %2522 = vmatprep.subr.bf16.mxu0 0
  %2523 = vmatpush1.bf16.msra.mxu0 0
  %2524 = vmatprep.subr.bf16.mxu0 0
  %2525 = vmatpush1.bf16.msra.mxu0 0
  %2526 = vmatprep.subr.bf16.mxu0 0
  %2527 = vmatpush1.bf16.msra.mxu0 0
  %2528 = vmatprep.subr.bf16.mxu0 0
  %2529 = vmatpush1.bf16.msra.mxu0 0
  %2530 = vmatprep.subr.bf16.mxu0 0
  %2531 = vmatpush1.bf16.msra.mxu0 %v2505
  %2532 = vmatprep.subr.bf16.mxu0 0
  %2533 = vmatpush1.bf16.msra.mxu0 %v2503
  %2534 = vmatprep.subr.bf16.mxu0 0
  %2535 = vmatpush1.bf16.msra.mxu0 %v2501
  %2536 = vmatprep.subr.bf16.mxu0 0
  %2537 = vmatpush1.bf16.msra.mxu0 %v2499
  %2538 = vmatprep.subr.bf16.mxu0 0
  %2539 = vmatpush2.bf16.msra.mxu0 0
  %2540 = vmatprep.subr.bf16.mxu0 0
  %2541 = vmatpush2.bf16.msra.mxu0 0
  %2542 = vmatprep.subr.bf16.mxu0 0
  %2543 = vmatpush2.bf16.msra.mxu0 0
  %2544 = vmatprep.subr.bf16.mxu0 0
  %2545 = vmatpush2.bf16.msra.mxu0 0
  %2546 = vmatprep.subr.bf16.mxu0 0
  %2547 = vmatpush2.bf16.msra.mxu0 0
  %2548 = vmatprep.subr.bf16.mxu0 0
  %2549 = vmatpush2.bf16.msra.mxu0 0
  %2550 = vmatprep.subr.bf16.mxu0 0
  %2551 = vmatpush2.bf16.msra.mxu0 0
  %2552 = vmatprep.subr.bf16.mxu0 0
  %2553 = vmatpush2.bf16.msra.mxu0 0
  %2554 = vmatprep.mubr.bf16.mxu0 0
  %2555 = vmatmul.mubr.bf16.gmra.mxu0 %v2511
  %v2556 = vpop.f32.mrf.mxu0
  %v2557 = vadd.f32 0.0, %v2556
  %v2558 = vpop.f32.mrf.mxu0
  %v2559 = vpop.f32.mrf.mxu0
  %v2560 = vadd.f32 0.0, %v2559
  %v2561 = vpop.f32.mrf.mxu0
  %2562 = vmatprep.mubr.bf16.mxu0 0
  %2563 = vmatmul.mubr.bf16.gmra.mxu0 %v2514
  %v2564 = vpop.f32.mrf.mxu0
  %v2565 = vadd.f32 0.0, %v2564
  %v2566 = vpop.f32.mrf.mxu0
  %v2567 = vpop.f32.mrf.mxu0
  %v2568 = vadd.f32 0.0, %v2567
  %v2569 = vpop.f32.mrf.mxu0
  %2570 = vmatprep.mubr.bf16.mxu0 0
  %2571 = vmatmul.mubr.bf16.gmra.mxu0 %v2517
  %v2572 = vpop.f32.mrf.mxu0
  %v2573 = vadd.f32 0.0, %v2572
  %v2574 = vpop.f32.mrf.mxu0
  %v2575 = vpop.f32.mrf.mxu0
  %v2576 = vadd.f32 0.0, %v2575
  %v2577 = vpop.f32.mrf.mxu0
  %2578 = vmatprep.mubr.bf16.mxu0 0
  %2579 = vmatmul.mubr.bf16.gmra.mxu0 %v2520
  %v2580 = vpop.f32.mrf.mxu0
  %v2581 = vadd.f32 0.0, %v2580
  %v2582 = vpop.f32.mrf.mxu0
  %v2583 = vpop.f32.mrf.mxu0
  %v2584 = vadd.f32 0.0, %v2583
  %v2585 = vpop.f32.mrf.mxu0
  %2586 = vdwg.mxu0
  %2587 = vrot.lane.b32.xlu0 %v669, 64
  %v2588 = vpop.permute.xlu0 %2587
  %2589 = vrot.lane.b32.xlu0 %v671, 64
  %v2590 = vpop.permute.xlu0 %2589
  %2591 = vrot.lane.b32.xlu0 %v673, 64
  %v2592 = vpop.permute.xlu0 %2591
  %2593 = vrot.lane.b32.xlu0 %v675, 64
  %v2594 = vpop.permute.xlu0 %2593
  %v2600 = vsel %vm1469, %v2130, 0
  %v2603 = vsel %vm1469, %v2131, 0
  %v2606 = vsel %vm1469, %v2132, 0
  %v2609 = vsel %vm1469, %v2133, 0
  %2611 = vmatprep.subr.bf16.mxu0 0
  %2612 = vmatpush1.bf16.msra.mxu0 0
  %2613 = vmatprep.subr.bf16.mxu0 0
  %2614 = vmatpush1.bf16.msra.mxu0 0
  %2615 = vmatprep.subr.bf16.mxu0 0
  %2616 = vmatpush1.bf16.msra.mxu0 0
  %2617 = vmatprep.subr.bf16.mxu0 0
  %2618 = vmatpush1.bf16.msra.mxu0 0
  %2619 = vmatprep.subr.bf16.mxu0 0
  %2620 = vmatpush1.bf16.msra.mxu0 %v2594
  %2621 = vmatprep.subr.bf16.mxu0 0
  %2622 = vmatpush1.bf16.msra.mxu0 %v2592
  %2623 = vmatprep.subr.bf16.mxu0 0
  %2624 = vmatpush1.bf16.msra.mxu0 %v2590
  %2625 = vmatprep.subr.bf16.mxu0 0
  %2626 = vmatpush1.bf16.msra.mxu0 %v2588
  %2627 = vmatprep.subr.bf16.mxu0 0
  %2628 = vmatpush2.bf16.msra.mxu0 0
  %2629 = vmatprep.subr.bf16.mxu0 0
  %2630 = vmatpush2.bf16.msra.mxu0 0
  %2631 = vmatprep.subr.bf16.mxu0 0
  %2632 = vmatpush2.bf16.msra.mxu0 0
  %2633 = vmatprep.subr.bf16.mxu0 0
  %2634 = vmatpush2.bf16.msra.mxu0 0
  %2635 = vmatprep.subr.bf16.mxu0 0
  %2636 = vmatpush2.bf16.msra.mxu0 0
  %2637 = vmatprep.subr.bf16.mxu0 0
  %2638 = vmatpush2.bf16.msra.mxu0 0
  %2639 = vmatprep.subr.bf16.mxu0 0
  %2640 = vmatpush2.bf16.msra.mxu0 0
  %2641 = vmatprep.subr.bf16.mxu0 0
  %2642 = vmatpush2.bf16.msra.mxu0 0
  %2643 = vmatprep.mubr.bf16.mxu0 0
  %2644 = vmatmul.mubr.bf16.gmra.mxu0 %v2600
  %v2645 = vpop.f32.mrf.mxu0
  %v2646 = vadd.f32 0.0, %v2645
  %v2647 = vpop.f32.mrf.mxu0
  %v2648 = vpop.f32.mrf.mxu0
  %v2649 = vadd.f32 0.0, %v2648
  %v2650 = vpop.f32.mrf.mxu0
  %2651 = vmatprep.mubr.bf16.mxu0 0
  %2652 = vmatmul.mubr.bf16.gmra.mxu0 %v2603
  %v2653 = vpop.f32.mrf.mxu0
  %v2654 = vadd.f32 0.0, %v2653
  %v2655 = vpop.f32.mrf.mxu0
  %v2656 = vpop.f32.mrf.mxu0
  %v2657 = vadd.f32 0.0, %v2656
  %v2658 = vpop.f32.mrf.mxu0
  %2659 = vmatprep.mubr.bf16.mxu0 0
  %2660 = vmatmul.mubr.bf16.gmra.mxu0 %v2606
  %v2661 = vpop.f32.mrf.mxu0
  %v2662 = vadd.f32 0.0, %v2661
  %v2663 = vpop.f32.mrf.mxu0
  %v2664 = vpop.f32.mrf.mxu0
  %v2665 = vadd.f32 0.0, %v2664
  %v2666 = vpop.f32.mrf.mxu0
  %2667 = vmatprep.mubr.bf16.mxu0 0
  %2668 = vmatmul.mubr.bf16.gmra.mxu0 %v2609
  %v2669 = vpop.f32.mrf.mxu0
  %v2670 = vadd.f32 0.0, %v2669
  %v2671 = vpop.f32.mrf.mxu0
  %v2672 = vpop.f32.mrf.mxu0
  %v2673 = vadd.f32 0.0, %v2672
  %v2674 = vpop.f32.mrf.mxu0
  %2675 = vdwg.mxu0
  %2676 = vrot.lane.b32.xlu0 %v677, 64
  %v2677 = vpop.permute.xlu0 %2676
  %2678 = vrot.lane.b32.xlu0 %v679, 64
  %v2679 = vpop.permute.xlu0 %2678
  %2680 = vrot.lane.b32.xlu0 %v681, 64
  %v2681 = vpop.permute.xlu0 %2680
  %2682 = vrot.lane.b32.xlu0 %v683, 64
  %v2683 = vpop.permute.xlu0 %2682
  %v2689 = vsel %vm1469, %v2134, 0
  %v2692 = vsel %vm1469, %v2135, 0
  %v2695 = vsel %vm1469, %v2136, 0
  %v2698 = vsel %vm1469, %v2137, 0
  %2700 = vmatprep.subr.bf16.mxu0 0
  %2701 = vmatpush1.bf16.msra.mxu0 0
  %2702 = vmatprep.subr.bf16.mxu0 0
  %2703 = vmatpush1.bf16.msra.mxu0 0
  %2704 = vmatprep.subr.bf16.mxu0 0
  %2705 = vmatpush1.bf16.msra.mxu0 0
  %2706 = vmatprep.subr.bf16.mxu0 0
  %2707 = vmatpush1.bf16.msra.mxu0 0
  %2708 = vmatprep.subr.bf16.mxu0 0
  %2709 = vmatpush1.bf16.msra.mxu0 %v2683
  %2710 = vmatprep.subr.bf16.mxu0 0
  %2711 = vmatpush1.bf16.msra.mxu0 %v2681
  %2712 = vmatprep.subr.bf16.mxu0 0
  %2713 = vmatpush1.bf16.msra.mxu0 %v2679
  %2714 = vmatprep.subr.bf16.mxu0 0
  %2715 = vmatpush1.bf16.msra.mxu0 %v2677
  %2716 = vmatprep.subr.bf16.mxu0 0
  %2717 = vmatpush2.bf16.msra.mxu0 0
  %2718 = vmatprep.subr.bf16.mxu0 0
  %2719 = vmatpush2.bf16.msra.mxu0 0
  %2720 = vmatprep.subr.bf16.mxu0 0
  %2721 = vmatpush2.bf16.msra.mxu0 0
  %2722 = vmatprep.subr.bf16.mxu0 0
  %2723 = vmatpush2.bf16.msra.mxu0 0
  %2724 = vmatprep.subr.bf16.mxu0 0
  %2725 = vmatpush2.bf16.msra.mxu0 0
  %2726 = vmatprep.subr.bf16.mxu0 0
  %2727 = vmatpush2.bf16.msra.mxu0 0
  %2728 = vmatprep.subr.bf16.mxu0 0
  %2729 = vmatpush2.bf16.msra.mxu0 0
  %2730 = vmatprep.subr.bf16.mxu0 0
  %2731 = vmatpush2.bf16.msra.mxu0 0
  %2732 = vmatprep.mubr.bf16.mxu0 0
  %2733 = vmatmul.mubr.bf16.gmra.mxu0 %v2689
  %v2734 = vpop.f32.mrf.mxu0
  %v2735 = vadd.f32 0.0, %v2734
  %v2736 = vpop.f32.mrf.mxu0
  %v2737 = vpop.f32.mrf.mxu0
  %v2738 = vadd.f32 0.0, %v2737
  %v2739 = vpop.f32.mrf.mxu0
  %2740 = vmatprep.mubr.bf16.mxu0 0
  %2741 = vmatmul.mubr.bf16.gmra.mxu0 %v2692
  %v2742 = vpop.f32.mrf.mxu0
  %v2743 = vadd.f32 0.0, %v2742
  %v2744 = vpop.f32.mrf.mxu0
  %v2745 = vpop.f32.mrf.mxu0
  %v2746 = vadd.f32 0.0, %v2745
  %v2747 = vpop.f32.mrf.mxu0
  %2748 = vmatprep.mubr.bf16.mxu0 0
  %2749 = vmatmul.mubr.bf16.gmra.mxu0 %v2695
  %v2750 = vpop.f32.mrf.mxu0
  %v2751 = vadd.f32 0.0, %v2750
  %v2752 = vpop.f32.mrf.mxu0
  %v2753 = vpop.f32.mrf.mxu0
  %v2754 = vadd.f32 0.0, %v2753
  %v2755 = vpop.f32.mrf.mxu0
  %2756 = vmatprep.mubr.bf16.mxu0 0
  %2757 = vmatmul.mubr.bf16.gmra.mxu0 %v2698
  %v2758 = vpop.f32.mrf.mxu0
  %v2759 = vadd.f32 0.0, %v2758
  %v2760 = vpop.f32.mrf.mxu0
  %v2761 = vpop.f32.mrf.mxu0
  %v2762 = vadd.f32 0.0, %v2761
  %v2763 = vpop.f32.mrf.mxu0
  %2764 = vdwg.mxu0
  %2765 = vrot.lane.b32.xlu0 %v685, 64
  %v2766 = vpop.permute.xlu0 %2765
  %2767 = vrot.lane.b32.xlu0 %v687, 64
  %v2768 = vpop.permute.xlu0 %2767
  %2769 = vrot.lane.b32.xlu0 %v689, 64
  %v2770 = vpop.permute.xlu0 %2769
  %2771 = vrot.lane.b32.xlu0 %v691, 64
  %v2772 = vpop.permute.xlu0 %2771
  %v2778 = vsel %vm1469, %v2138, 0
  %v2781 = vsel %vm1469, %v2139, 0
  %v2784 = vsel %vm1469, %v2140, 0
  %v2787 = vsel %vm1469, %v2141, 0
  %2789 = vmatprep.subr.bf16.mxu0 0
  %2790 = vmatpush1.bf16.msra.mxu0 0
  %2791 = vmatprep.subr.bf16.mxu0 0
  %2792 = vmatpush1.bf16.msra.mxu0 0
  %2793 = vmatprep.subr.bf16.mxu0 0
  %2794 = vmatpush1.bf16.msra.mxu0 0
  %2795 = vmatprep.subr.bf16.mxu0 0
  %2796 = vmatpush1.bf16.msra.mxu0 0
  %2797 = vmatprep.subr.bf16.mxu0 0
  %2798 = vmatpush1.bf16.msra.mxu0 %v2772
  %2799 = vmatprep.subr.bf16.mxu0 0
  %2800 = vmatpush1.bf16.msra.mxu0 %v2770
  %2801 = vmatprep.subr.bf16.mxu0 0
  %2802 = vmatpush1.bf16.msra.mxu0 %v2768
  %2803 = vmatprep.subr.bf16.mxu0 0
  %2804 = vmatpush1.bf16.msra.mxu0 %v2766
  %2805 = vmatprep.subr.bf16.mxu0 0
  %2806 = vmatpush2.bf16.msra.mxu0 0
  %2807 = vmatprep.subr.bf16.mxu0 0
  %2808 = vmatpush2.bf16.msra.mxu0 0
  %2809 = vmatprep.subr.bf16.mxu0 0
  %2810 = vmatpush2.bf16.msra.mxu0 0
  %2811 = vmatprep.subr.bf16.mxu0 0
  %2812 = vmatpush2.bf16.msra.mxu0 0
  %2813 = vmatprep.subr.bf16.mxu0 0
  %2814 = vmatpush2.bf16.msra.mxu0 0
  %2815 = vmatprep.subr.bf16.mxu0 0
  %2816 = vmatpush2.bf16.msra.mxu0 0
  %2817 = vmatprep.subr.bf16.mxu0 0
  %2818 = vmatpush2.bf16.msra.mxu0 0
  %2819 = vmatprep.subr.bf16.mxu0 0
  %2820 = vmatpush2.bf16.msra.mxu0 0
  %2821 = vmatprep.mubr.bf16.mxu0 0
  %2822 = vmatmul.mubr.bf16.gmra.mxu0 %v2778
  %v2823 = vpop.f32.mrf.mxu0
  %v2824 = vadd.f32 0.0, %v2823
  %v2825 = vpop.f32.mrf.mxu0
  %v2826 = vpop.f32.mrf.mxu0
  %v2827 = vadd.f32 0.0, %v2826
  %v2828 = vpop.f32.mrf.mxu0
  %2829 = vmatprep.mubr.bf16.mxu0 0
  %2830 = vmatmul.mubr.bf16.gmra.mxu0 %v2781
  %v2831 = vpop.f32.mrf.mxu0
  %v2832 = vadd.f32 0.0, %v2831
  %v2833 = vpop.f32.mrf.mxu0
  %v2834 = vpop.f32.mrf.mxu0
  %v2835 = vadd.f32 0.0, %v2834
  %v2836 = vpop.f32.mrf.mxu0
  %2837 = vmatprep.mubr.bf16.mxu0 0
  %2838 = vmatmul.mubr.bf16.gmra.mxu0 %v2784
  %v2839 = vpop.f32.mrf.mxu0
  %v2840 = vadd.f32 0.0, %v2839
  %v2841 = vpop.f32.mrf.mxu0
  %v2842 = vpop.f32.mrf.mxu0
  %v2843 = vadd.f32 0.0, %v2842
  %v2844 = vpop.f32.mrf.mxu0
  %2845 = vmatprep.mubr.bf16.mxu0 0
  %2846 = vmatmul.mubr.bf16.gmra.mxu0 %v2787
  %v2847 = vpop.f32.mrf.mxu0
  %v2848 = vadd.f32 0.0, %v2847
  %v2849 = vpop.f32.mrf.mxu0
  %v2850 = vpop.f32.mrf.mxu0
  %v2851 = vadd.f32 0.0, %v2850
  %v2852 = vpop.f32.mrf.mxu0
  %2853 = vdwg.mxu0
  %v2854 = vmul.f32 %v2201, %v2046
  %v2855 = vmul.f32 %v2204, %v2047
  %v2856 = vmul.f32 %v2209, %v2048
  %v2857 = vmul.f32 %v2212, %v2049
  %v2858 = vmul.f32 %v2217, %v2050
  %v2859 = vmul.f32 %v2220, %v2051
  %v2860 = vmul.f32 %v2225, %v2052
  %v2861 = vmul.f32 %v2228, %v2053
  %v2862 = vmul.f32 %v2290, %v2054
  %v2863 = vmul.f32 %v2293, %v2055
  %v2864 = vmul.f32 %v2298, %v2056
  %v2865 = vmul.f32 %v2301, %v2057
  %v2866 = vmul.f32 %v2306, %v2058
  %v2867 = vmul.f32 %v2309, %v2059
  %v2868 = vmul.f32 %v2314, %v2060
  %v2869 = vmul.f32 %v2317, %v2061
  %v2870 = vmul.f32 %v2379, %v2062
  %v2871 = vmul.f32 %v2382, %v2063
  %v2872 = vmul.f32 %v2387, %v2064
  %v2873 = vmul.f32 %v2390, %v2065
  %v2874 = vmul.f32 %v2395, %v2066
  %v2875 = vmul.f32 %v2398, %v2067
  %v2876 = vmul.f32 %v2403, %v2068
  %v2877 = vmul.f32 %v2406, %v2069
  %v2878 = vmul.f32 %v2468, %v2070
  %v2879 = vmul.f32 %v2471, %v2071
  %v2880 = vmul.f32 %v2476, %v2072
  %v2881 = vmul.f32 %v2479, %v2073
  %v2882 = vmul.f32 %v2484, %v2074
  %v2883 = vmul.f32 %v2487, %v2075
  %v2884 = vmul.f32 %v2492, %v2076
  %v2885 = vmul.f32 %v2495, %v2077
  %v2886 = vmul.f32 %v2557, %v2078
  %v2887 = vmul.f32 %v2560, %v2079
  %v2888 = vmul.f32 %v2565, %v2080
  %v2889 = vmul.f32 %v2568, %v2081
  %v2890 = vmul.f32 %v2573, %v2082
  %v2891 = vmul.f32 %v2576, %v2083
  %v2892 = vmul.f32 %v2581, %v2084
  %v2893 = vmul.f32 %v2584, %v2085
  %v2894 = vmul.f32 %v2646, %v2086
  %v2895 = vmul.f32 %v2649, %v2087
  %v2896 = vmul.f32 %v2654, %v2088
  %v2897 = vmul.f32 %v2657, %v2089
  %v2898 = vmul.f32 %v2662, %v2090
  %v2899 = vmul.f32 %v2665, %v2091
  %v2900 = vmul.f32 %v2670, %v2092
  %v2901 = vmul.f32 %v2673, %v2093
  %v2902 = vmul.f32 %v2735, %v2094
  %v2903 = vmul.f32 %v2738, %v2095
  %v2904 = vmul.f32 %v2743, %v2096
  %v2905 = vmul.f32 %v2746, %v2097
  %v2906 = vmul.f32 %v2751, %v2098
  %v2907 = vmul.f32 %v2754, %v2099
  %v2908 = vmul.f32 %v2759, %v2100
  %v2909 = vmul.f32 %v2762, %v2101
  %v2910 = vmul.f32 %v2824, %v2102
  %v2911 = vmul.f32 %v2827, %v2103
  %v2912 = vmul.f32 %v2832, %v2104
  %v2913 = vmul.f32 %v2835, %v2105
  %v2914 = vmul.f32 %v2840, %v2106
  %v2915 = vmul.f32 %v2843, %v2107
  %v2916 = vmul.f32 %v2848, %v2108
  %v2917 = vmul.f32 %v2851, %v2109
  %2926 = vrot.lane.b32.xlu0 %v2870, 8
  %v2927 = vpop.permute.xlu0 %2926
  %2928 = vrot.lane.b32.xlu0 %v2871, 8
  %v2929 = vpop.permute.xlu0 %2928
  %2930 = vrot.lane.b32.xlu0 %v2872, 8
  %v2931 = vpop.permute.xlu0 %2930
  %2932 = vrot.lane.b32.xlu0 %v2873, 8
  %v2933 = vpop.permute.xlu0 %2932
  %2934 = vrot.lane.b32.xlu0 %v2874, 8
  %v2935 = vpop.permute.xlu0 %2934
  %2936 = vrot.lane.b32.xlu0 %v2875, 8
  %v2937 = vpop.permute.xlu0 %2936
  %2938 = vrot.lane.b32.xlu0 %v2876, 8
  %v2939 = vpop.permute.xlu0 %2938
  %2940 = vrot.lane.b32.xlu0 %v2877, 8
  %v2941 = vpop.permute.xlu0 %2940
  %2958 = vrot.lane.b32.xlu0 %v2886, 16
  %v2959 = vpop.permute.xlu0 %2958
  %2960 = vrot.lane.b32.xlu0 %v2887, 16
  %v2961 = vpop.permute.xlu0 %2960
  %2962 = vrot.lane.b32.xlu0 %v2888, 16
  %v2963 = vpop.permute.xlu0 %2962
  %2964 = vrot.lane.b32.xlu0 %v2889, 16
  %v2965 = vpop.permute.xlu0 %2964
  %2966 = vrot.lane.b32.xlu0 %v2890, 16
  %v2967 = vpop.permute.xlu0 %2966
  %2968 = vrot.lane.b32.xlu0 %v2891, 16
  %v2969 = vpop.permute.xlu0 %2968
  %2970 = vrot.lane.b32.xlu0 %v2892, 16
  %v2971 = vpop.permute.xlu0 %2970
  %2972 = vrot.lane.b32.xlu0 %v2893, 16
  %v2973 = vpop.permute.xlu0 %2972
  %2990 = vrot.lane.b32.xlu0 %v2902, 24
  %v2991 = vpop.permute.xlu0 %2990
  %2992 = vrot.lane.b32.xlu0 %v2903, 24
  %v2993 = vpop.permute.xlu0 %2992
  %2994 = vrot.lane.b32.xlu0 %v2904, 24
  %v2995 = vpop.permute.xlu0 %2994
  %2996 = vrot.lane.b32.xlu0 %v2905, 24
  %v2997 = vpop.permute.xlu0 %2996
  %2998 = vrot.lane.b32.xlu0 %v2906, 24
  %v2999 = vpop.permute.xlu0 %2998
  %3000 = vrot.lane.b32.xlu0 %v2907, 24
  %v3001 = vpop.permute.xlu0 %3000
  %3002 = vrot.lane.b32.xlu0 %v2908, 24
  %v3003 = vpop.permute.xlu0 %3002
  %3004 = vrot.lane.b32.xlu0 %v2909, 24
  %v3005 = vpop.permute.xlu0 %3004
  %v3014 = vsel %vm700, %v2854, %v2927
  %v3015 = vsel %vm700, %v2855, %v2929
  %v3016 = vsel %vm700, %v2856, %v2931
  %v3017 = vsel %vm700, %v2857, %v2933
  %v3018 = vsel %vm700, %v2858, %v2935
  %v3019 = vsel %vm700, %v2859, %v2937
  %v3020 = vsel %vm700, %v2860, %v2939
  %v3021 = vsel %vm700, %v2861, %v2941
  %vm3022 = vcmask 130048
  %v3023 = vsel %vm3022, %v3014, %v2959
  %v3024 = vsel %vm3022, %v3015, %v2961
  %v3025 = vsel %vm3022, %v3016, %v2963
  %v3026 = vsel %vm3022, %v3017, %v2965
  %v3027 = vsel %vm3022, %v3018, %v2967
  %v3028 = vsel %vm3022, %v3019, %v2969
  %v3029 = vsel %vm3022, %v3020, %v2971
  %v3030 = vsel %vm3022, %v3021, %v2973
  %vm3031 = vcmask 195584
  %v3032 = vsel %vm3031, %v3023, %v2991
  %v3033 = vsel %vm3031, %v3024, %v2993
  %v3034 = vsel %vm3031, %v3025, %v2995
  %v3035 = vsel %vm3031, %v3026, %v2997
  %v3036 = vsel %vm3031, %v3027, %v2999
  %v3037 = vsel %vm3031, %v3028, %v3001
  %v3038 = vsel %vm3031, %v3029, %v3003
  %v3039 = vsel %vm3031, %v3030, %v3005
  %3048 = vrot.lane.b32.xlu0 %v2878, 8
  %v3049 = vpop.permute.xlu0 %3048
  %3050 = vrot.lane.b32.xlu0 %v2879, 8
  %v3051 = vpop.permute.xlu0 %3050
  %3052 = vrot.lane.b32.xlu0 %v2880, 8
  %v3053 = vpop.permute.xlu0 %3052
  %3054 = vrot.lane.b32.xlu0 %v2881, 8
  %v3055 = vpop.permute.xlu0 %3054
  %3056 = vrot.lane.b32.xlu0 %v2882, 8
  %v3057 = vpop.permute.xlu0 %3056
  %3058 = vrot.lane.b32.xlu0 %v2883, 8
  %v3059 = vpop.permute.xlu0 %3058
  %3060 = vrot.lane.b32.xlu0 %v2884, 8
  %v3061 = vpop.permute.xlu0 %3060
  %3062 = vrot.lane.b32.xlu0 %v2885, 8
  %v3063 = vpop.permute.xlu0 %3062
  %3080 = vrot.lane.b32.xlu0 %v2894, 16
  %v3081 = vpop.permute.xlu0 %3080
  %3082 = vrot.lane.b32.xlu0 %v2895, 16
  %v3083 = vpop.permute.xlu0 %3082
  %3084 = vrot.lane.b32.xlu0 %v2896, 16
  %v3085 = vpop.permute.xlu0 %3084
  %3086 = vrot.lane.b32.xlu0 %v2897, 16
  %v3087 = vpop.permute.xlu0 %3086
  %3088 = vrot.lane.b32.xlu0 %v2898, 16
  %v3089 = vpop.permute.xlu0 %3088
  %3090 = vrot.lane.b32.xlu0 %v2899, 16
  %v3091 = vpop.permute.xlu0 %3090
  %3092 = vrot.lane.b32.xlu0 %v2900, 16
  %v3093 = vpop.permute.xlu0 %3092
  %3094 = vrot.lane.b32.xlu0 %v2901, 16
  %v3095 = vpop.permute.xlu0 %3094
  %3112 = vrot.lane.b32.xlu0 %v2910, 24
  %v3113 = vpop.permute.xlu0 %3112
  %3114 = vrot.lane.b32.xlu0 %v2911, 24
  %v3115 = vpop.permute.xlu0 %3114
  %3116 = vrot.lane.b32.xlu0 %v2912, 24
  %v3117 = vpop.permute.xlu0 %3116
  %3118 = vrot.lane.b32.xlu0 %v2913, 24
  %v3119 = vpop.permute.xlu0 %3118
  %3120 = vrot.lane.b32.xlu0 %v2914, 24
  %v3121 = vpop.permute.xlu0 %3120
  %3122 = vrot.lane.b32.xlu0 %v2915, 24
  %v3123 = vpop.permute.xlu0 %3122
  %3124 = vrot.lane.b32.xlu0 %v2916, 24
  %v3125 = vpop.permute.xlu0 %3124
  %3126 = vrot.lane.b32.xlu0 %v2917, 24
  %v3127 = vpop.permute.xlu0 %3126
  %v3136 = vsel %vm700, %v2862, %v3049
  %v3137 = vsel %vm700, %v2863, %v3051
  %v3138 = vsel %vm700, %v2864, %v3053
  %v3139 = vsel %vm700, %v2865, %v3055
  %v3140 = vsel %vm700, %v2866, %v3057
  %v3141 = vsel %vm700, %v2867, %v3059
  %v3142 = vsel %vm700, %v2868, %v3061
  %v3143 = vsel %vm700, %v2869, %v3063
  %v3144 = vsel %vm3022, %v3136, %v3081
  %v3145 = vsel %vm3022, %v3137, %v3083
  %v3146 = vsel %vm3022, %v3138, %v3085
  %v3147 = vsel %vm3022, %v3139, %v3087
  %v3148 = vsel %vm3022, %v3140, %v3089
  %v3149 = vsel %vm3022, %v3141, %v3091
  %v3150 = vsel %vm3022, %v3142, %v3093
  %v3151 = vsel %vm3022, %v3143, %v3095
  %v3152 = vsel %vm3031, %v3144, %v3113
  %v3153 = vsel %vm3031, %v3145, %v3115
  %v3154 = vsel %vm3031, %v3146, %v3117
  %v3155 = vsel %vm3031, %v3147, %v3119
  %v3156 = vsel %vm3031, %v3148, %v3121
  %v3157 = vsel %vm3031, %v3149, %v3123
  %v3158 = vsel %vm3031, %v3150, %v3125
  %v3159 = vsel %vm3031, %v3151, %v3127
  %v3160 = vpack.c.bf16 %v3033, %v3032
  %v3161 = vpack.c.bf16 %v3035, %v3034
  %v3162 = vpack.c.bf16 %v3037, %v3036
  %v3163 = vpack.c.bf16 %v3039, %v3038
  %v3164 = vpack.c.bf16 %v3153, %v3152
  %v3165 = vpack.c.bf16 %v3155, %v3154
  %v3166 = vpack.c.bf16 %v3157, %v3156
  %v3167 = vpack.c.bf16 %v3159, %v3158
  %v3168 = vlaneseq
  %v3169 = vshrl.u32 %v3168, 7
  %v3170 = vsub.s32 5, %v3169
  %v3171 = vrot.slane %v31, %v3170
  %3172 = vrot.lane.b32.xlu0 %v307, 32
  %v3173 = vpop.permute.xlu0 %3172
  %3174 = vrot.lane.b32.xlu0 %v308, 32
  %v3175 = vpop.permute.xlu0 %3174
  %v3179 = vsel %vm41, %v3160, 0
  %v3182 = vsel %vm41, %v3161, 0
  %v3185 = vsel %vm41, %v3162, 0
  %v3188 = vsel %vm41, %v3163, 0
  %v3191 = vsel %vm41, %v3164, 0
  %v3194 = vsel %vm41, %v3165, 0
  %v3197 = vsel %vm41, %v3166, 0
  %v3200 = vsel %vm41, %v3167, 0
  %3202 = vmatprep.subr.bf16.mxu0 0
  %3203 = vmatpush1.bf16.msra.mxu0 0
  %3204 = vmatprep.subr.bf16.mxu0 0
  %3205 = vmatpush1.bf16.msra.mxu0 0
  %3206 = vmatprep.subr.bf16.mxu0 0
  %3207 = vmatpush1.bf16.msra.mxu0 0
  %3208 = vmatprep.subr.bf16.mxu0 0
  %3209 = vmatpush1.bf16.msra.mxu0 0
  %3210 = vmatprep.subr.bf16.mxu0 0
  %3211 = vmatpush1.bf16.msra.mxu0 0
  %3212 = vmatprep.subr.bf16.mxu0 0
  %3213 = vmatpush1.bf16.msra.mxu0 0
  %3214 = vmatprep.subr.bf16.mxu0 0
  %3215 = vmatpush1.bf16.msra.mxu0 %v3175
  %3216 = vmatprep.subr.bf16.mxu0 0
  %3217 = vmatpush1.bf16.msra.mxu0 %v3173
  %3218 = vmatprep.subr.bf16.mxu0 0
  %3219 = vmatpush2.bf16.msra.mxu0 0
  %3220 = vmatprep.subr.bf16.mxu0 0
  %3221 = vmatpush2.bf16.msra.mxu0 0
  %3222 = vmatprep.subr.bf16.mxu0 0
  %3223 = vmatpush2.bf16.msra.mxu0 0
  %3224 = vmatprep.subr.bf16.mxu0 0
  %3225 = vmatpush2.bf16.msra.mxu0 0
  %3226 = vmatprep.subr.bf16.mxu0 0
  %3227 = vmatpush2.bf16.msra.mxu0 0
  %3228 = vmatprep.subr.bf16.mxu0 0
  %3229 = vmatpush2.bf16.msra.mxu0 0
  %3230 = vmatprep.subr.bf16.mxu0 0
  %3231 = vmatpush2.bf16.msra.mxu0 0
  %3232 = vmatprep.subr.bf16.mxu0 0
  %3233 = vmatpush2.bf16.msra.mxu0 0
  %3234 = vmatprep.mubr.bf16.mxu0 0
  %3235 = vmatmul.mubr.bf16.gmra.mxu0 %v3179
  %v3236 = vpop.f32.mrf.mxu0
  %v3237 = vadd.f32 %v3171, %v3236
  %v3238 = vpop.f32.mrf.mxu0
  %v3239 = vpop.f32.mrf.mxu0
  %v3240 = vadd.f32 %v3171, %v3239
  %v3241 = vpop.f32.mrf.mxu0
  %3242 = vmatprep.mubr.bf16.mxu0 0
  %3243 = vmatmul.mubr.bf16.gmra.mxu0 %v3182
  %v3244 = vpop.f32.mrf.mxu0
  %v3245 = vadd.f32 %v3171, %v3244
  %v3246 = vpop.f32.mrf.mxu0
  %v3247 = vpop.f32.mrf.mxu0
  %v3248 = vadd.f32 %v3171, %v3247
  %v3249 = vpop.f32.mrf.mxu0
  %3250 = vmatprep.mubr.bf16.mxu0 0
  %3251 = vmatmul.mubr.bf16.gmra.mxu0 %v3185
  %v3252 = vpop.f32.mrf.mxu0
  %v3253 = vadd.f32 %v3171, %v3252
  %v3254 = vpop.f32.mrf.mxu0
  %v3255 = vpop.f32.mrf.mxu0
  %v3256 = vadd.f32 %v3171, %v3255
  %v3257 = vpop.f32.mrf.mxu0
  %3258 = vmatprep.mubr.bf16.mxu0 0
  %3259 = vmatmul.mubr.bf16.gmra.mxu0 %v3188
  %v3260 = vpop.f32.mrf.mxu0
  %v3261 = vadd.f32 %v3171, %v3260
  %v3262 = vpop.f32.mrf.mxu0
  %v3263 = vpop.f32.mrf.mxu0
  %v3264 = vadd.f32 %v3171, %v3263
  %v3265 = vpop.f32.mrf.mxu0
  %3266 = vmatprep.mubr.bf16.mxu0 0
  %3267 = vmatmul.mubr.bf16.gmra.mxu0 %v3191
  %v3268 = vpop.f32.mrf.mxu0
  %v3269 = vadd.f32 %v3171, %v3268
  %v3270 = vpop.f32.mrf.mxu0
  %v3271 = vpop.f32.mrf.mxu0
  %v3272 = vadd.f32 %v3171, %v3271
  %v3273 = vpop.f32.mrf.mxu0
  %3274 = vmatprep.mubr.bf16.mxu0 0
  %3275 = vmatmul.mubr.bf16.gmra.mxu0 %v3194
  %v3276 = vpop.f32.mrf.mxu0
  %v3277 = vadd.f32 %v3171, %v3276
  %v3278 = vpop.f32.mrf.mxu0
  %v3279 = vpop.f32.mrf.mxu0
  %v3280 = vadd.f32 %v3171, %v3279
  %v3281 = vpop.f32.mrf.mxu0
  %3282 = vmatprep.mubr.bf16.mxu0 0
  %3283 = vmatmul.mubr.bf16.gmra.mxu0 %v3197
  %v3284 = vpop.f32.mrf.mxu0
  %v3285 = vadd.f32 %v3171, %v3284
  %v3286 = vpop.f32.mrf.mxu0
  %v3287 = vpop.f32.mrf.mxu0
  %v3288 = vadd.f32 %v3171, %v3287
  %v3289 = vpop.f32.mrf.mxu0
  %3290 = vmatprep.mubr.bf16.mxu0 0
  %3291 = vmatmul.mubr.bf16.gmra.mxu0 %v3200
  %v3292 = vpop.f32.mrf.mxu0
  %v3293 = vadd.f32 %v3171, %v3292
  %v3294 = vpop.f32.mrf.mxu0
  %v3295 = vpop.f32.mrf.mxu0
  %v3296 = vadd.f32 %v3171, %v3295
  %v3297 = vpop.f32.mrf.mxu0
  %3298 = vdwg.mxu0
  %v3299 = vadd.f32 %v3237, %v15
  %v3300 = vadd.f32 %v3240, %v16
  %v3301 = vadd.f32 %v3245, %v17
  %v3302 = vadd.f32 %v3248, %v18
  %v3303 = vadd.f32 %v3253, %v19
  %v3304 = vadd.f32 %v3256, %v20
  %v3305 = vadd.f32 %v3261, %v21
  %v3306 = vadd.f32 %v3264, %v22
  %v3307 = vadd.f32 %v3269, %v23
  %v3308 = vadd.f32 %v3272, %v24
  %v3309 = vadd.f32 %v3277, %v25
  %v3310 = vadd.f32 %v3280, %v26
  %v3311 = vadd.f32 %v3285, %v27
  %v3312 = vadd.f32 %v3288, %v28
  %v3313 = vadd.f32 %v3293, %v29
  %v3314 = vadd.f32 %v3296, %v30
  %v3315 = vsel %vm41, %v3299, 0.0
  %3316 = vadd.xlane.f32.xlu0 %v3315
  %v3317 = vpop.xlane.xlu0 %3316
  %v3318 = vsel %vm41, %v3300, 0.0
  %3319 = vadd.xlane.f32.xlu0 %v3318
  %v3320 = vpop.xlane.xlu0 %3319
  %v3321 = vsel %vm41, %v3301, 0.0
  %3322 = vadd.xlane.f32.xlu0 %v3321
  %v3323 = vpop.xlane.xlu0 %3322
  %v3324 = vsel %vm41, %v3302, 0.0
  %3325 = vadd.xlane.f32.xlu0 %v3324
  %v3326 = vpop.xlane.xlu0 %3325
  %v3327 = vsel %vm41, %v3303, 0.0
  %3328 = vadd.xlane.f32.xlu0 %v3327
  %v3329 = vpop.xlane.xlu0 %3328
  %v3330 = vsel %vm41, %v3304, 0.0
  %3331 = vadd.xlane.f32.xlu0 %v3330
  %v3332 = vpop.xlane.xlu0 %3331
  %v3333 = vsel %vm41, %v3305, 0.0
  %3334 = vadd.xlane.f32.xlu0 %v3333
  %v3335 = vpop.xlane.xlu0 %3334
  %v3336 = vsel %vm41, %v3306, 0.0
  %3337 = vadd.xlane.f32.xlu0 %v3336
  %v3338 = vpop.xlane.xlu0 %3337
  %v3339 = vsel %vm41, %v3307, 0.0
  %3340 = vadd.xlane.f32.xlu0 %v3339
  %v3341 = vpop.xlane.xlu0 %3340
  %v3342 = vsel %vm41, %v3308, 0.0
  %3343 = vadd.xlane.f32.xlu0 %v3342
  %v3344 = vpop.xlane.xlu0 %3343
  %v3345 = vsel %vm41, %v3309, 0.0
  %3346 = vadd.xlane.f32.xlu0 %v3345
  %v3347 = vpop.xlane.xlu0 %3346
  %v3348 = vsel %vm41, %v3310, 0.0
  %3349 = vadd.xlane.f32.xlu0 %v3348
  %v3350 = vpop.xlane.xlu0 %3349
  %v3351 = vsel %vm41, %v3311, 0.0
  %3352 = vadd.xlane.f32.xlu0 %v3351
  %v3353 = vpop.xlane.xlu0 %3352
  %v3354 = vsel %vm41, %v3312, 0.0
  %3355 = vadd.xlane.f32.xlu0 %v3354
  %v3356 = vpop.xlane.xlu0 %3355
  %v3357 = vsel %vm41, %v3313, 0.0
  %3358 = vadd.xlane.f32.xlu0 %v3357
  %v3359 = vpop.xlane.xlu0 %3358
  %v3360 = vsel %vm41, %v3314, 0.0
  %3361 = vadd.xlane.f32.xlu0 %v3360
  %v3362 = vpop.xlane.xlu0 %3361
  %v3363 = vmul.f32 %v3317, %v90
  %v3364 = vmul.f32 %v3320, %v90
  %v3365 = vmul.f32 %v3323, %v90
  %v3366 = vmul.f32 %v3326, %v90
  %v3367 = vmul.f32 %v3329, %v90
  %v3368 = vmul.f32 %v3332, %v90
  %v3369 = vmul.f32 %v3335, %v90
  %v3370 = vmul.f32 %v3338, %v90
  %v3371 = vmul.f32 %v3341, %v90
  %v3372 = vmul.f32 %v3344, %v90
  %v3373 = vmul.f32 %v3347, %v90
  %v3374 = vmul.f32 %v3350, %v90
  %v3375 = vmul.f32 %v3353, %v90
  %v3376 = vmul.f32 %v3356, %v90
  %v3377 = vmul.f32 %v3359, %v90
  %v3378 = vmul.f32 %v3362, %v90
  %v3379 = vsub.f32 %v3299, %v3363
  %v3380 = vsub.f32 %v3300, %v3364
  %v3381 = vsub.f32 %v3301, %v3365
  %v3382 = vsub.f32 %v3302, %v3366
  %v3383 = vsub.f32 %v3303, %v3367
  %v3384 = vsub.f32 %v3304, %v3368
  %v3385 = vsub.f32 %v3305, %v3369
  %v3386 = vsub.f32 %v3306, %v3370
  %v3387 = vsub.f32 %v3307, %v3371
  %v3388 = vsub.f32 %v3308, %v3372
  %v3389 = vsub.f32 %v3309, %v3373
  %v3390 = vsub.f32 %v3310, %v3374
  %v3391 = vsub.f32 %v3311, %v3375
  %v3392 = vsub.f32 %v3312, %v3376
  %v3393 = vsub.f32 %v3313, %v3377
  %v3394 = vsub.f32 %v3314, %v3378
  %v3395 = vmul.f32 %v3379, %v3379
  %v3396 = vmul.f32 %v3380, %v3380
  %v3397 = vmul.f32 %v3381, %v3381
  %v3398 = vmul.f32 %v3382, %v3382
  %v3399 = vmul.f32 %v3383, %v3383
  %v3400 = vmul.f32 %v3384, %v3384
  %v3401 = vmul.f32 %v3385, %v3385
  %v3402 = vmul.f32 %v3386, %v3386
  %v3403 = vmul.f32 %v3387, %v3387
  %v3404 = vmul.f32 %v3388, %v3388
  %v3405 = vmul.f32 %v3389, %v3389
  %v3406 = vmul.f32 %v3390, %v3390
  %v3407 = vmul.f32 %v3391, %v3391
  %v3408 = vmul.f32 %v3392, %v3392
  %v3409 = vmul.f32 %v3393, %v3393
  %v3410 = vmul.f32 %v3394, %v3394
  %v3411 = vsel %vm41, %v3395, 0.0
  %3412 = vadd.xlane.f32.xlu0 %v3411
  %v3413 = vpop.xlane.xlu0 %3412
  %v3414 = vsel %vm41, %v3396, 0.0
  %3415 = vadd.xlane.f32.xlu0 %v3414
  %v3416 = vpop.xlane.xlu0 %3415
  %v3417 = vsel %vm41, %v3397, 0.0
  %3418 = vadd.xlane.f32.xlu0 %v3417
  %v3419 = vpop.xlane.xlu0 %3418
  %v3420 = vsel %vm41, %v3398, 0.0
  %3421 = vadd.xlane.f32.xlu0 %v3420
  %v3422 = vpop.xlane.xlu0 %3421
  %v3423 = vsel %vm41, %v3399, 0.0
  %3424 = vadd.xlane.f32.xlu0 %v3423
  %v3425 = vpop.xlane.xlu0 %3424
  %v3426 = vsel %vm41, %v3400, 0.0
  %3427 = vadd.xlane.f32.xlu0 %v3426
  %v3428 = vpop.xlane.xlu0 %3427
  %v3429 = vsel %vm41, %v3401, 0.0
  %3430 = vadd.xlane.f32.xlu0 %v3429
  %v3431 = vpop.xlane.xlu0 %3430
  %v3432 = vsel %vm41, %v3402, 0.0
  %3433 = vadd.xlane.f32.xlu0 %v3432
  %v3434 = vpop.xlane.xlu0 %3433
  %v3435 = vsel %vm41, %v3403, 0.0
  %3436 = vadd.xlane.f32.xlu0 %v3435
  %v3437 = vpop.xlane.xlu0 %3436
  %v3438 = vsel %vm41, %v3404, 0.0
  %3439 = vadd.xlane.f32.xlu0 %v3438
  %v3440 = vpop.xlane.xlu0 %3439
  %v3441 = vsel %vm41, %v3405, 0.0
  %3442 = vadd.xlane.f32.xlu0 %v3441
  %v3443 = vpop.xlane.xlu0 %3442
  %v3444 = vsel %vm41, %v3406, 0.0
  %3445 = vadd.xlane.f32.xlu0 %v3444
  %v3446 = vpop.xlane.xlu0 %3445
  %v3447 = vsel %vm41, %v3407, 0.0
  %3448 = vadd.xlane.f32.xlu0 %v3447
  %v3449 = vpop.xlane.xlu0 %3448
  %v3450 = vsel %vm41, %v3408, 0.0
  %3451 = vadd.xlane.f32.xlu0 %v3450
  %v3452 = vpop.xlane.xlu0 %3451
  %v3453 = vsel %vm41, %v3409, 0.0
  %3454 = vadd.xlane.f32.xlu0 %v3453
  %v3455 = vpop.xlane.xlu0 %3454
  %v3456 = vsel %vm41, %v3410, 0.0
  %3457 = vadd.xlane.f32.xlu0 %v3456
  %v3458 = vpop.xlane.xlu0 %3457
  %v3459 = vmul.f32 %v3413, %v90
  %v3460 = vmul.f32 %v3416, %v90
  %v3461 = vmul.f32 %v3419, %v90
  %v3462 = vmul.f32 %v3422, %v90
  %v3463 = vmul.f32 %v3425, %v90
  %v3464 = vmul.f32 %v3428, %v90
  %v3465 = vmul.f32 %v3431, %v90
  %v3466 = vmul.f32 %v3434, %v90
  %v3467 = vmul.f32 %v3437, %v90
  %v3468 = vmul.f32 %v3440, %v90
  %v3469 = vmul.f32 %v3443, %v90
  %v3470 = vmul.f32 %v3446, %v90
  %v3471 = vmul.f32 %v3449, %v90
  %v3472 = vmul.f32 %v3452, %v90
  %v3473 = vmul.f32 %v3455, %v90
  %v3474 = vmul.f32 %v3458, %v90
  %v3475 = vadd.f32 %v3459, 1e-05
  %v3476 = vadd.f32 %v3460, 1e-05
  %v3477 = vadd.f32 %v3461, 1e-05
  %v3478 = vadd.f32 %v3462, 1e-05
  %v3479 = vadd.f32 %v3463, 1e-05
  %v3480 = vadd.f32 %v3464, 1e-05
  %v3481 = vadd.f32 %v3465, 1e-05
  %v3482 = vadd.f32 %v3466, 1e-05
  %v3483 = vadd.f32 %v3467, 1e-05
  %v3484 = vadd.f32 %v3468, 1e-05
  %v3485 = vadd.f32 %v3469, 1e-05
  %v3486 = vadd.f32 %v3470, 1e-05
  %v3487 = vadd.f32 %v3471, 1e-05
  %v3488 = vadd.f32 %v3472, 1e-05
  %v3489 = vadd.f32 %v3473, 1e-05
  %v3490 = vadd.f32 %v3474, 1e-05
  %v3491 = vrsqrt.pop %v3475
  %v3492 = vrsqrt.pop %v3476
  %v3493 = vrsqrt.pop %v3477
  %v3494 = vrsqrt.pop %v3478
  %v3495 = vrsqrt.pop %v3479
  %v3496 = vrsqrt.pop %v3480
  %v3497 = vrsqrt.pop %v3481
  %v3498 = vrsqrt.pop %v3482
  %v3499 = vrsqrt.pop %v3483
  %v3500 = vrsqrt.pop %v3484
  %v3501 = vrsqrt.pop %v3485
  %v3502 = vrsqrt.pop %v3486
  %v3503 = vrsqrt.pop %v3487
  %v3504 = vrsqrt.pop %v3488
  %v3505 = vrsqrt.pop %v3489
  %v3506 = vrsqrt.pop %v3490
  %v3507 = vmul.f32 %v3379, %v3491
  %v3508 = vmul.f32 %v3380, %v3492
  %v3509 = vmul.f32 %v3381, %v3493
  %v3510 = vmul.f32 %v3382, %v3494
  %v3511 = vmul.f32 %v3383, %v3495
  %v3512 = vmul.f32 %v3384, %v3496
  %v3513 = vmul.f32 %v3385, %v3497
  %v3514 = vmul.f32 %v3386, %v3498
  %v3515 = vmul.f32 %v3387, %v3499
  %v3516 = vmul.f32 %v3388, %v3500
  %v3517 = vmul.f32 %v3389, %v3501
  %v3518 = vmul.f32 %v3390, %v3502
  %v3519 = vmul.f32 %v3391, %v3503
  %v3520 = vmul.f32 %v3392, %v3504
  %v3521 = vmul.f32 %v3393, %v3505
  %v3522 = vmul.f32 %v3394, %v3506
  %v3523 = vlaneseq
  %v3524 = vshrl.u32 %v3523, 7
  %v3525 = vsub.s32 6, %v3524
  %v3526 = vrot.slane %v31, %v3525
  %v3527 = vmul.f32 %v3507, %v3526
  %v3528 = vmul.f32 %v3508, %v3526
  %v3529 = vmul.f32 %v3509, %v3526
  %v3530 = vmul.f32 %v3510, %v3526
  %v3531 = vmul.f32 %v3511, %v3526
  %v3532 = vmul.f32 %v3512, %v3526
  %v3533 = vmul.f32 %v3513, %v3526
  %v3534 = vmul.f32 %v3514, %v3526
  %v3535 = vmul.f32 %v3515, %v3526
  %v3536 = vmul.f32 %v3516, %v3526
  %v3537 = vmul.f32 %v3517, %v3526
  %v3538 = vmul.f32 %v3518, %v3526
  %v3539 = vmul.f32 %v3519, %v3526
  %v3540 = vmul.f32 %v3520, %v3526
  %v3541 = vmul.f32 %v3521, %v3526
  %v3542 = vmul.f32 %v3522, %v3526
  %v3543 = vlaneseq
  %v3544 = vshrl.u32 %v3543, 7
  %v3545 = vsub.s32 7, %v3544
  %v3546 = vrot.slane %v31, %v3545
  %v3547 = vadd.f32 %v3527, %v3546
  %v3548 = vadd.f32 %v3528, %v3546
  %v3549 = vadd.f32 %v3529, %v3546
  %v3550 = vadd.f32 %v3530, %v3546
  %v3551 = vadd.f32 %v3531, %v3546
  %v3552 = vadd.f32 %v3532, %v3546
  %v3553 = vadd.f32 %v3533, %v3546
  %v3554 = vadd.f32 %v3534, %v3546
  %v3555 = vadd.f32 %v3535, %v3546
  %v3556 = vadd.f32 %v3536, %v3546
  %v3557 = vadd.f32 %v3537, %v3546
  %v3558 = vadd.f32 %v3538, %v3546
  %v3559 = vadd.f32 %v3539, %v3546
  %v3560 = vadd.f32 %v3540, %v3546
  %v3561 = vadd.f32 %v3541, %v3546
  %v3562 = vadd.f32 %v3542, %v3546
  %v3563 = vpack.c.bf16 %v3548, %v3547
  %v3564 = vpack.c.bf16 %v3550, %v3549
  %v3565 = vpack.c.bf16 %v3552, %v3551
  %v3566 = vpack.c.bf16 %v3554, %v3553
  %v3567 = vpack.c.bf16 %v3556, %v3555
  %v3568 = vpack.c.bf16 %v3558, %v3557
  %v3569 = vpack.c.bf16 %v3560, %v3559
  %v3570 = vpack.c.bf16 %v3562, %v3561
  %v3571 = vlaneseq
  %v3572 = vshrl.u32 %v3571, 7
  %v3573 = vsub.s32 0, %v3572
  %v3574 = vrot.slane %v32, %v3573
  %v3579 = vunpack.c.l.b16 %v37
  %v3580 = vunpack.c.l.b16 %v38
  %v3581 = vunpack.c.l.b16 %v39
  %v3582 = vunpack.c.l.b16 %v40
  %v3583 = vpack.c.b16 %v3580, %v3579
  %v3584 = vpack.c.b16 %v3582, %v3581
  %v3588 = vsel %vm41, %v3563, 0
  %v3591 = vsel %vm41, %v3564, 0
  %v3594 = vsel %vm41, %v3565, 0
  %v3597 = vsel %vm41, %v3566, 0
  %v3600 = vsel %vm41, %v3567, 0
  %v3603 = vsel %vm41, %v3568, 0
  %v3606 = vsel %vm41, %v3569, 0
  %v3609 = vsel %vm41, %v3570, 0
  %3611 = vmatprep.subr.bf16.mxu0 0
  %3612 = vmatpush1.bf16.msra.mxu0 0
  %3613 = vmatprep.subr.bf16.mxu0 0
  %3614 = vmatpush1.bf16.msra.mxu0 0
  %3615 = vmatprep.subr.bf16.mxu0 0
  %3616 = vmatpush1.bf16.msra.mxu0 0
  %3617 = vmatprep.subr.bf16.mxu0 0
  %3618 = vmatpush1.bf16.msra.mxu0 0
  %3619 = vmatprep.subr.bf16.mxu0 0
  %3620 = vmatpush1.bf16.msra.mxu0 0
  %3621 = vmatprep.subr.bf16.mxu0 0
  %3622 = vmatpush1.bf16.msra.mxu0 0
  %3623 = vmatprep.subr.bf16.mxu0 0
  %3624 = vmatpush1.bf16.msra.mxu0 %v3584
  %3625 = vmatprep.subr.bf16.mxu0 0
  %3626 = vmatpush1.bf16.msra.mxu0 %v3583
  %3627 = vmatprep.subr.bf16.mxu0 0
  %3628 = vmatpush2.bf16.msra.mxu0 0
  %3629 = vmatprep.subr.bf16.mxu0 0
  %3630 = vmatpush2.bf16.msra.mxu0 0
  %3631 = vmatprep.subr.bf16.mxu0 0
  %3632 = vmatpush2.bf16.msra.mxu0 0
  %3633 = vmatprep.subr.bf16.mxu0 0
  %3634 = vmatpush2.bf16.msra.mxu0 0
  %3635 = vmatprep.subr.bf16.mxu0 0
  %3636 = vmatpush2.bf16.msra.mxu0 0
  %3637 = vmatprep.subr.bf16.mxu0 0
  %3638 = vmatpush2.bf16.msra.mxu0 0
  %3639 = vmatprep.subr.bf16.mxu0 0
  %3640 = vmatpush2.bf16.msra.mxu0 0
  %3641 = vmatprep.subr.bf16.mxu0 0
  %3642 = vmatpush2.bf16.msra.mxu0 0
  %3643 = vmatprep.mubr.bf16.mxu0 0
  %3644 = vmatmul.mubr.bf16.gmra.mxu0 %v3588
  %v3645 = vpop.f32.mrf.mxu0
  %v3646 = vadd.f32 %v3574, %v3645
  %v3647 = vpop.f32.mrf.mxu0
  %v3648 = vpop.f32.mrf.mxu0
  %v3649 = vadd.f32 %v3574, %v3648
  %v3650 = vpop.f32.mrf.mxu0
  %3651 = vmatprep.mubr.bf16.mxu0 0
  %3652 = vmatmul.mubr.bf16.gmra.mxu0 %v3591
  %v3653 = vpop.f32.mrf.mxu0
  %v3654 = vadd.f32 %v3574, %v3653
  %v3655 = vpop.f32.mrf.mxu0
  %v3656 = vpop.f32.mrf.mxu0
  %v3657 = vadd.f32 %v3574, %v3656
  %v3658 = vpop.f32.mrf.mxu0
  %3659 = vmatprep.mubr.bf16.mxu0 0
  %3660 = vmatmul.mubr.bf16.gmra.mxu0 %v3594
  %v3661 = vpop.f32.mrf.mxu0
  %v3662 = vadd.f32 %v3574, %v3661
  %v3663 = vpop.f32.mrf.mxu0
  %v3664 = vpop.f32.mrf.mxu0
  %v3665 = vadd.f32 %v3574, %v3664
  %v3666 = vpop.f32.mrf.mxu0
  %3667 = vmatprep.mubr.bf16.mxu0 0
  %3668 = vmatmul.mubr.bf16.gmra.mxu0 %v3597
  %v3669 = vpop.f32.mrf.mxu0
  %v3670 = vadd.f32 %v3574, %v3669
  %v3671 = vpop.f32.mrf.mxu0
  %v3672 = vpop.f32.mrf.mxu0
  %v3673 = vadd.f32 %v3574, %v3672
  %v3674 = vpop.f32.mrf.mxu0
  %3675 = vmatprep.mubr.bf16.mxu0 0
  %3676 = vmatmul.mubr.bf16.gmra.mxu0 %v3600
  %v3677 = vpop.f32.mrf.mxu0
  %v3678 = vadd.f32 %v3574, %v3677
  %v3679 = vpop.f32.mrf.mxu0
  %v3680 = vpop.f32.mrf.mxu0
  %v3681 = vadd.f32 %v3574, %v3680
  %v3682 = vpop.f32.mrf.mxu0
  %3683 = vmatprep.mubr.bf16.mxu0 0
  %3684 = vmatmul.mubr.bf16.gmra.mxu0 %v3603
  %v3685 = vpop.f32.mrf.mxu0
  %v3686 = vadd.f32 %v3574, %v3685
  %v3687 = vpop.f32.mrf.mxu0
  %v3688 = vpop.f32.mrf.mxu0
  %v3689 = vadd.f32 %v3574, %v3688
  %v3690 = vpop.f32.mrf.mxu0
  %3691 = vmatprep.mubr.bf16.mxu0 0
  %3692 = vmatmul.mubr.bf16.gmra.mxu0 %v3606
  %v3693 = vpop.f32.mrf.mxu0
  %v3694 = vadd.f32 %v3574, %v3693
  %v3695 = vpop.f32.mrf.mxu0
  %v3696 = vpop.f32.mrf.mxu0
  %v3697 = vadd.f32 %v3574, %v3696
  %v3698 = vpop.f32.mrf.mxu0
  %3699 = vmatprep.mubr.bf16.mxu0 0
  %3700 = vmatmul.mubr.bf16.gmra.mxu0 %v3609
  %v3701 = vpop.f32.mrf.mxu0
  %v3702 = vadd.f32 %v3574, %v3701
  %v3703 = vpop.f32.mrf.mxu0
  %v3704 = vpop.f32.mrf.mxu0
  %v3705 = vadd.f32 %v3574, %v3704
  %v3706 = vpop.f32.mrf.mxu0
  %3707 = vdwg.mxu0
  %v3708 = vmul.f32 %v3646, 0.5
  %v3709 = vmul.f32 %v3649, 0.5
  %v3710 = vmul.f32 %v3654, 0.5
  %v3711 = vmul.f32 %v3657, 0.5
  %v3712 = vmul.f32 %v3662, 0.5
  %v3713 = vmul.f32 %v3665, 0.5
  %v3714 = vmul.f32 %v3670, 0.5
  %v3715 = vmul.f32 %v3673, 0.5
  %v3716 = vmul.f32 %v3678, 0.5
  %v3717 = vmul.f32 %v3681, 0.5
  %v3718 = vmul.f32 %v3686, 0.5
  %v3719 = vmul.f32 %v3689, 0.5
  %v3720 = vmul.f32 %v3694, 0.5
  %v3721 = vmul.f32 %v3697, 0.5
  %v3722 = vmul.f32 %v3702, 0.5
  %v3723 = vmul.f32 %v3705, 0.5
  %v3724 = vmul.f32 %v3646, 0.70710677
  %v3725 = vmul.f32 %v3649, 0.70710677
  %v3726 = vmul.f32 %v3654, 0.70710677
  %v3727 = vmul.f32 %v3657, 0.70710677
  %v3728 = vmul.f32 %v3662, 0.70710677
  %v3729 = vmul.f32 %v3665, 0.70710677
  %v3730 = vmul.f32 %v3670, 0.70710677
  %v3731 = vmul.f32 %v3673, 0.70710677
  %v3732 = vmul.f32 %v3678, 0.70710677
  %v3733 = vmul.f32 %v3681, 0.70710677
  %v3734 = vmul.f32 %v3686, 0.70710677
  %v3735 = vmul.f32 %v3689, 0.70710677
  %v3736 = vmul.f32 %v3694, 0.70710677
  %v3737 = vmul.f32 %v3697, 0.70710677
  %v3738 = vmul.f32 %v3702, 0.70710677
  %v3739 = vmul.f32 %v3705, 0.70710677
  %v3740 = vand.u32 2147483647, %v3724
  %v3741 = vand.u32 2147483647, %v3725
  %v3742 = vand.u32 2147483647, %v3726
  %v3743 = vand.u32 2147483647, %v3727
  %v3744 = vand.u32 2147483647, %v3728
  %v3745 = vand.u32 2147483647, %v3729
  %v3746 = vand.u32 2147483647, %v3730
  %v3747 = vand.u32 2147483647, %v3731
  %v3748 = vand.u32 2147483647, %v3732
  %v3749 = vand.u32 2147483647, %v3733
  %v3750 = vand.u32 2147483647, %v3734
  %v3751 = vand.u32 2147483647, %v3735
  %v3752 = vand.u32 2147483647, %v3736
  %v3753 = vand.u32 2147483647, %v3737
  %v3754 = vand.u32 2147483647, %v3738
  %v3755 = vand.u32 2147483647, %v3739
  %v3756 = vmul.f32 %v3740, 0.3275911
  %v3757 = vmul.f32 %v3741, 0.3275911
  %v3758 = vmul.f32 %v3742, 0.3275911
  %v3759 = vmul.f32 %v3743, 0.3275911
  %v3760 = vmul.f32 %v3744, 0.3275911
  %v3761 = vmul.f32 %v3745, 0.3275911
  %v3762 = vmul.f32 %v3746, 0.3275911
  %v3763 = vmul.f32 %v3747, 0.3275911
  %v3764 = vmul.f32 %v3748, 0.3275911
  %v3765 = vmul.f32 %v3749, 0.3275911
  %v3766 = vmul.f32 %v3750, 0.3275911
  %v3767 = vmul.f32 %v3751, 0.3275911
  %v3768 = vmul.f32 %v3752, 0.3275911
  %v3769 = vmul.f32 %v3753, 0.3275911
  %v3770 = vmul.f32 %v3754, 0.3275911
  %v3771 = vmul.f32 %v3755, 0.3275911
  %v3772 = vadd.f32 %v3756, 1.0
  %v3773 = vadd.f32 %v3757, 1.0
  %v3774 = vadd.f32 %v3758, 1.0
  %v3775 = vadd.f32 %v3759, 1.0
  %v3776 = vadd.f32 %v3760, 1.0
  %v3777 = vadd.f32 %v3761, 1.0
  %v3778 = vadd.f32 %v3762, 1.0
  %v3779 = vadd.f32 %v3763, 1.0
  %v3780 = vadd.f32 %v3764, 1.0
  %v3781 = vadd.f32 %v3765, 1.0
  %v3782 = vadd.f32 %v3766, 1.0
  %v3783 = vadd.f32 %v3767, 1.0
  %v3784 = vadd.f32 %v3768, 1.0
  %v3785 = vadd.f32 %v3769, 1.0
  %v3786 = vadd.f32 %v3770, 1.0
  %v3787 = vadd.f32 %v3771, 1.0
  %v3788 = vrcp.pop %v3772
  %v3789 = vmul.f32 1.0, %v3788
  %v3790 = vrcp.pop %v3773
  %v3791 = vmul.f32 1.0, %v3790
  %v3792 = vrcp.pop %v3774
  %v3793 = vmul.f32 1.0, %v3792
  %v3794 = vrcp.pop %v3775
  %v3795 = vmul.f32 1.0, %v3794
  %v3796 = vrcp.pop %v3776
  %v3797 = vmul.f32 1.0, %v3796
  %v3798 = vrcp.pop %v3777
  %v3799 = vmul.f32 1.0, %v3798
  %v3800 = vrcp.pop %v3778
  %v3801 = vmul.f32 1.0, %v3800
  %v3802 = vrcp.pop %v3779
  %v3803 = vmul.f32 1.0, %v3802
  %v3804 = vrcp.pop %v3780
  %v3805 = vmul.f32 1.0, %v3804
  %v3806 = vrcp.pop %v3781
  %v3807 = vmul.f32 1.0, %v3806
  %v3808 = vrcp.pop %v3782
  %v3809 = vmul.f32 1.0, %v3808
  %v3810 = vrcp.pop %v3783
  %v3811 = vmul.f32 1.0, %v3810
  %v3812 = vrcp.pop %v3784
  %v3813 = vmul.f32 1.0, %v3812
  %v3814 = vrcp.pop %v3785
  %v3815 = vmul.f32 1.0, %v3814
  %v3816 = vrcp.pop %v3786
  %v3817 = vmul.f32 1.0, %v3816
  %v3818 = vrcp.pop %v3787
  %v3819 = vmul.f32 1.0, %v3818
  %v3820 = vmul.f32 %v3789, 1.0614054
  %v3821 = vmul.f32 %v3791, 1.0614054
  %v3822 = vmul.f32 %v3793, 1.0614054
  %v3823 = vmul.f32 %v3795, 1.0614054
  %v3824 = vmul.f32 %v3797, 1.0614054
  %v3825 = vmul.f32 %v3799, 1.0614054
  %v3826 = vmul.f32 %v3801, 1.0614054
  %v3827 = vmul.f32 %v3803, 1.0614054
  %v3828 = vmul.f32 %v3805, 1.0614054
  %v3829 = vmul.f32 %v3807, 1.0614054
  %v3830 = vmul.f32 %v3809, 1.0614054
  %v3831 = vmul.f32 %v3811, 1.0614054
  %v3832 = vmul.f32 %v3813, 1.0614054
  %v3833 = vmul.f32 %v3815, 1.0614054
  %v3834 = vmul.f32 %v3817, 1.0614054
  %v3835 = vmul.f32 %v3819, 1.0614054
  %v3836 = vadd.f32 %v3820, -1.4531521
  %v3837 = vadd.f32 %v3821, -1.4531521
  %v3838 = vadd.f32 %v3822, -1.4531521
  %v3839 = vadd.f32 %v3823, -1.4531521
  %v3840 = vadd.f32 %v3824, -1.4531521
  %v3841 = vadd.f32 %v3825, -1.4531521
  %v3842 = vadd.f32 %v3826, -1.4531521
  %v3843 = vadd.f32 %v3827, -1.4531521
  %v3844 = vadd.f32 %v3828, -1.4531521
  %v3845 = vadd.f32 %v3829, -1.4531521
  %v3846 = vadd.f32 %v3830, -1.4531521
  %v3847 = vadd.f32 %v3831, -1.4531521
  %v3848 = vadd.f32 %v3832, -1.4531521
  %v3849 = vadd.f32 %v3833, -1.4531521
  %v3850 = vadd.f32 %v3834, -1.4531521
  %v3851 = vadd.f32 %v3835, -1.4531521
  %v3852 = vmul.f32 %v3836, %v3789
  %v3853 = vmul.f32 %v3837, %v3791
  %v3854 = vmul.f32 %v3838, %v3793
  %v3855 = vmul.f32 %v3839, %v3795
  %v3856 = vmul.f32 %v3840, %v3797
  %v3857 = vmul.f32 %v3841, %v3799
  %v3858 = vmul.f32 %v3842, %v3801
  %v3859 = vmul.f32 %v3843, %v3803
  %v3860 = vmul.f32 %v3844, %v3805
  %v3861 = vmul.f32 %v3845, %v3807
  %v3862 = vmul.f32 %v3846, %v3809
  %v3863 = vmul.f32 %v3847, %v3811
  %v3864 = vmul.f32 %v3848, %v3813
  %v3865 = vmul.f32 %v3849, %v3815
  %v3866 = vmul.f32 %v3850, %v3817
  %v3867 = vmul.f32 %v3851, %v3819
  %v3868 = vadd.f32 %v3852, 1.4214138
  %v3869 = vadd.f32 %v3853, 1.4214138
  %v3870 = vadd.f32 %v3854, 1.4214138
  %v3871 = vadd.f32 %v3855, 1.4214138
  %v3872 = vadd.f32 %v3856, 1.4214138
  %v3873 = vadd.f32 %v3857, 1.4214138
  %v3874 = vadd.f32 %v3858, 1.4214138
  %v3875 = vadd.f32 %v3859, 1.4214138
  %v3876 = vadd.f32 %v3860, 1.4214138
  %v3877 = vadd.f32 %v3861, 1.4214138
  %v3878 = vadd.f32 %v3862, 1.4214138
  %v3879 = vadd.f32 %v3863, 1.4214138
  %v3880 = vadd.f32 %v3864, 1.4214138
  %v3881 = vadd.f32 %v3865, 1.4214138
  %v3882 = vadd.f32 %v3866, 1.4214138
  %v3883 = vadd.f32 %v3867, 1.4214138
  %v3884 = vmul.f32 %v3868, %v3789
  %v3885 = vmul.f32 %v3869, %v3791
  %v3886 = vmul.f32 %v3870, %v3793
  %v3887 = vmul.f32 %v3871, %v3795
  %v3888 = vmul.f32 %v3872, %v3797
  %v3889 = vmul.f32 %v3873, %v3799
  %v3890 = vmul.f32 %v3874, %v3801
  %v3891 = vmul.f32 %v3875, %v3803
  %v3892 = vmul.f32 %v3876, %v3805
  %v3893 = vmul.f32 %v3877, %v3807
  %v3894 = vmul.f32 %v3878, %v3809
  %v3895 = vmul.f32 %v3879, %v3811
  %v3896 = vmul.f32 %v3880, %v3813
  %v3897 = vmul.f32 %v3881, %v3815
  %v3898 = vmul.f32 %v3882, %v3817
  %v3899 = vmul.f32 %v3883, %v3819
  %v3900 = vadd.f32 %v3884, -0.28449672
  %v3901 = vadd.f32 %v3885, -0.28449672
  %v3902 = vadd.f32 %v3886, -0.28449672
  %v3903 = vadd.f32 %v3887, -0.28449672
  %v3904 = vadd.f32 %v3888, -0.28449672
  %v3905 = vadd.f32 %v3889, -0.28449672
  %v3906 = vadd.f32 %v3890, -0.28449672
  %v3907 = vadd.f32 %v3891, -0.28449672
  %v3908 = vadd.f32 %v3892, -0.28449672
  %v3909 = vadd.f32 %v3893, -0.28449672
  %v3910 = vadd.f32 %v3894, -0.28449672
  %v3911 = vadd.f32 %v3895, -0.28449672
  %v3912 = vadd.f32 %v3896, -0.28449672
  %v3913 = vadd.f32 %v3897, -0.28449672
  %v3914 = vadd.f32 %v3898, -0.28449672
  %v3915 = vadd.f32 %v3899, -0.28449672
  %v3916 = vmul.f32 %v3900, %v3789
  %v3917 = vmul.f32 %v3901, %v3791
  %v3918 = vmul.f32 %v3902, %v3793
  %v3919 = vmul.f32 %v3903, %v3795
  %v3920 = vmul.f32 %v3904, %v3797
  %v3921 = vmul.f32 %v3905, %v3799
  %v3922 = vmul.f32 %v3906, %v3801
  %v3923 = vmul.f32 %v3907, %v3803
  %v3924 = vmul.f32 %v3908, %v3805
  %v3925 = vmul.f32 %v3909, %v3807
  %v3926 = vmul.f32 %v3910, %v3809
  %v3927 = vmul.f32 %v3911, %v3811
  %v3928 = vmul.f32 %v3912, %v3813
  %v3929 = vmul.f32 %v3913, %v3815
  %v3930 = vmul.f32 %v3914, %v3817
  %v3931 = vmul.f32 %v3915, %v3819
  %v3932 = vadd.f32 %v3916, 0.2548296
  %v3933 = vadd.f32 %v3917, 0.2548296
  %v3934 = vadd.f32 %v3918, 0.2548296
  %v3935 = vadd.f32 %v3919, 0.2548296
  %v3936 = vadd.f32 %v3920, 0.2548296
  %v3937 = vadd.f32 %v3921, 0.2548296
  %v3938 = vadd.f32 %v3922, 0.2548296
  %v3939 = vadd.f32 %v3923, 0.2548296
  %v3940 = vadd.f32 %v3924, 0.2548296
  %v3941 = vadd.f32 %v3925, 0.2548296
  %v3942 = vadd.f32 %v3926, 0.2548296
  %v3943 = vadd.f32 %v3927, 0.2548296
  %v3944 = vadd.f32 %v3928, 0.2548296
  %v3945 = vadd.f32 %v3929, 0.2548296
  %v3946 = vadd.f32 %v3930, 0.2548296
  %v3947 = vadd.f32 %v3931, 0.2548296
  %v3948 = vmul.f32 %v3932, %v3789
  %v3949 = vmul.f32 %v3933, %v3791
  %v3950 = vmul.f32 %v3934, %v3793
  %v3951 = vmul.f32 %v3935, %v3795
  %v3952 = vmul.f32 %v3936, %v3797
  %v3953 = vmul.f32 %v3937, %v3799
  %v3954 = vmul.f32 %v3938, %v3801
  %v3955 = vmul.f32 %v3939, %v3803
  %v3956 = vmul.f32 %v3940, %v3805
  %v3957 = vmul.f32 %v3941, %v3807
  %v3958 = vmul.f32 %v3942, %v3809
  %v3959 = vmul.f32 %v3943, %v3811
  %v3960 = vmul.f32 %v3944, %v3813
  %v3961 = vmul.f32 %v3945, %v3815
  %v3962 = vmul.f32 %v3946, %v3817
  %v3963 = vmul.f32 %v3947, %v3819
  %v3964 = vsub.f32 0.0, %v3740
  %v3965 = vsub.f32 0.0, %v3741
  %v3966 = vsub.f32 0.0, %v3742
  %v3967 = vsub.f32 0.0, %v3743
  %v3968 = vsub.f32 0.0, %v3744
  %v3969 = vsub.f32 0.0, %v3745
  %v3970 = vsub.f32 0.0, %v3746
  %v3971 = vsub.f32 0.0, %v3747
  %v3972 = vsub.f32 0.0, %v3748
  %v3973 = vsub.f32 0.0, %v3749
  %v3974 = vsub.f32 0.0, %v3750
  %v3975 = vsub.f32 0.0, %v3751
  %v3976 = vsub.f32 0.0, %v3752
  %v3977 = vsub.f32 0.0, %v3753
  %v3978 = vsub.f32 0.0, %v3754
  %v3979 = vsub.f32 0.0, %v3755
  %v3980 = vmul.f32 %v3964, %v3740
  %v3981 = vmul.f32 %v3965, %v3741
  %v3982 = vmul.f32 %v3966, %v3742
  %v3983 = vmul.f32 %v3967, %v3743
  %v3984 = vmul.f32 %v3968, %v3744
  %v3985 = vmul.f32 %v3969, %v3745
  %v3986 = vmul.f32 %v3970, %v3746
  %v3987 = vmul.f32 %v3971, %v3747
  %v3988 = vmul.f32 %v3972, %v3748
  %v3989 = vmul.f32 %v3973, %v3749
  %v3990 = vmul.f32 %v3974, %v3750
  %v3991 = vmul.f32 %v3975, %v3751
  %v3992 = vmul.f32 %v3976, %v3752
  %v3993 = vmul.f32 %v3977, %v3753
  %v3994 = vmul.f32 %v3978, %v3754
  %v3995 = vmul.f32 %v3979, %v3755
  %v3996 = vmul.f32 %v3980, 1.442695
  %v3997 = vpow.pop %v3996
  %v3998 = vmul.f32 %v3981, 1.442695
  %v3999 = vpow.pop %v3998
  %v4000 = vmul.f32 %v3982, 1.442695
  %v4001 = vpow.pop %v4000
  %v4002 = vmul.f32 %v3983, 1.442695
  %v4003 = vpow.pop %v4002
  %v4004 = vmul.f32 %v3984, 1.442695
  %v4005 = vpow.pop %v4004
  %v4006 = vmul.f32 %v3985, 1.442695
  %v4007 = vpow.pop %v4006
  %v4008 = vmul.f32 %v3986, 1.442695
  %v4009 = vpow.pop %v4008
  %v4010 = vmul.f32 %v3987, 1.442695
  %v4011 = vpow.pop %v4010
  %v4012 = vmul.f32 %v3988, 1.442695
  %v4013 = vpow.pop %v4012
  %v4014 = vmul.f32 %v3989, 1.442695
  %v4015 = vpow.pop %v4014
  %v4016 = vmul.f32 %v3990, 1.442695
  %v4017 = vpow.pop %v4016
  %v4018 = vmul.f32 %v3991, 1.442695
  %v4019 = vpow.pop %v4018
  %v4020 = vmul.f32 %v3992, 1.442695
  %v4021 = vpow.pop %v4020
  %v4022 = vmul.f32 %v3993, 1.442695
  %v4023 = vpow.pop %v4022
  %v4024 = vmul.f32 %v3994, 1.442695
  %v4025 = vpow.pop %v4024
  %v4026 = vmul.f32 %v3995, 1.442695
  %v4027 = vpow.pop %v4026
  %v4028 = vmul.f32 %v3948, %v3997
  %v4029 = vmul.f32 %v3949, %v3999
  %v4030 = vmul.f32 %v3950, %v4001
  %v4031 = vmul.f32 %v3951, %v4003
  %v4032 = vmul.f32 %v3952, %v4005
  %v4033 = vmul.f32 %v3953, %v4007
  %v4034 = vmul.f32 %v3954, %v4009
  %v4035 = vmul.f32 %v3955, %v4011
  %v4036 = vmul.f32 %v3956, %v4013
  %v4037 = vmul.f32 %v3957, %v4015
  %v4038 = vmul.f32 %v3958, %v4017
  %v4039 = vmul.f32 %v3959, %v4019
  %v4040 = vmul.f32 %v3960, %v4021
  %v4041 = vmul.f32 %v3961, %v4023
  %v4042 = vmul.f32 %v3962, %v4025
  %v4043 = vmul.f32 %v3963, %v4027
  %v4044 = vsub.f32 1.0, %v4028
  %v4045 = vsub.f32 1.0, %v4029
  %v4046 = vsub.f32 1.0, %v4030
  %v4047 = vsub.f32 1.0, %v4031
  %v4048 = vsub.f32 1.0, %v4032
  %v4049 = vsub.f32 1.0, %v4033
  %v4050 = vsub.f32 1.0, %v4034
  %v4051 = vsub.f32 1.0, %v4035
  %v4052 = vsub.f32 1.0, %v4036
  %v4053 = vsub.f32 1.0, %v4037
  %v4054 = vsub.f32 1.0, %v4038
  %v4055 = vsub.f32 1.0, %v4039
  %v4056 = vsub.f32 1.0, %v4040
  %v4057 = vsub.f32 1.0, %v4041
  %v4058 = vsub.f32 1.0, %v4042
  %v4059 = vsub.f32 1.0, %v4043
  %vm4060 = vcmp.ge.f32.partialorder %v3724, 0.0
  %vm4061 = vcmp.ge.f32.partialorder %v3725, 0.0
  %vm4062 = vcmp.ge.f32.partialorder %v3726, 0.0
  %vm4063 = vcmp.ge.f32.partialorder %v3727, 0.0
  %vm4064 = vcmp.ge.f32.partialorder %v3728, 0.0
  %vm4065 = vcmp.ge.f32.partialorder %v3729, 0.0
  %vm4066 = vcmp.ge.f32.partialorder %v3730, 0.0
  %vm4067 = vcmp.ge.f32.partialorder %v3731, 0.0
  %vm4068 = vcmp.ge.f32.partialorder %v3732, 0.0
  %vm4069 = vcmp.ge.f32.partialorder %v3733, 0.0
  %vm4070 = vcmp.ge.f32.partialorder %v3734, 0.0
  %vm4071 = vcmp.ge.f32.partialorder %v3735, 0.0
  %vm4072 = vcmp.ge.f32.partialorder %v3736, 0.0
  %vm4073 = vcmp.ge.f32.partialorder %v3737, 0.0
  %vm4074 = vcmp.ge.f32.partialorder %v3738, 0.0
  %vm4075 = vcmp.ge.f32.partialorder %v3739, 0.0
  %v4076 = vsub.f32 0.0, %v4044
  %v4077 = vsub.f32 0.0, %v4045
  %v4078 = vsub.f32 0.0, %v4046
  %v4079 = vsub.f32 0.0, %v4047
  %v4080 = vsub.f32 0.0, %v4048
  %v4081 = vsub.f32 0.0, %v4049
  %v4082 = vsub.f32 0.0, %v4050
  %v4083 = vsub.f32 0.0, %v4051
  %v4084 = vsub.f32 0.0, %v4052
  %v4085 = vsub.f32 0.0, %v4053
  %v4086 = vsub.f32 0.0, %v4054
  %v4087 = vsub.f32 0.0, %v4055
  %v4088 = vsub.f32 0.0, %v4056
  %v4089 = vsub.f32 0.0, %v4057
  %v4090 = vsub.f32 0.0, %v4058
  %v4091 = vsub.f32 0.0, %v4059
  %v4092 = vsel %vm4060, %v4044, %v4076
  %v4093 = vsel %vm4061, %v4045, %v4077
  %v4094 = vsel %vm4062, %v4046, %v4078
  %v4095 = vsel %vm4063, %v4047, %v4079
  %v4096 = vsel %vm4064, %v4048, %v4080
  %v4097 = vsel %vm4065, %v4049, %v4081
  %v4098 = vsel %vm4066, %v4050, %v4082
  %v4099 = vsel %vm4067, %v4051, %v4083
  %v4100 = vsel %vm4068, %v4052, %v4084
  %v4101 = vsel %vm4069, %v4053, %v4085
  %v4102 = vsel %vm4070, %v4054, %v4086
  %v4103 = vsel %vm4071, %v4055, %v4087
  %v4104 = vsel %vm4072, %v4056, %v4088
  %v4105 = vsel %vm4073, %v4057, %v4089
  %v4106 = vsel %vm4074, %v4058, %v4090
  %v4107 = vsel %vm4075, %v4059, %v4091
  %v4108 = vadd.f32 %v4092, 1.0
  %v4109 = vadd.f32 %v4093, 1.0
  %v4110 = vadd.f32 %v4094, 1.0
  %v4111 = vadd.f32 %v4095, 1.0
  %v4112 = vadd.f32 %v4096, 1.0
  %v4113 = vadd.f32 %v4097, 1.0
  %v4114 = vadd.f32 %v4098, 1.0
  %v4115 = vadd.f32 %v4099, 1.0
  %v4116 = vadd.f32 %v4100, 1.0
  %v4117 = vadd.f32 %v4101, 1.0
  %v4118 = vadd.f32 %v4102, 1.0
  %v4119 = vadd.f32 %v4103, 1.0
  %v4120 = vadd.f32 %v4104, 1.0
  %v4121 = vadd.f32 %v4105, 1.0
  %v4122 = vadd.f32 %v4106, 1.0
  %v4123 = vadd.f32 %v4107, 1.0
  %v4124 = vmul.f32 %v3708, %v4108
  %v4125 = vmul.f32 %v3709, %v4109
  %v4126 = vmul.f32 %v3710, %v4110
  %v4127 = vmul.f32 %v3711, %v4111
  %v4128 = vmul.f32 %v3712, %v4112
  %v4129 = vmul.f32 %v3713, %v4113
  %v4130 = vmul.f32 %v3714, %v4114
  %v4131 = vmul.f32 %v3715, %v4115
  %v4132 = vmul.f32 %v3716, %v4116
  %v4133 = vmul.f32 %v3717, %v4117
  %v4134 = vmul.f32 %v3718, %v4118
  %v4135 = vmul.f32 %v3719, %v4119
  %v4136 = vmul.f32 %v3720, %v4120
  %v4137 = vmul.f32 %v3721, %v4121
  %v4138 = vmul.f32 %v3722, %v4122
  %v4139 = vmul.f32 %v3723, %v4123
  %v4140 = vpack.c.bf16 %v4125, %v4124
  %v4141 = vpack.c.bf16 %v4127, %v4126
  %v4142 = vpack.c.bf16 %v4129, %v4128
  %v4143 = vpack.c.bf16 %v4131, %v4130
  %v4144 = vpack.c.bf16 %v4133, %v4132
  %v4145 = vpack.c.bf16 %v4135, %v4134
  %v4146 = vpack.c.bf16 %v4137, %v4136
  %v4147 = vpack.c.bf16 %v4139, %v4138
  %v4148 = vlaneseq
  %v4149 = vshrl.u32 %v4148, 7
  %v4150 = vsub.s32 1, %v4149
  %v4151 = vrot.slane %v32, %v4150
  %4152 = vrot.lane.b32.xlu0 %v3583, 96
  %v4153 = vpop.permute.xlu0 %4152
  %4154 = vrot.lane.b32.xlu0 %v3584, 96
  %v4155 = vpop.permute.xlu0 %4154
  %v4159 = vsel %vm41, %v4140, 0
  %v4162 = vsel %vm41, %v4141, 0
  %v4165 = vsel %vm41, %v4142, 0
  %v4168 = vsel %vm41, %v4143, 0
  %v4171 = vsel %vm41, %v4144, 0
  %v4174 = vsel %vm41, %v4145, 0
  %v4177 = vsel %vm41, %v4146, 0
  %v4180 = vsel %vm41, %v4147, 0
  %4182 = vmatprep.subr.bf16.mxu0 0
  %4183 = vmatpush1.bf16.msra.mxu0 0
  %4184 = vmatprep.subr.bf16.mxu0 0
  %4185 = vmatpush1.bf16.msra.mxu0 0
  %4186 = vmatprep.subr.bf16.mxu0 0
  %4187 = vmatpush1.bf16.msra.mxu0 0
  %4188 = vmatprep.subr.bf16.mxu0 0
  %4189 = vmatpush1.bf16.msra.mxu0 0
  %4190 = vmatprep.subr.bf16.mxu0 0
  %4191 = vmatpush1.bf16.msra.mxu0 0
  %4192 = vmatprep.subr.bf16.mxu0 0
  %4193 = vmatpush1.bf16.msra.mxu0 0
  %4194 = vmatprep.subr.bf16.mxu0 0
  %4195 = vmatpush1.bf16.msra.mxu0 %v4155
  %4196 = vmatprep.subr.bf16.mxu0 0
  %4197 = vmatpush1.bf16.msra.mxu0 %v4153
  %4198 = vmatprep.subr.bf16.mxu0 0
  %4199 = vmatpush2.bf16.msra.mxu0 0
  %4200 = vmatprep.subr.bf16.mxu0 0
  %4201 = vmatpush2.bf16.msra.mxu0 0
  %4202 = vmatprep.subr.bf16.mxu0 0
  %4203 = vmatpush2.bf16.msra.mxu0 0
  %4204 = vmatprep.subr.bf16.mxu0 0
  %4205 = vmatpush2.bf16.msra.mxu0 0
  %4206 = vmatprep.subr.bf16.mxu0 0
  %4207 = vmatpush2.bf16.msra.mxu0 0
  %4208 = vmatprep.subr.bf16.mxu0 0
  %4209 = vmatpush2.bf16.msra.mxu0 0
  %4210 = vmatprep.subr.bf16.mxu0 0
  %4211 = vmatpush2.bf16.msra.mxu0 0
  %4212 = vmatprep.subr.bf16.mxu0 0
  %4213 = vmatpush2.bf16.msra.mxu0 0
  %4214 = vmatprep.mubr.bf16.mxu0 0
  %4215 = vmatmul.mubr.bf16.gmra.mxu0 %v4159
  %v4216 = vpop.f32.mrf.mxu0
  %v4217 = vadd.f32 %v4151, %v4216
  %v4218 = vpop.f32.mrf.mxu0
  %v4219 = vpop.f32.mrf.mxu0
  %v4220 = vadd.f32 %v4151, %v4219
  %v4221 = vpop.f32.mrf.mxu0
  %4222 = vmatprep.mubr.bf16.mxu0 0
  %4223 = vmatmul.mubr.bf16.gmra.mxu0 %v4162
  %v4224 = vpop.f32.mrf.mxu0
  %v4225 = vadd.f32 %v4151, %v4224
  %v4226 = vpop.f32.mrf.mxu0
  %v4227 = vpop.f32.mrf.mxu0
  %v4228 = vadd.f32 %v4151, %v4227
  %v4229 = vpop.f32.mrf.mxu0
  %4230 = vmatprep.mubr.bf16.mxu0 0
  %4231 = vmatmul.mubr.bf16.gmra.mxu0 %v4165
  %v4232 = vpop.f32.mrf.mxu0
  %v4233 = vadd.f32 %v4151, %v4232
  %v4234 = vpop.f32.mrf.mxu0
  %v4235 = vpop.f32.mrf.mxu0
  %v4236 = vadd.f32 %v4151, %v4235
  %v4237 = vpop.f32.mrf.mxu0
  %4238 = vmatprep.mubr.bf16.mxu0 0
  %4239 = vmatmul.mubr.bf16.gmra.mxu0 %v4168
  %v4240 = vpop.f32.mrf.mxu0
  %v4241 = vadd.f32 %v4151, %v4240
  %v4242 = vpop.f32.mrf.mxu0
  %v4243 = vpop.f32.mrf.mxu0
  %v4244 = vadd.f32 %v4151, %v4243
  %v4245 = vpop.f32.mrf.mxu0
  %4246 = vmatprep.mubr.bf16.mxu0 0
  %4247 = vmatmul.mubr.bf16.gmra.mxu0 %v4171
  %v4248 = vpop.f32.mrf.mxu0
  %v4249 = vadd.f32 %v4151, %v4248
  %v4250 = vpop.f32.mrf.mxu0
  %v4251 = vpop.f32.mrf.mxu0
  %v4252 = vadd.f32 %v4151, %v4251
  %v4253 = vpop.f32.mrf.mxu0
  %4254 = vmatprep.mubr.bf16.mxu0 0
  %4255 = vmatmul.mubr.bf16.gmra.mxu0 %v4174
  %v4256 = vpop.f32.mrf.mxu0
  %v4257 = vadd.f32 %v4151, %v4256
  %v4258 = vpop.f32.mrf.mxu0
  %v4259 = vpop.f32.mrf.mxu0
  %v4260 = vadd.f32 %v4151, %v4259
  %v4261 = vpop.f32.mrf.mxu0
  %4262 = vmatprep.mubr.bf16.mxu0 0
  %4263 = vmatmul.mubr.bf16.gmra.mxu0 %v4177
  %v4264 = vpop.f32.mrf.mxu0
  %v4265 = vadd.f32 %v4151, %v4264
  %v4266 = vpop.f32.mrf.mxu0
  %v4267 = vpop.f32.mrf.mxu0
  %v4268 = vadd.f32 %v4151, %v4267
  %v4269 = vpop.f32.mrf.mxu0
  %4270 = vmatprep.mubr.bf16.mxu0 0
  %4271 = vmatmul.mubr.bf16.gmra.mxu0 %v4180
  %v4272 = vpop.f32.mrf.mxu0
  %v4273 = vadd.f32 %v4151, %v4272
  %v4274 = vpop.f32.mrf.mxu0
  %v4275 = vpop.f32.mrf.mxu0
  %v4276 = vadd.f32 %v4151, %v4275
  %v4277 = vpop.f32.mrf.mxu0
  %4278 = vdwg.mxu0
  %v4279 = vadd.f32 %v4217, %v3299
  %v4280 = vadd.f32 %v4220, %v3300
  %v4281 = vadd.f32 %v4225, %v3301
  %v4282 = vadd.f32 %v4228, %v3302
  %v4283 = vadd.f32 %v4233, %v3303
  %v4284 = vadd.f32 %v4236, %v3304
  %v4285 = vadd.f32 %v4241, %v3305
  %v4286 = vadd.f32 %v4244, %v3306
  %v4287 = vadd.f32 %v4249, %v3307
  %v4288 = vadd.f32 %v4252, %v3308
  %v4289 = vadd.f32 %v4257, %v3309
  %v4290 = vadd.f32 %v4260, %v3310
  %v4291 = vadd.f32 %v4265, %v3311
  %v4292 = vadd.f32 %v4268, %v3312
  %v4293 = vadd.f32 %v4273, %v3313
  %v4294 = vadd.f32 %v4276, %v3314
  %4295 = vst.msk [vmem:[%s3] sm:$0xff] %vm41, %v4279
  %4296 = vst.msk [vmem:[%s3 + $0x8] sm:$0xff] %vm41, %v4280
  %4297 = vst.msk [vmem:[%s3 + $0x10] sm:$0xff] %vm41, %v4281
  %4298 = vst.msk [vmem:[%s3 + $0x18] sm:$0xff] %vm41, %v4282
  %4299 = vst.msk [vmem:[%s3 + $0x20] sm:$0xff] %vm41, %v4283
  %4300 = vst.msk [vmem:[%s3 + $0x28] sm:$0xff] %vm41, %v4284
  %4301 = vst.msk [vmem:[%s3 + $0x30] sm:$0xff] %vm41, %v4285
  %4302 = vst.msk [vmem:[%s3 + $0x38] sm:$0xff] %vm41, %v4286
  %4303 = vst.msk [vmem:[%s3 + $0x40] sm:$0xff] %vm41, %v4287
  %4304 = vst.msk [vmem:[%s3 + $0x48] sm:$0xff] %vm41, %v4288
  %4305 = vst.msk [vmem:[%s3 + $0x50] sm:$0xff] %vm41, %v4289
  %4306 = vst.msk [vmem:[%s3 + $0x58] sm:$0xff] %vm41, %v4290
  %4307 = vst.msk [vmem:[%s3 + $0x60] sm:$0xff] %vm41, %v4291
  %4308 = vst.msk [vmem:[%s3 + $0x68] sm:$0xff] %vm41, %v4292
  %4309 = vst.msk [vmem:[%s3 + $0x70] sm:$0xff] %vm41, %v4293
  %4310 = vst.msk [vmem:[%s3 + $0x78] sm:$0xff] %vm41, %v4294
  // Predicated region
  $region14: #{tpu_custom_call.1} parent=0 // pred_check
    _
  $region15: #{tpu_custom_call.1} parent=0 // pred_check_branch
    %4312 = sbr.rel (0) target = $region17
  $region16: #{tpu_custom_call.1} parent=0 // pred_region
    _
  $region17: #{tpu_custom_call.1} parent=0 // pred_fallthru
    _
  // Predicated region
  $region18: #{tpu_custom_call.1} parent=0 // pred_check
    _
  $region19: #{tpu_custom_call.1} parent=0 // pred_check_branch
    %4314 = sbr.rel (0) target = $region21
  $region20: #{tpu_custom_call.1} parent=0 // pred_region
    _
  $region21: #{tpu_custom_call.1} parent=0 // pred_fallthru
    _

</llo_original>
